<compile_context>
chip_gen: v7x
topology: tpu7x:2x2x1
jax: 0.10.0
libtpu: 0.0.40
codegen_flags: <defaults>
</compile_context>

<pallas_src>
import math

import jax
import jax.numpy as jnp
from jax.experimental import pallas as pl
from jax.experimental.pallas import tpu as pltpu


# ---------------------------------------------------------------------------
# In-kernel helpers
# ---------------------------------------------------------------------------

def _pad_hw(t):
    """Zero-pad H and W by 1 on each side, entirely in registers (concat)."""
    nb, h, w, c = t.shape
    zrow = jnp.zeros((nb, 1, w, c), t.dtype)
    t = jnp.concatenate([zrow, t, zrow], axis=1)           # (nb, h+2, w, c)
    zcol = jnp.zeros((nb, h + 2, 1, c), t.dtype)
    return jnp.concatenate([zcol, t, zcol], axis=2)        # (nb, h+2, w+2, c)


def _conv3x3(xp, w_ref, cin, cout, h, w, rows):
    """3x3 SAME conv as 9 accumulating per-tap MXU matmuls (no 9x im2col slab).

    xp    : (nb, h+2, w+2, cin) zero-padded input, already in the matmul compute dtype.
    w_ref : (9, cin, cout) weights (tap index t = 3*dy + dx).
    """
    acc = None
    tap_idx = 0
    for dy in range(3):
        for dx in range(3):
            tap = xp[:, dy:dy + h, dx:dx + w, :].reshape(rows, cin)
            part = jnp.dot(tap, w_ref[tap_idx],
                           preferred_element_type=jnp.float32)
            acc = part if acc is None else acc + part
            tap_idx += 1
    return acc                                              # (rows, cout) f32


def _tile_stats(acc, inv_rows):
    """Per-tile centered statistics: [mean ; sum((x-mean)^2)] as a (2, C) f32 block."""
    mean = jnp.sum(acc, axis=0, keepdims=True) * inv_rows    # (1, C)
    d = acc - mean
    m2 = jnp.sum(d * d, axis=0, keepdims=True)               # (1, C)
    return jnp.concatenate([mean, m2], axis=0)               # (2, C)


# ---------------------------------------------------------------------------
# Kernels
# ---------------------------------------------------------------------------

def _make_conv1_kernel(nb, h, w, cin, cout):
    rows = nb * h * w
    inv_rows = 1.0 / rows

    def kernel(x_ref, w_ref, y_ref, st_ref):
        # x stays in the compute dtype (bf16) through padding / taps; only the
        # matmul accumulator and the statistics are f32.
        xp = _pad_hw(x_ref[...])
        acc = _conv3x3(xp, w_ref, cin, cout, h, w, rows)
        st_ref[0] = _tile_stats(acc, inv_rows)
        y_ref[...] = acc.reshape(nb, h, w, cout).astype(y_ref.dtype)

    return kernel


def _make_conv2_kernel(nb, h, w, cmid, cout, slope, compute_dtype):
    rows = nb * h * w
    inv_rows = 1.0 / rows

    def kernel(y_ref, s_ref, b_ref, w_ref, z_ref, st_ref):
        # BN1 apply (folded scale/shift) + LeakyReLU in f32, then cast to the
        # compute dtype BEFORE the padded tap views are built.
        y = y_ref[...].astype(jnp.float32)
        y = y * s_ref[...].reshape(1, 1, 1, cmid) + b_ref[...].reshape(1, 1, 1, cmid)
        y = jnp.where(y > 0, y, slope * y)
        yp = _pad_hw(y.astype(compute_dtype))
        acc = _conv3x3(yp, w_ref, cmid, cout, h, w, rows)
        st_ref[0] = _tile_stats(acc, inv_rows)
        z_ref[...] = acc.reshape(nb, h, w, cout).astype(z_ref.dtype)

    return kernel


def _make_finalize_dense_kernel(slope):
    """BN2-apply + identity + LeakyReLU on a lane-dense folded (nb, R, 128) layout."""
    def kernel(z_ref, x_ref, s_ref, b_ref, o_ref):
        z = z_ref[...].astype(jnp.float32)
        idn = x_ref[...].astype(jnp.float32)
        v = z * s_ref[...].reshape(1, 1, -1) + b_ref[...].reshape(1, 1, -1) + idn
        o_ref[...] = jnp.where(v > 0, v, slope * v).astype(o_ref.dtype)

    return kernel


def _make_finalize_generic_kernel(nb, h, w, cin, cout, has_expand, slope):
    """Channel-minor finalize (used when conv_expand is present or folding is not possible)."""
    rows = nb * h * w

    def kernel(*refs):
        if has_expand:
            z_ref, x_ref, s_ref, b_ref, we_ref, o_ref = refs
        else:
            z_ref, x_ref, s_ref, b_ref, o_ref = refs
        z = z_ref[...].astype(jnp.float32).reshape(rows, cout)
        if has_expand:
            idn = jnp.dot(x_ref[...].reshape(rows, cin), we_ref[...],
                          preferred_element_type=jnp.float32)
        else:
            idn = x_ref[...].astype(jnp.float32).reshape(rows, cin)  # cin == cout here
        v = z * s_ref[...] + b_ref[...] + idn
        v = jnp.where(v > 0, v, slope * v)
        o_ref[...] = v.reshape(nb, h, w, cout).astype(o_ref.dtype)

    return kernel


# ---------------------------------------------------------------------------
# Wrapper-side helpers
# ---------------------------------------------------------------------------

def _tile_bytes(nb, h, w, cin, cmid, cout, esize):
    """Rough per-grid-step VMEM footprint (worst of the three passes)."""
    rows = nb * h * w
    pad = nb * (h + 2) * (w + 2)
    return (pad * max(cin, cmid) * esize                  # padded tap source
            + rows * max(cmid, cout) * (8 + esize)        # f32 acc + centered diff + store
            + rows * (cin + cmid + 2 * cout) * esize)     # pipelined in/out tiles


def _pick_batch_tile(n, h, w, cin, cmid, cout, esize, max_tile_bytes=2 << 20):
    """Largest batch tile that keeps the per-step footprint modest AND leaves >= 2
    grid steps so the BlockSpec pipeline has DMA/compute work to overlap."""
    nb = 1
    for cand in range(2, n + 1):
        if n % cand:
            continue
        if (_tile_bytes(cand, h, w, cin, cmid, cout, esize) > max_tile_bytes
                or n // cand < 2):
            break
        nb = cand
    return nb


def _compiler_params(tile_bytes):
    try:
        # Per-generation cap: v5e/v6e have 128 MiB VMEM, v7x only 64 MiB per TensorCore.
        cap = int(pltpu.get_tpu_info().vmem_capacity_bytes) * 3 // 4
    except Exception:
        cap = 48 << 20                                    # safe on every generation
    limit = int(max(32 << 20, min(4 * tile_bytes + (16 << 20), cap)))
    return pltpu.CompilerParams(dimension_semantics=("parallel",),
                                vmem_limit_bytes=limit)


def _finalize_bn(stats, gamma, beta, rows_per_tile, eps):
    """Chan-combine per-tile (mean, M2) partials -> folded BN scale/shift (f32, (1, C))."""
    mean_t = stats[:, 0, :]                               # (T, C)
    m2_t = stats[:, 1, :]                                 # (T, C)
    num_tiles = stats.shape[0]
    mean = jnp.mean(mean_t, axis=0)                       # equal-count tiles
    m2 = (jnp.sum(m2_t, axis=0)
          + rows_per_tile * jnp.sum((mean_t - mean[None, :]) ** 2, axis=0))
    var = m2 / (rows_per_tile * num_tiles)                # biased, matches PyTorch training BN
    scale = gamma.astype(jnp.float32) * jax.lax.rsqrt(var + eps)
    shift = beta.astype(jnp.float32) - mean * scale
    return scale.reshape(1, -1), shift.reshape(1, -1)


# ---------------------------------------------------------------------------
# Public entry point
# ---------------------------------------------------------------------------

def residual_block_pallas(x_nchw, params, *, eps=1e-5, slope=0.2,
                          compute_dtype=jnp.bfloat16):
    """ResidualBlock forward (training-mode BN). compute_dtype=f32 is verification-only:
    f32 MXU inputs decompose into multiple bf16 passes (3-6x matmul cost)."""
    N, Cin, H, W = x_nchw.shape
    out_dtype = x_nchw.dtype

    x_nhwc = jnp.transpose(x_nchw, (0, 2, 3, 1))          # NHWC (channels on lanes)
    xc = x_nhwc.astype(compute_dtype)                     # cast BEFORE any tap building

    w1 = params["w1"].astype(compute_dtype)               # (3, 3, Cin,  Cmid)
    w2 = params["w2"].astype(compute_dtype)               # (3, 3, Cmid, Cout)
    Cmid, Cout = w1.shape[-1], w2.shape[-1]
    w1 = w1.reshape(9, Cin, Cmid)
    w2 = w2.reshape(9, Cmid, Cout)
    has_expand = "we" in params

    esize = jnp.dtype(compute_dtype).itemsize
    nb = _pick_batch_tile(N, H, W, Cin, Cmid, Cout, esize)
    num_tiles = N // nb
    rows = nb * H * W
    cparams = _compiler_params(_tile_bytes(nb, H, W, Cin, Cmid, Cout, esize))

    # ---- Pass A: conv1 + per-tile BN1 statistics ---------------------------------
    y_pre, st1 = pl.pallas_call(
        _make_conv1_kernel(nb, H, W, Cin, Cmid),
        grid=(num_tiles,),
        in_specs=[pl.BlockSpec((nb, H, W, Cin), lambda i: (i, 0, 0, 0)),
                  pl.BlockSpec((9, Cin, Cmid), lambda i: (0, 0, 0))],   # VMEM-resident weight
        out_specs=(pl.BlockSpec((nb, H, W, Cmid), lambda i: (i, 0, 0, 0)),
                   pl.BlockSpec((1, 2, Cmid), lambda i: (i, 0, 0))),
        out_shape=(jax.ShapeDtypeStruct((N, H, W, Cmid), compute_dtype),
                   jax.ShapeDtypeStruct((num_tiles, 2, Cmid), jnp.float32)),
        compiler_params=cparams,
    )(xc, w1)
    s1, b1 = _finalize_bn(st1, params["g1"], params["b1"], rows, eps)

    # ---- Pass B: BN1-apply + LeakyReLU + conv2 + per-tile BN2 statistics ----------
    z_pre, st2 = pl.pallas_call(
        _make_conv2_kernel(nb, H, W, Cmid, Cout, slope, compute_dtype),
        grid=(num_tiles,),
        in_specs=[pl.BlockSpec((nb, H, W, Cmid), lambda i: (i, 0, 0, 0)),
                  pl.BlockSpec((1, Cmid), lambda i: (0, 0)),
                  pl.BlockSpec((1, Cmid), lambda i: (0, 0)),
                  pl.BlockSpec((9, Cmid, Cout), lambda i: (0, 0, 0))],
        out_specs=(pl.BlockSpec((nb, H, W, Cout), lambda i: (i, 0, 0, 0)),
                   pl.BlockSpec((1, 2, Cout), lambda i: (i, 0, 0))),
        out_shape=(jax.ShapeDtypeStruct((N, H, W, Cout), compute_dtype),
                   jax.ShapeDtypeStruct((num_tiles, 2, Cout), jnp.float32)),
        compiler_params=cparams,
    )(y_pre, s1, b1, w2)
    s2, b2 = _finalize_bn(st2, params["g2"], params["b2"], rows, eps)

    # ---- Pass C: BN2-apply + identity + LeakyReLU ---------------------------------
    use_dense = (not has_expand and Cin == Cout and Cout < 128
                 and 128 % Cout == 0 and (H * W * Cout) % 128 == 0)
    if use_dense:
        # Fold to a lane-dense (N, R, 128) layout (free row-major reshape in the wrapper):
        # unmasked dense stores and full-lane elementwise math even at tiny Cout.
        R = (H * W * Cout) // 128
        z_flat = z_pre.reshape(N, R, 128)
        x_flat = x_nhwc.reshape(N, R, 128)                # identity in original precision
        reps = 128 // Cout
        s_t = jnp.tile(s2, (1, reps))                     # lane l -> channel l % Cout
        b_t = jnp.tile(b2, (1, reps))
        out_flat = pl.pallas_call(
            _make_finalize_dense_kernel(slope),
            grid=(num_tiles,),
            in_specs=[pl.BlockSpec((nb, R, 128), lambda i: (i, 0, 0)),
                      pl.BlockSpec((nb, R, 128), lambda i: (i, 0, 0)),
                      pl.BlockSpec((1, 128), lambda i: (0, 0)),
                      pl.BlockSpec((1, 128), lambda i: (0, 0))],
            out_specs=pl.BlockSpec((nb, R, 128), lambda i: (i, 0, 0)),
            out_shape=jax.ShapeDtypeStruct((N, R, 128), out_dtype),
            compiler_params=cparams,
        )(z_flat, x_flat, s_t, b_t)
        out_nhwc = out_flat.reshape(N, H, W, Cout)
    else:
        x_in = xc if has_expand else x_nhwc
        inputs = [z_pre, x_in, s2, b2]
        in_specs = [pl.BlockSpec((nb, H, W, Cout), lambda i: (i, 0, 0, 0)),
                    pl.BlockSpec((nb, H, W, Cin), lambda i: (i, 0, 0, 0)),
                    pl.BlockSpec((1, Cout), lambda i: (0, 0)),
                    pl.BlockSpec((1, Cout), lambda i: (0, 0))]
        if has_expand:
            inputs.append(params["we"].astype(compute_dtype))       # (Cin, Cout) 1x1 conv
            in_specs.append(pl.BlockSpec((Cin, Cout), lambda i: (0, 0)))
        out_nhwc = pl.pallas_call(
            _make_finalize_generic_kernel(nb, H, W, Cin, Cout, has_expand, slope),
            grid=(num_tiles,),
            in_specs=in_specs,
            out_specs=pl.BlockSpec((nb, H, W, Cout), lambda i: (i, 0, 0, 0)),
            out_shape=jax.ShapeDtypeStruct((N, H, W, Cout), out_dtype),
            compiler_params=cparams,
        )(*inputs)

    return jnp.transpose(out_nhwc, (0, 3, 1, 2))          # back to NCHW


# ---------------------------------------------------------------------------
# Parameters + pure-JAX reference
# ---------------------------------------------------------------------------

def init_params(key, inc=4, outc=4, scale=1.0):
    """Deterministic synthetic parameters matching the module's shapes."""
    midc = int(outc * scale)
    k1, k2, k3 = jax.random.split(key, 3)
    params = {
        "w1": jax.random.normal(k1, (3, 3, inc, midc), jnp.float32)
        * (1.0 / math.sqrt(9 * inc)),
        "w2": jax.random.normal(k2, (3, 3, midc, outc), jnp.float32)
        * (1.0 / math.sqrt(9 * midc)),
        # PyTorch BatchNorm2d init: gamma=1, beta=0
        "g1": jnp.ones((midc,), jnp.float32),
        "b1": jnp.zeros((midc,), jnp.float32),
        "g2": jnp.ones((outc,), jnp.float32),
        "b2": jnp.zeros((outc,), jnp.float32),
    }
    if inc != outc:
        params["we"] = jax.random.normal(k3, (inc, outc), jnp.float32) * (
            1.0 / math.sqrt(inc)
        )
    return params


def residual_block_ref(x_nchw, params, *, eps=1e-5, slope=0.2):
    """Pure-JAX f32 reference of the PyTorch forward (training-mode BN)."""
    x = jnp.transpose(x_nchw, (0, 2, 3, 1))

    def conv(y, w_hwio):
        return jax.lax.conv_general_dilated(
            y, w_hwio, (1, 1), "SAME",
            dimension_numbers=("NHWC", "HWIO", "NHWC"))

    def bn(y, g, b):
        mean = jnp.mean(y, axis=(0, 1, 2), keepdims=True)
        var = jnp.mean((y - mean) ** 2, axis=(0, 1, 2), keepdims=True)
        return (y - mean) * jax.lax.rsqrt(var + eps) * g.reshape(1, 1, 1, -1) \
            + b.reshape(1, 1, 1, -1)

    def lrelu(y):
        return jnp.where(y > 0, y, slope * y)

    if "we" in params:
        identity = jnp.einsum("nhwc,cd->nhwd", x, params["we"])
    else:
        identity = x
    y = lrelu(bn(conv(x, params["w1"]), params["g1"], params["b1"]))
    z = bn(conv(y, params["w2"]), params["g2"], params["b2"])
    out = lrelu(z + identity)
    return jnp.transpose(out, (0, 3, 1, 2))


if __name__ == "__main__":
    key = jax.random.PRNGKey(0)
    kx, kp1, kp2 = jax.random.split(key, 3)

    N, H, W = 2, 16, 16
    x = jax.random.normal(kx, (N, 4, H, W), jnp.float32)

    # Case 1: inc == outc == 4 (conv_expand is None). f32 matmuls = verification-only
    # mode; exercises the lane-dense folded finalize pass and the multi-tile grid.
    p1 = init_params(kp1, inc=4, outc=4, scale=1.0)
    out1 = jax.block_until_ready(
        residual_block_pallas(x, p1, compute_dtype=jnp.float32))
    ref1 = jax.block_until_ready(residual_block_ref(x, p1))
    assert out1.shape == (N, 4, H, W)
    assert jnp.allclose(out1, ref1, rtol=5e-4, atol=5e-4), "f32 mismatch vs reference"

    # Case 2: inc=4 -> outc=8 (exercises conv_expand), production path: bf16 MXU inputs
    # with f32 accumulation -> looser tolerance vs the f32 reference.
    p2 = init_params(kp2, inc=4, outc=8, scale=1.0)
    out2 = jax.block_until_ready(
        residual_block_pallas(x, p2, compute_dtype=jnp.bfloat16))
    ref2 = jax.block_until_ready(residual_block_ref(x, p2))
    assert out2.shape == (N, 8, H, W)
    assert jnp.allclose(out2, ref2, rtol=5e-2, atol=5e-2), "bf16 mismatch vs reference"

    print("KERNEL_OK")
</pallas_src>

<mosaic_0001>
module attributes {stable_mosaic.version = 11 : i64} {
  func.func @kernel(%arg0: i32, %arg1: memref<1x16x16x4xf32, #tpu.memory_space<vmem>>, %arg2: memref<9x4x4xf32, #tpu.memory_space<vmem>>, %arg3: memref<1x16x16x4xf32, #tpu.memory_space<vmem>>, %arg4: memref<1x2x4xf32, #tpu.memory_space<vmem>>) attributes {dimension_semantics = [#tpu.dimension_semantics<parallel>], iteration_bounds = array<i64: 2>, scalar_prefetch = 0 : i64, scratch_operands = 0 : i64, tpu.core_type = #tpu.core_type<tc>, window_params = [{transform_indices = @transform_0, window_bounds = array<i64: 1, 16, 16, 4>}, {pipeline_mode = #tpu.pipeline_mode<synchronous>, transform_indices = @transform_1, window_bounds = array<i64: 9, 4, 4>}, {transform_indices = @transform_2, window_bounds = array<i64: 1, 16, 16, 4>}, {transform_indices = @transform_3, window_bounds = array<i64: 1, 2, 4>}]} {
    %c0 = arith.constant 0 : index
    %c0_0 = arith.constant 0 : index
    %c0_1 = arith.constant 0 : index
    %c0_2 = arith.constant 0 : index
    %0 = vector.load %arg1[%c0, %c0_0, %c0_1, %c0_2] : memref<1x16x16x4xf32, #tpu.memory_space<vmem>>, vector<1x16x16x4xf32>
    %cst = arith.constant 0.000000e+00 : f32
    %1 = vector.broadcast %cst : f32 to vector<1x1x16x4xf32>
    %2 = tpu.concatenate %1, %0, %1 in 1 : vector<1x1x16x4xf32>, vector<1x16x16x4xf32>, vector<1x1x16x4xf32> -> vector<1x18x16x4xf32>
    %cst_3 = arith.constant 0.000000e+00 : f32
    %3 = vector.broadcast %cst_3 : f32 to vector<1x18x1x4xf32>
    %4 = tpu.concatenate %3, %2, %3 in 2 : vector<1x18x1x4xf32>, vector<1x18x16x4xf32>, vector<1x18x1x4xf32> -> vector<1x18x18x4xf32>
    %5 = vector.extract_strided_slice %4 {offsets = [0, 0, 0, 0], sizes = [1, 16, 16, 4], strides = [1, 1, 1, 1]} : vector<1x18x18x4xf32> to vector<1x16x16x4xf32>
    %6 = vector.shape_cast %5 : vector<1x16x16x4xf32> to vector<256x4xf32>
    %c0_4 = arith.constant 0 : index
    %c0_5 = arith.constant 0 : index
    %c0_6 = arith.constant 0 : index
    %7 = vector.load %arg2[%c0_4, %c0_5, %c0_6] : memref<9x4x4xf32, #tpu.memory_space<vmem>>, vector<1x4x4xf32>
    %8 = vector.shape_cast %7 : vector<1x4x4xf32> to vector<4x4xf32>
    %cst_7 = arith.constant dense<0.000000e+00> : vector<256x4xf32>
    %9 = tpu.matmul %6, %8, %cst_7 {dimension_numbers = #tpu.dot_dimension_numbers<[1], [0], [0], [1], [0, 0, 1, 1], [], []>} : vector<256x4xf32>, vector<4x4xf32>, vector<256x4xf32> -> vector<256x4xf32>
    %10 = vector.extract_strided_slice %4 {offsets = [0, 0, 1, 0], sizes = [1, 16, 16, 4], strides = [1, 1, 1, 1]} : vector<1x18x18x4xf32> to vector<1x16x16x4xf32>
    %11 = vector.shape_cast %10 : vector<1x16x16x4xf32> to vector<256x4xf32>
    %c1 = arith.constant 1 : index
    %c0_8 = arith.constant 0 : index
    %c0_9 = arith.constant 0 : index
    %12 = vector.load %arg2[%c1, %c0_8, %c0_9] : memref<9x4x4xf32, #tpu.memory_space<vmem>>, vector<1x4x4xf32>
    %13 = vector.shape_cast %12 : vector<1x4x4xf32> to vector<4x4xf32>
    %cst_10 = arith.constant dense<0.000000e+00> : vector<256x4xf32>
    %14 = tpu.matmul %11, %13, %cst_10 {dimension_numbers = #tpu.dot_dimension_numbers<[1], [0], [0], [1], [0, 0, 1, 1], [], []>} : vector<256x4xf32>, vector<4x4xf32>, vector<256x4xf32> -> vector<256x4xf32>
    %15 = arith.addf %9, %14 : vector<256x4xf32>
    %16 = vector.extract_strided_slice %4 {offsets = [0, 0, 2, 0], sizes = [1, 16, 16, 4], strides = [1, 1, 1, 1]} : vector<1x18x18x4xf32> to vector<1x16x16x4xf32>
    %17 = vector.shape_cast %16 : vector<1x16x16x4xf32> to vector<256x4xf32>
    %c2 = arith.constant 2 : index
    %c0_11 = arith.constant 0 : index
    %c0_12 = arith.constant 0 : index
    %18 = vector.load %arg2[%c2, %c0_11, %c0_12] : memref<9x4x4xf32, #tpu.memory_space<vmem>>, vector<1x4x4xf32>
    %19 = vector.shape_cast %18 : vector<1x4x4xf32> to vector<4x4xf32>
    %cst_13 = arith.constant dense<0.000000e+00> : vector<256x4xf32>
    %20 = tpu.matmul %17, %19, %cst_13 {dimension_numbers = #tpu.dot_dimension_numbers<[1], [0], [0], [1], [0, 0, 1, 1], [], []>} : vector<256x4xf32>, vector<4x4xf32>, vector<256x4xf32> -> vector<256x4xf32>
    %21 = arith.addf %15, %20 : vector<256x4xf32>
    %22 = vector.extract_strided_slice %4 {offsets = [0, 1, 0, 0], sizes = [1, 16, 16, 4], strides = [1, 1, 1, 1]} : vector<1x18x18x4xf32> to vector<1x16x16x4xf32>
    %23 = vector.shape_cast %22 : vector<1x16x16x4xf32> to vector<256x4xf32>
    %c3 = arith.constant 3 : index
    %c0_14 = arith.constant 0 : index
    %c0_15 = arith.constant 0 : index
    %24 = vector.load %arg2[%c3, %c0_14, %c0_15] : memref<9x4x4xf32, #tpu.memory_space<vmem>>, vector<1x4x4xf32>
    %25 = vector.shape_cast %24 : vector<1x4x4xf32> to vector<4x4xf32>
    %cst_16 = arith.constant dense<0.000000e+00> : vector<256x4xf32>
    %26 = tpu.matmul %23, %25, %cst_16 {dimension_numbers = #tpu.dot_dimension_numbers<[1], [0], [0], [1], [0, 0, 1, 1], [], []>} : vector<256x4xf32>, vector<4x4xf32>, vector<256x4xf32> -> vector<256x4xf32>
    %27 = arith.addf %21, %26 : vector<256x4xf32>
    %28 = vector.extract_strided_slice %4 {offsets = [0, 1, 1, 0], sizes = [1, 16, 16, 4], strides = [1, 1, 1, 1]} : vector<1x18x18x4xf32> to vector<1x16x16x4xf32>
    %29 = vector.shape_cast %28 : vector<1x16x16x4xf32> to vector<256x4xf32>
    %c4 = arith.constant 4 : index
    %c0_17 = arith.constant 0 : index
    %c0_18 = arith.constant 0 : index
    %30 = vector.load %arg2[%c4, %c0_17, %c0_18] : memref<9x4x4xf32, #tpu.memory_space<vmem>>, vector<1x4x4xf32>
    %31 = vector.shape_cast %30 : vector<1x4x4xf32> to vector<4x4xf32>
    %cst_19 = arith.constant dense<0.000000e+00> : vector<256x4xf32>
    %32 = tpu.matmul %29, %31, %cst_19 {dimension_numbers = #tpu.dot_dimension_numbers<[1], [0], [0], [1], [0, 0, 1, 1], [], []>} : vector<256x4xf32>, vector<4x4xf32>, vector<256x4xf32> -> vector<256x4xf32>
    %33 = arith.addf %27, %32 : vector<256x4xf32>
    %34 = vector.extract_strided_slice %4 {offsets = [0, 1, 2, 0], sizes = [1, 16, 16, 4], strides = [1, 1, 1, 1]} : vector<1x18x18x4xf32> to vector<1x16x16x4xf32>
    %35 = vector.shape_cast %34 : vector<1x16x16x4xf32> to vector<256x4xf32>
    %c5 = arith.constant 5 : index
    %c0_20 = arith.constant 0 : index
    %c0_21 = arith.constant 0 : index
    %36 = vector.load %arg2[%c5, %c0_20, %c0_21] : memref<9x4x4xf32, #tpu.memory_space<vmem>>, vector<1x4x4xf32>
    %37 = vector.shape_cast %36 : vector<1x4x4xf32> to vector<4x4xf32>
    %cst_22 = arith.constant dense<0.000000e+00> : vector<256x4xf32>
    %38 = tpu.matmul %35, %37, %cst_22 {dimension_numbers = #tpu.dot_dimension_numbers<[1], [0], [0], [1], [0, 0, 1, 1], [], []>} : vector<256x4xf32>, vector<4x4xf32>, vector<256x4xf32> -> vector<256x4xf32>
    %39 = arith.addf %33, %38 : vector<256x4xf32>
    %40 = vector.extract_strided_slice %4 {offsets = [0, 2, 0, 0], sizes = [1, 16, 16, 4], strides = [1, 1, 1, 1]} : vector<1x18x18x4xf32> to vector<1x16x16x4xf32>
    %41 = vector.shape_cast %40 : vector<1x16x16x4xf32> to vector<256x4xf32>
    %c6 = arith.constant 6 : index
    %c0_23 = arith.constant 0 : index
    %c0_24 = arith.constant 0 : index
    %42 = vector.load %arg2[%c6, %c0_23, %c0_24] : memref<9x4x4xf32, #tpu.memory_space<vmem>>, vector<1x4x4xf32>
    %43 = vector.shape_cast %42 : vector<1x4x4xf32> to vector<4x4xf32>
    %cst_25 = arith.constant dense<0.000000e+00> : vector<256x4xf32>
    %44 = tpu.matmul %41, %43, %cst_25 {dimension_numbers = #tpu.dot_dimension_numbers<[1], [0], [0], [1], [0, 0, 1, 1], [], []>} : vector<256x4xf32>, vector<4x4xf32>, vector<256x4xf32> -> vector<256x4xf32>
    %45 = arith.addf %39, %44 : vector<256x4xf32>
    %46 = vector.extract_strided_slice %4 {offsets = [0, 2, 1, 0], sizes = [1, 16, 16, 4], strides = [1, 1, 1, 1]} : vector<1x18x18x4xf32> to vector<1x16x16x4xf32>
    %47 = vector.shape_cast %46 : vector<1x16x16x4xf32> to vector<256x4xf32>
    %c7 = arith.constant 7 : index
    %c0_26 = arith.constant 0 : index
    %c0_27 = arith.constant 0 : index
    %48 = vector.load %arg2[%c7, %c0_26, %c0_27] : memref<9x4x4xf32, #tpu.memory_space<vmem>>, vector<1x4x4xf32>
    %49 = vector.shape_cast %48 : vector<1x4x4xf32> to vector<4x4xf32>
    %cst_28 = arith.constant dense<0.000000e+00> : vector<256x4xf32>
    %50 = tpu.matmul %47, %49, %cst_28 {dimension_numbers = #tpu.dot_dimension_numbers<[1], [0], [0], [1], [0, 0, 1, 1], [], []>} : vector<256x4xf32>, vector<4x4xf32>, vector<256x4xf32> -> vector<256x4xf32>
    %51 = arith.addf %45, %50 : vector<256x4xf32>
    %52 = vector.extract_strided_slice %4 {offsets = [0, 2, 2, 0], sizes = [1, 16, 16, 4], strides = [1, 1, 1, 1]} : vector<1x18x18x4xf32> to vector<1x16x16x4xf32>
    %53 = vector.shape_cast %52 : vector<1x16x16x4xf32> to vector<256x4xf32>
    %c8 = arith.constant 8 : index
    %c0_29 = arith.constant 0 : index
    %c0_30 = arith.constant 0 : index
    %54 = vector.load %arg2[%c8, %c0_29, %c0_30] : memref<9x4x4xf32, #tpu.memory_space<vmem>>, vector<1x4x4xf32>
    %55 = vector.shape_cast %54 : vector<1x4x4xf32> to vector<4x4xf32>
    %cst_31 = arith.constant dense<0.000000e+00> : vector<256x4xf32>
    %56 = tpu.matmul %53, %55, %cst_31 {dimension_numbers = #tpu.dot_dimension_numbers<[1], [0], [0], [1], [0, 0, 1, 1], [], []>} : vector<256x4xf32>, vector<4x4xf32>, vector<256x4xf32> -> vector<256x4xf32>
    %57 = arith.addf %51, %56 : vector<256x4xf32>
    %cst_32 = arith.constant dense<0.000000e+00> : vector<4xf32>
    %58 = vector.multi_reduction <add>, %57, %cst_32 [0] : vector<256x4xf32> to vector<4xf32>
    %59 = vector.shape_cast %58 : vector<4xf32> to vector<1x4xf32>
    %cst_33 = arith.constant 3.906250e-03 : f32
    %60 = vector.broadcast %cst_33 : f32 to vector<1x4xf32>
    %61 = arith.mulf %59, %60 : vector<1x4xf32>
    %62 = vector.broadcast %61 : vector<1x4xf32> to vector<256x4xf32>
    %63 = arith.subf %57, %62 : vector<256x4xf32>
    %64 = arith.mulf %63, %63 : vector<256x4xf32>
    %cst_34 = arith.constant dense<0.000000e+00> : vector<4xf32>
    %65 = vector.multi_reduction <add>, %64, %cst_34 [0] : vector<256x4xf32> to vector<4xf32>
    %66 = vector.shape_cast %65 : vector<4xf32> to vector<1x4xf32>
    %67 = tpu.concatenate %61, %66 in 0 : vector<1x4xf32>, vector<1x4xf32> -> vector<2x4xf32>
    %c0_35 = arith.constant 0 : index
    %c0_36 = arith.constant 0 : index
    %c0_37 = arith.constant 0 : index
    %68 = vector.load %arg4[%c0_35, %c0_36, %c0_37] : memref<1x2x4xf32, #tpu.memory_space<vmem>>, vector<1x2x4xf32>
    %69 = vector.shape_cast %68 : vector<1x2x4xf32> to vector<2x4xf32>
    %70 = vector.shape_cast %67 : vector<2x4xf32> to vector<1x2x4xf32>
    tpu.vector_store %arg4[%c0_35, %c0_36, %c0_37], %70 {strides = array<i32>} : memref<1x2x4xf32, #tpu.memory_space<vmem>>, vector<1x2x4xf32>,
    %71 = vector.shape_cast %57 : vector<256x4xf32> to vector<1x16x16x4xf32>
    %c0_38 = arith.constant 0 : index
    %c0_39 = arith.constant 0 : index
    %c0_40 = arith.constant 0 : index
    %c0_41 = arith.constant 0 : index
    %72 = vector.load %arg3[%c0_38, %c0_39, %c0_40, %c0_41] : memref<1x16x16x4xf32, #tpu.memory_space<vmem>>, vector<1x16x16x4xf32>
    tpu.vector_store %arg3[%c0_38, %c0_39, %c0_40, %c0_41], %71 {strides = array<i32>} : memref<1x16x16x4xf32, #tpu.memory_space<vmem>>, vector<1x16x16x4xf32>,
    return
  }
  func.func @transform_0(%arg0: i32) -> (i32, i32, i32, i32) {
    %c0_i32 = arith.constant 0 : i32
    %c0_i32_0 = arith.constant 0 : i32
    %c0_i32_1 = arith.constant 0 : i32
    %c0_i32_2 = arith.constant 0 : i32
    return %arg0, %c0_i32, %c0_i32_0, %c0_i32_1 : i32, i32, i32, i32
  }
  func.func @transform_1(%arg0: i32) -> (i32, i32, i32) {
    %c0_i32 = arith.constant 0 : i32
    %c0_i32_0 = arith.constant 0 : i32
    %c0_i32_1 = arith.constant 0 : i32
    %c0_i32_2 = arith.constant 0 : i32
    return %c0_i32, %c0_i32_0, %c0_i32_1 : i32, i32, i32
  }
  func.func @transform_2(%arg0: i32) -> (i32, i32, i32, i32) {
    %c0_i32 = arith.constant 0 : i32
    %c0_i32_0 = arith.constant 0 : i32
    %c0_i32_1 = arith.constant 0 : i32
    %c0_i32_2 = arith.constant 0 : i32
    return %arg0, %c0_i32, %c0_i32_0, %c0_i32_1 : i32, i32, i32, i32
  }
  func.func @transform_3(%arg0: i32) -> (i32, i32, i32) {
    %c0_i32 = arith.constant 0 : i32
    %c0_i32_0 = arith.constant 0 : i32
    %c0_i32_1 = arith.constant 0 : i32
    return %arg0, %c0_i32, %c0_i32_0 : i32, i32, i32
  }
}

</mosaic_0001>

<llo_original>
// kernel: tpu_custom_call.1
$region0: #{tpu_custom_call.1}
  #allocation0 [shape = 'u32[]', space=smem, size = 0x4, offset = 0x4, fixed_abs, tag = 'smem constant byte address 0x4 - core index']
  #allocation1 [shape = 'u32[144,128]{1,0:T(1,128)}', space=vmem, size = 0x12000, scoped, tag = 'internal scratch']
  %s0 = inlined_call_operand.vmem [shape: f32[2,16,16,4], index: 0, kind: input, shape index: {}]
  %s1 = inlined_call_operand.vmem [shape: f32[9,4,4], index: 1, kind: input, shape index: {}]
  %s2 = inlined_call_operand.vmem [shape: f32[2,16,16,4], index: 2, kind: output, shape index: {0}]
  %s3 = inlined_call_operand.hbm [shape: f32[2,2,4], index: 3, kind: output, shape index: {1}]
  %4 = xla_tuple %s2, %s3
  %s5 = sld [smem:[#allocation0]]
  $region49: #{tpu_custom_call.1} parent=0
    _
  %s7 = ssub.s32 1, %s5
  %s8 = scalar_select 0, %s7, %s5
  $region1: #{tpu_custom_call.1} parent=0
    #allocation2 [shape = 'u8[2048]{0}', space=vmem, size = 0x800, scoped, tag = 'output window, operand 1']
    #allocation3 [shape = 's32[2]{0}', space=sflag, size = 0x8, scoped, tag = 'scoped memory for tpu_custom_call.1']
    %9 = vsyncpa [#allocation3], 0
    %s10 = scalar_lea.sflag [#allocation3], 1
    %11 = vsyncpa %s10, 0
    loop: start=0, step=1, limit=4
    $region2: #{tpu_custom_call.1} parent=1 // loop_pre_header
      _
    $region3: #{tpu_custom_call.1} parent=1 // loop_header
      %s13 = sphi 0, %s17
      %p14 = scmp.ge.s32.totalorder %s13, 4
      %s23 = sphi 0, %s25
      %s26 = sphi 0, %s23
      %s27 = sphi 0, %s26
      %s43 = sphi 0, %s27
      %s47 = sphi 0, %s47
      %s49 = sphi 0, %s47
      %s50 = sphi 0, %s49
      %s64 = sphi 0, %s50
      %s70 = sphi 0, %s72
      %s73 = sphi 0, %s70
      %s74 = sphi 0, %s73
      %s90 = sphi 0, %s74
      %s96 = sphi 0, %s98
      %s99 = sphi 0, %s96
      %s100 = sphi 0, %s99
      %s116 = sphi 0, %s100
    $region4: #{tpu_custom_call.1} parent=1 // loop_header_branch
      %16 = sbr.rel (%p14) target = $region8
    $region5: #{tpu_custom_call.1} parent=1 // loop_body
      %s18 = ssub.s32 %s13, 1
      %s19 = ssub.s32 %s13, 2
      %s20 = sadd.s32 %s13, 1
      %s21 = ssub.s32 %s13, %s20
      %p22 = scmp.eq.s32.totalorder %s21, 0
      %s24 = sadd.s32 %s23, 1
      %s25 = scalar_select %p22, %s23, %s24
      %p28 = pneg %p22
      %p29 = scmp.eq.s32.totalorder %s13, 1
      %p30 = por %p28, %p29
      %p31 = scmp.ne.s32.totalorder %s23, %s26
      %p32 = scmp.eq.s32.totalorder %s13, 0
      %p33 = por %p31, %p32
      %p34 = scmp.ne.s32.totalorder %s23, %s26
      %p35 = scmp.eq.s32.totalorder %s18, 1
      %p36 = por %p34, %p35
      %p37 = scmp.ne.s32.totalorder %s26, %s27
      %p38 = scmp.eq.s32.totalorder %s18, 0
      %p39 = por %p37, %p38
      %p40 = scmp.ne.s32.totalorder %s26, %s27
      %p41 = scmp.eq.s32.totalorder %s19, 1
      %p42 = por %p40, %p41
      %p44 = scmp.ne.s32.totalorder %s27, %s43
      %p45 = scmp.eq.s32.totalorder %s19, 0
      %p46 = por %p44, %p45
      %s48 = sadd.s32 %s47, 1
      %p51 = scmp.eq.s32.totalorder %s13, 1
      %p52 = scmp.ne.s32.totalorder %s47, %s49
      %p53 = scmp.eq.s32.totalorder %s13, 0
      %p54 = por %p52, %p53
      %p55 = scmp.ne.s32.totalorder %s47, %s49
      %p56 = scmp.eq.s32.totalorder %s18, 1
      %p57 = por %p55, %p56
      %p58 = scmp.ne.s32.totalorder %s49, %s50
      %p59 = scmp.eq.s32.totalorder %s18, 0
      %p60 = por %p58, %p59
      %p61 = scmp.ne.s32.totalorder %s49, %s50
      %p62 = scmp.eq.s32.totalorder %s19, 1
      %p63 = por %p61, %p62
      %p65 = scmp.ne.s32.totalorder %s50, %s64
      %p66 = scmp.eq.s32.totalorder %s19, 0
      %p67 = por %p65, %p66
      %s68 = ssub.s32 %s13, %s20
      %p69 = scmp.eq.s32.totalorder %s68, 0
      %s71 = sadd.s32 %s70, 1
      %s72 = scalar_select %p69, %s70, %s71
      %p75 = pneg %p69
      %p76 = scmp.eq.s32.totalorder %s13, 1
      %p77 = por %p75, %p76
      %p78 = scmp.ne.s32.totalorder %s70, %s73
      %p79 = scmp.eq.s32.totalorder %s13, 0
      %p80 = por %p78, %p79
      %p81 = scmp.ne.s32.totalorder %s70, %s73
      %p82 = scmp.eq.s32.totalorder %s18, 1
      %p83 = por %p81, %p82
      %p84 = scmp.ne.s32.totalorder %s73, %s74
      %p85 = scmp.eq.s32.totalorder %s18, 0
      %p86 = por %p84, %p85
      %p87 = scmp.ne.s32.totalorder %s73, %s74
      %p88 = scmp.eq.s32.totalorder %s19, 1
      %p89 = por %p87, %p88
      %p91 = scmp.ne.s32.totalorder %s74, %s90
      %p92 = scmp.eq.s32.totalorder %s19, 0
      %p93 = por %p91, %p92
      %s94 = ssub.s32 %s13, %s20
      %p95 = scmp.eq.s32.totalorder %s94, 0
      %s97 = sadd.s32 %s96, 1
      %s98 = scalar_select %p95, %s96, %s97
      %p101 = pneg %p95
      %p102 = scmp.eq.s32.totalorder %s13, 1
      %p103 = por %p101, %p102
      %p104 = scmp.ne.s32.totalorder %s96, %s99
      %p105 = scmp.eq.s32.totalorder %s13, 0
      %p106 = por %p104, %p105
      %p107 = scmp.ne.s32.totalorder %s96, %s99
      %p108 = scmp.eq.s32.totalorder %s18, 1
      %p109 = por %p107, %p108
      %p110 = scmp.ne.s32.totalorder %s99, %s100
      %p111 = scmp.eq.s32.totalorder %s18, 0
      %p112 = por %p110, %p111
      %p113 = scmp.ne.s32.totalorder %s99, %s100
      %p114 = scmp.eq.s32.totalorder %s19, 1
      %p115 = por %p113, %p114
      %p117 = scmp.ne.s32.totalorder %s100, %s116
      %p118 = scmp.eq.s32.totalorder %s19, 0
      %p119 = por %p117, %p118
      %p120 = scmp.le.s32.totalorder 1, %s13
      %p121 = scmp.lt.s32.totalorder %s13, 3
      %p122 = pnand %p120, %p121
      %p123 = pneg %p122
      // Predicated region
      $region9: #{tpu_custom_call.1} parent=5 // pred_check
        _
      $region10: #{tpu_custom_call.1} parent=5 // pred_check_branch
        %125 = sbr.rel (%p122) target = $region12
      $region11: #{tpu_custom_call.1} parent=5 // pred_region
        %s126 = ssub.s32 %s13, 1
        // Predicated region
        $region13: #{tpu_custom_call.1} parent=11 // pred_check
          %p127 = pneg %p60
        $region14: #{tpu_custom_call.1} parent=11 // pred_check_branch
          %129 = sbr.rel (%p127) target = $region16
        $region15: #{tpu_custom_call.1} parent=11 // pred_region
          _
        $region16: #{tpu_custom_call.1} parent=11 // pred_fallthru
          _
      $region12: #{tpu_custom_call.1} parent=5 // pred_fallthru
        _
      %p130 = scmp.lt.s32.totalorder %s13, 2
      // Predicated region
      $region17: #{tpu_custom_call.1} parent=5 // pred_check
        %p131 = pneg %p130
      $region18: #{tpu_custom_call.1} parent=5 // pred_check_branch
        %133 = sbr.rel (%p131) target = $region20
      $region19: #{tpu_custom_call.1} parent=5 // pred_region
        // Predicated region
        $region21: #{tpu_custom_call.1} parent=19 // pred_check
          %p134 = pneg %p33
        $region22: #{tpu_custom_call.1} parent=19 // pred_check_branch
          %136 = sbr.rel (%p134) target = $region24
        $region23: #{tpu_custom_call.1} parent=19 // pred_region
          %p137 = scmp.lt.s32.totalorder %s13, 1
          %s138 = scalar_select %p137, %s13, 1
          %s139 = smul.addr %s138, 32
          %s140 = smul.addr %s139, 8
          %s141 = scalar_lea.vmem %s0, %s140
        $region24: #{tpu_custom_call.1} parent=19 // pred_fallthru
          _
      $region20: #{tpu_custom_call.1} parent=5 // pred_fallthru
        _
      %p142 = scmp.le.s32.totalorder 1, %s13
      %p143 = scmp.lt.s32.totalorder %s13, 3
      %p144 = pnand %p142, %p143
      %p145 = pneg %p144
      // Predicated region
      $region25: #{tpu_custom_call.1} parent=5 // pred_check
        _
      $region26: #{tpu_custom_call.1} parent=5 // pred_check_branch
        %147 = sbr.rel (%p144) target = $region28
      $region27: #{tpu_custom_call.1} parent=5 // pred_region
        %s148 = ssub.s32 %s13, 1
        %p149 = scmp.lt.s32.totalorder %s18, 1
        %s150 = scalar_select %p149, %s18, 1
        %s151 = smul.addr %s150, 32
        %s152 = smul.addr %s151, 8
        %s153 = scalar_lea.vmem %s0, %s152
        %p154 = pneg %p39
        %p155 = pneg %p36
        %p156 = pneg %p60
        %p157 = pneg %p57
        %p158 = pneg %p86
        %p159 = pneg %p83
        %p160 = scmp.lt.s32.totalorder %s18, 1
        %s161 = scalar_select %p160, %s18, 1
        %s162 = smul.addr %s161, 32
        %s163 = smul.addr %s162, 8
        %s164 = scalar_lea.vmem %s2, %s163
        %p165 = pneg %p112
        %p166 = pneg %p109
        %s167 = sand.u32 %s99, 1
        %s168 = scalar_lea.sflag [#allocation3], %s167
        %s169 = sand.u32 %s99, 1
        %s170 = smul.addr %s169, 2
        %s171 = scalar_lea.vmem [#allocation2], %s170
        %p172 = scmp.lt.s32.totalorder %s18, 1
        %s173 = scalar_select %p172, %s18, 1
        %s174 = smul.addr %s173, 32
        %s175 = smul.addr %s174, 8
        %s176 = scalar_lea.vmem %s0, %s175
        %p177 = scmp.lt.s32.totalorder %s18, 1
        %s178 = scalar_select %p177, %s18, 1
        %s179 = smul.addr %s178, 32
        %s180 = smul.addr %s179, 8
        %s181 = scalar_lea.vmem %s2, %s180
        %v182 = vld [vmem:[%s176] sm:$0xff]
        %v183 = vld [vmem:[%s176 + $0x8] sm:$0xff]
        %v184 = vld [vmem:[%s176 + $0x10] sm:$0xff]
        %v185 = vld [vmem:[%s176 + $0x18] sm:$0xff]
        %v186 = vld [vmem:[%s176 + $0x20] sm:$0xff]
        %v187 = vld [vmem:[%s176 + $0x28] sm:$0xff]
        %v188 = vld [vmem:[%s176 + $0x30] sm:$0xff]
        %v189 = vld [vmem:[%s176 + $0x38] sm:$0xff]
        %v190 = vld [vmem:[%s176 + $0x40] sm:$0xff]
        %v191 = vld [vmem:[%s176 + $0x48] sm:$0xff]
        %v192 = vld [vmem:[%s176 + $0x50] sm:$0xff]
        %v193 = vld [vmem:[%s176 + $0x58] sm:$0xff]
        %v194 = vld [vmem:[%s176 + $0x60] sm:$0xff]
        %v195 = vld [vmem:[%s176 + $0x68] sm:$0xff]
        %v196 = vld [vmem:[%s176 + $0x70] sm:$0xff]
        %v197 = vld [vmem:[%s176 + $0x78] sm:$0xff]
        %v198 = vld [vmem:[%s176 + $0x80] sm:$0xff]
        %v199 = vld [vmem:[%s176 + $0x88] sm:$0xff]
        %v200 = vld [vmem:[%s176 + $0x90] sm:$0xff]
        %v201 = vld [vmem:[%s176 + $0x98] sm:$0xff]
        %v202 = vld [vmem:[%s176 + $0xa0] sm:$0xff]
        %v203 = vld [vmem:[%s176 + $0xa8] sm:$0xff]
        %v204 = vld [vmem:[%s176 + $0xb0] sm:$0xff]
        %v205 = vld [vmem:[%s176 + $0xb8] sm:$0xff]
        %v206 = vld [vmem:[%s176 + $0xc0] sm:$0xff]
        %v207 = vld [vmem:[%s176 + $0xc8] sm:$0xff]
        %v208 = vld [vmem:[%s176 + $0xd0] sm:$0xff]
        %v209 = vld [vmem:[%s176 + $0xd8] sm:$0xff]
        %v210 = vld [vmem:[%s176 + $0xe0] sm:$0xff]
        %v211 = vld [vmem:[%s176 + $0xe8] sm:$0xff]
        %v212 = vld [vmem:[%s176 + $0xf0] sm:$0xff]
        %v213 = vld [vmem:[%s176 + $0xf8] sm:$0xff]
        %vm247 = vcmask 1040384
        %v248 = vrot.slane 0.0, 7
        %v249 = vsel %vm247, %v248, %v248
        %v250 = vrot.slane %v182, 7
        %v251 = vrot.slane %v183, 7
        %v252 = vsel %vm247, %v250, %v251
        %v253 = vrot.slane %v184, 7
        %v254 = vrot.slane %v185, 7
        %v255 = vsel %vm247, %v253, %v254
        %v256 = vrot.slane %v186, 7
        %v257 = vrot.slane %v187, 7
        %v258 = vsel %vm247, %v256, %v257
        %v259 = vrot.slane %v188, 7
        %v260 = vrot.slane %v189, 7
        %v261 = vsel %vm247, %v259, %v260
        %v262 = vrot.slane %v190, 7
        %v263 = vrot.slane %v191, 7
        %v264 = vsel %vm247, %v262, %v263
        %v265 = vrot.slane %v192, 7
        %v266 = vrot.slane %v193, 7
        %v267 = vsel %vm247, %v265, %v266
        %v268 = vrot.slane %v194, 7
        %v269 = vrot.slane %v195, 7
        %v270 = vsel %vm247, %v268, %v269
        %v271 = vrot.slane %v196, 7
        %v272 = vrot.slane %v197, 7
        %v273 = vsel %vm247, %v271, %v272
        %v274 = vrot.slane %v198, 7
        %v275 = vrot.slane %v199, 7
        %v276 = vsel %vm247, %v274, %v275
        %v277 = vrot.slane %v200, 7
        %v278 = vrot.slane %v201, 7
        %v279 = vsel %vm247, %v277, %v278
        %v280 = vrot.slane %v202, 7
        %v281 = vrot.slane %v203, 7
        %v282 = vsel %vm247, %v280, %v281
        %v283 = vrot.slane %v204, 7
        %v284 = vrot.slane %v205, 7
        %v285 = vsel %vm247, %v283, %v284
        %v286 = vrot.slane %v206, 7
        %v287 = vrot.slane %v207, 7
        %v288 = vsel %vm247, %v286, %v287
        %v289 = vrot.slane %v208, 7
        %v290 = vrot.slane %v209, 7
        %v291 = vsel %vm247, %v289, %v290
        %v292 = vrot.slane %v210, 7
        %v293 = vrot.slane %v211, 7
        %v294 = vsel %vm247, %v292, %v293
        %v295 = vrot.slane %v212, 7
        %v296 = vrot.slane %v213, 7
        %v297 = vsel %vm247, %v295, %v296
        %v331 = vsel %vm247, 0.0, %v248
        %v332 = vsel %vm247, 0.0, %v250
        %v333 = vsel %vm247, 0.0, %v253
        %v334 = vsel %vm247, 0.0, %v256
        %v335 = vsel %vm247, 0.0, %v259
        %v336 = vsel %vm247, 0.0, %v262
        %v337 = vsel %vm247, 0.0, %v265
        %v338 = vsel %vm247, 0.0, %v268
        %v339 = vsel %vm247, 0.0, %v271
        %v340 = vsel %vm247, 0.0, %v274
        %v341 = vsel %vm247, 0.0, %v277
        %v342 = vsel %vm247, 0.0, %v280
        %v343 = vsel %vm247, 0.0, %v283
        %v344 = vsel %vm247, 0.0, %v286
        %v345 = vsel %vm247, 0.0, %v289
        %v346 = vsel %vm247, 0.0, %v292
        %v347 = vsel %vm247, 0.0, %v295
        %v348 = vsel %vm247, %v248, 0.0
        %v349 = vsel %vm247, %v251, 0.0
        %v350 = vsel %vm247, %v254, 0.0
        %v351 = vsel %vm247, %v257, 0.0
        %v352 = vsel %vm247, %v260, 0.0
        %v353 = vsel %vm247, %v263, 0.0
        %v354 = vsel %vm247, %v266, 0.0
        %v355 = vsel %vm247, %v269, 0.0
        %v356 = vsel %vm247, %v272, 0.0
        %v357 = vsel %vm247, %v275, 0.0
        %v358 = vsel %vm247, %v278, 0.0
        %v359 = vsel %vm247, %v281, 0.0
        %v360 = vsel %vm247, %v284, 0.0
        %v361 = vsel %vm247, %v287, 0.0
        %v362 = vsel %vm247, %v290, 0.0
        %v363 = vsel %vm247, %v293, 0.0
        %v364 = vsel %vm247, %v296, 0.0
        %v365 = vld [vmem:[%s1] sm:$0xf]
        %vm398 = vcmask 1046528
        %v399 = vrot.slane %v331, 1
        %v400 = vrot.slane %v249, 1
        %v401 = vsel %vm398, %v399, %v400
        %v402 = vrot.slane %v348, 1
        %v403 = vsel %vm398, %v400, %v402
        %v404 = vrot.slane %v332, 1
        %v405 = vrot.slane %v252, 1
        %v406 = vsel %vm398, %v404, %v405
        %v407 = vrot.slane %v349, 1
        %v408 = vsel %vm398, %v405, %v407
        %v409 = vrot.slane %v333, 1
        %v410 = vrot.slane %v255, 1
        %v411 = vsel %vm398, %v409, %v410
        %v412 = vrot.slane %v350, 1
        %v413 = vsel %vm398, %v410, %v412
        %v414 = vrot.slane %v334, 1
        %v415 = vrot.slane %v258, 1
        %v416 = vsel %vm398, %v414, %v415
        %v417 = vrot.slane %v351, 1
        %v418 = vsel %vm398, %v415, %v417
        %v419 = vrot.slane %v335, 1
        %v420 = vrot.slane %v261, 1
        %v421 = vsel %vm398, %v419, %v420
        %v422 = vrot.slane %v352, 1
        %v423 = vsel %vm398, %v420, %v422
        %v424 = vrot.slane %v336, 1
        %v425 = vrot.slane %v264, 1
        %v426 = vsel %vm398, %v424, %v425
        %v427 = vrot.slane %v353, 1
        %v428 = vsel %vm398, %v425, %v427
        %v429 = vrot.slane %v337, 1
        %v430 = vrot.slane %v267, 1
        %v431 = vsel %vm398, %v429, %v430
        %v432 = vrot.slane %v354, 1
        %v433 = vsel %vm398, %v430, %v432
        %v434 = vrot.slane %v338, 1
        %v435 = vrot.slane %v270, 1
        %v436 = vsel %vm398, %v434, %v435
        %v437 = vrot.slane %v355, 1
        %v438 = vsel %vm398, %v435, %v437
        %v439 = vrot.slane %v339, 1
        %v440 = vrot.slane %v273, 1
        %v441 = vsel %vm398, %v439, %v440
        %v442 = vrot.slane %v356, 1
        %v443 = vsel %vm398, %v440, %v442
        %v444 = vrot.slane %v340, 1
        %v445 = vrot.slane %v276, 1
        %v446 = vsel %vm398, %v444, %v445
        %v447 = vrot.slane %v357, 1
        %v448 = vsel %vm398, %v445, %v447
        %v449 = vrot.slane %v341, 1
        %v450 = vrot.slane %v279, 1
        %v451 = vsel %vm398, %v449, %v450
        %v452 = vrot.slane %v358, 1
        %v453 = vsel %vm398, %v450, %v452
        %v454 = vrot.slane %v342, 1
        %v455 = vrot.slane %v282, 1
        %v456 = vsel %vm398, %v454, %v455
        %v457 = vrot.slane %v359, 1
        %v458 = vsel %vm398, %v455, %v457
        %v459 = vrot.slane %v343, 1
        %v460 = vrot.slane %v285, 1
        %v461 = vsel %vm398, %v459, %v460
        %v462 = vrot.slane %v360, 1
        %v463 = vsel %vm398, %v460, %v462
        %v464 = vrot.slane %v344, 1
        %v465 = vrot.slane %v288, 1
        %v466 = vsel %vm398, %v464, %v465
        %v467 = vrot.slane %v361, 1
        %v468 = vsel %vm398, %v465, %v467
        %v469 = vrot.slane %v345, 1
        %v470 = vrot.slane %v291, 1
        %v471 = vsel %vm398, %v469, %v470
        %v472 = vrot.slane %v362, 1
        %v473 = vsel %vm398, %v470, %v472
        %v474 = vrot.slane %v346, 1
        %v475 = vrot.slane %v294, 1
        %v476 = vsel %vm398, %v474, %v475
        %v477 = vrot.slane %v363, 1
        %v478 = vsel %vm398, %v475, %v477
        %s479 = scalar_lea.vmem %s1, 4
        %v480 = vld [vmem:[%s479] sm:$0xf]
        %vm481 = vcmask 31744
        %v482 = vsel %vm481, %v401, 0
        %v484 = vsel %vm481, %v403, 0
        %v486 = vsel %vm481, %v406, 0
        %v488 = vsel %vm481, %v408, 0
        %v490 = vsel %vm481, %v411, 0
        %v492 = vsel %vm481, %v413, 0
        %v494 = vsel %vm481, %v416, 0
        %v496 = vsel %vm481, %v418, 0
        %v498 = vsel %vm481, %v421, 0
        %v500 = vsel %vm481, %v423, 0
        %v502 = vsel %vm481, %v426, 0
        %v504 = vsel %vm481, %v428, 0
        %v506 = vsel %vm481, %v431, 0
        %v508 = vsel %vm481, %v433, 0
        %v510 = vsel %vm481, %v436, 0
        %v512 = vsel %vm481, %v438, 0
        %v514 = vsel %vm481, %v441, 0
        %v516 = vsel %vm481, %v443, 0
        %v518 = vsel %vm481, %v446, 0
        %v520 = vsel %vm481, %v448, 0
        %v522 = vsel %vm481, %v451, 0
        %v524 = vsel %vm481, %v453, 0
        %v526 = vsel %vm481, %v456, 0
        %v528 = vsel %vm481, %v458, 0
        %v530 = vsel %vm481, %v461, 0
        %v532 = vsel %vm481, %v463, 0
        %v534 = vsel %vm481, %v466, 0
        %v536 = vsel %vm481, %v468, 0
        %v538 = vsel %vm481, %v471, 0
        %v540 = vsel %vm481, %v473, 0
        %v542 = vsel %vm481, %v476, 0
        %v544 = vsel %vm481, %v478, 0
        %vm546 = vcmask 1043456
        %v548 = vsel %vm546, %v480, 0
        %550 = vmatprep.subr.mxu0 0.0
        %551 = vmatpush1.msra.mxu0 %v548
        %552 = vmatprep.subr.mxu0 0.0
        %553 = vmatpush1.msra.mxu0 0.0
        %554 = vmatprep.subr.mxu0 0.0
        %555 = vmatpush1.msra.mxu0 0.0
        %556 = vmatprep.subr.mxu0 0.0
        %557 = vmatpush1.msra.mxu0 0.0
        %558 = vmatprep.subr.mxu0 0.0
        %559 = vmatpush1.msra.mxu0 0.0
        %560 = vmatprep.subr.mxu0 0.0
        %561 = vmatpush1.msra.mxu0 0.0
        %562 = vmatprep.subr.mxu0 0.0
        %563 = vmatpush1.msra.mxu0 0.0
        %564 = vmatprep.subr.mxu0 0.0
        %565 = vmatpush1.msra.mxu0 0.0
        %566 = vmatprep.subr.mxu0 0.0
        %567 = vmatpush1.msra.mxu0 0.0
        %568 = vmatprep.subr.mxu0 0.0
        %569 = vmatpush1.msra.mxu0 0.0
        %570 = vmatprep.subr.mxu0 0.0
        %571 = vmatpush1.msra.mxu0 0.0
        %572 = vmatprep.subr.mxu0 0.0
        %573 = vmatpush1.msra.mxu0 0.0
        %574 = vmatprep.subr.mxu0 0.0
        %575 = vmatpush1.msra.mxu0 0.0
        %576 = vmatprep.subr.mxu0 0.0
        %577 = vmatpush1.msra.mxu0 0.0
        %578 = vmatprep.subr.mxu0 0.0
        %579 = vmatpush1.msra.mxu0 0.0
        %580 = vmatprep.subr.mxu0 0.0
        %581 = vmatpush1.msra.mxu0 0.0
        %582 = vmatprep.subr.mxu0 0.0
        %583 = vmatpush1.msra.mxu0 0.0
        %584 = vmatprep.subr.mxu0 0.0
        %585 = vmatpush1.msra.mxu0 0.0
        %586 = vmatprep.subr.mxu0 0.0
        %587 = vmatpush1.msra.mxu0 0.0
        %588 = vmatprep.subr.mxu0 0.0
        %589 = vmatpush1.msra.mxu0 0.0
        %590 = vmatprep.subr.mxu0 0.0
        %591 = vmatpush1.msra.mxu0 0.0
        %592 = vmatprep.subr.mxu0 0.0
        %593 = vmatpush1.msra.mxu0 0.0
        %594 = vmatprep.subr.mxu0 0.0
        %595 = vmatpush1.msra.mxu0 0.0
        %596 = vmatprep.subr.mxu0 0.0
        %597 = vmatpush1.msra.mxu0 0.0
        %598 = vmatprep.subr.mxu0 0.0
        %599 = vmatpush1.msra.mxu0 0.0
        %600 = vmatprep.subr.mxu0 0.0
        %601 = vmatpush1.msra.mxu0 0.0
        %602 = vmatprep.subr.mxu0 0.0
        %603 = vmatpush1.msra.mxu0 0.0
        %604 = vmatprep.subr.mxu0 0.0
        %605 = vmatpush1.msra.mxu0 0.0
        %606 = vmatprep.subr.mxu0 0.0
        %607 = vmatpush1.msra.mxu0 0.0
        %608 = vmatprep.subr.mxu0 0.0
        %609 = vmatpush1.msra.mxu0 0.0
        %610 = vmatprep.subr.mxu0 0.0
        %611 = vmatpush1.msra.mxu0 0.0
        %612 = vmatprep.subr.mxu0 0.0
        %613 = vmatpush1.msra.mxu0 0.0
        %614 = vmatprep.mubr.f32.mxu0 0.0
        %615 = vmatmul.mubr.f32.gmra.mrb[0].mxu0 %v482
        %v616 = vpop.f32.mrb[0].mxu0
        %v617 = vadd.f32 0.0, %v616
        %v618 = vpop.f32.mrb[0].mxu0
        %619 = vmatprep.mubr.f32.mxu0 0.0
        %620 = vmatmul.mubr.f32.gmra.mrb[0].mxu0 %v484
        %v621 = vpop.f32.mrb[0].mxu0
        %v622 = vadd.f32 0.0, %v621
        %v623 = vpop.f32.mrb[0].mxu0
        %624 = vmatprep.mubr.f32.mxu0 0.0
        %625 = vmatmul.mubr.f32.gmra.mrb[0].mxu0 %v486
        %v626 = vpop.f32.mrb[0].mxu0
        %v627 = vadd.f32 0.0, %v626
        %v628 = vpop.f32.mrb[0].mxu0
        %629 = vmatprep.mubr.f32.mxu0 0.0
        %630 = vmatmul.mubr.f32.gmra.mrb[0].mxu0 %v488
        %v631 = vpop.f32.mrb[0].mxu0
        %v632 = vadd.f32 0.0, %v631
        %v633 = vpop.f32.mrb[0].mxu0
        %634 = vmatprep.mubr.f32.mxu0 0.0
        %635 = vmatmul.mubr.f32.gmra.mrb[0].mxu0 %v490
        %v636 = vpop.f32.mrb[0].mxu0
        %v637 = vadd.f32 0.0, %v636
        %v638 = vpop.f32.mrb[0].mxu0
        %639 = vmatprep.mubr.f32.mxu0 0.0
        %640 = vmatmul.mubr.f32.gmra.mrb[0].mxu0 %v492
        %v641 = vpop.f32.mrb[0].mxu0
        %v642 = vadd.f32 0.0, %v641
        %v643 = vpop.f32.mrb[0].mxu0
        %644 = vmatprep.mubr.f32.mxu0 0.0
        %645 = vmatmul.mubr.f32.gmra.mrb[0].mxu0 %v494
        %v646 = vpop.f32.mrb[0].mxu0
        %v647 = vadd.f32 0.0, %v646
        %v648 = vpop.f32.mrb[0].mxu0
        %649 = vmatprep.mubr.f32.mxu0 0.0
        %650 = vmatmul.mubr.f32.gmra.mrb[0].mxu0 %v496
        %v651 = vpop.f32.mrb[0].mxu0
        %v652 = vadd.f32 0.0, %v651
        %v653 = vpop.f32.mrb[0].mxu0
        %654 = vmatprep.mubr.f32.mxu0 0.0
        %655 = vmatmul.mubr.f32.gmra.mrb[0].mxu0 %v498
        %v656 = vpop.f32.mrb[0].mxu0
        %v657 = vadd.f32 0.0, %v656
        %v658 = vpop.f32.mrb[0].mxu0
        %659 = vmatprep.mubr.f32.mxu0 0.0
        %660 = vmatmul.mubr.f32.gmra.mrb[0].mxu0 %v500
        %v661 = vpop.f32.mrb[0].mxu0
        %v662 = vadd.f32 0.0, %v661
        %v663 = vpop.f32.mrb[0].mxu0
        %664 = vmatprep.mubr.f32.mxu0 0.0
        %665 = vmatmul.mubr.f32.gmra.mrb[0].mxu0 %v502
        %v666 = vpop.f32.mrb[0].mxu0
        %v667 = vadd.f32 0.0, %v666
        %v668 = vpop.f32.mrb[0].mxu0
        %669 = vmatprep.mubr.f32.mxu0 0.0
        %670 = vmatmul.mubr.f32.gmra.mrb[0].mxu0 %v504
        %v671 = vpop.f32.mrb[0].mxu0
        %v672 = vadd.f32 0.0, %v671
        %v673 = vpop.f32.mrb[0].mxu0
        %674 = vmatprep.mubr.f32.mxu0 0.0
        %675 = vmatmul.mubr.f32.gmra.mrb[0].mxu0 %v506
        %v676 = vpop.f32.mrb[0].mxu0
        %v677 = vadd.f32 0.0, %v676
        %v678 = vpop.f32.mrb[0].mxu0
        %679 = vmatprep.mubr.f32.mxu0 0.0
        %680 = vmatmul.mubr.f32.gmra.mrb[0].mxu0 %v508
        %v681 = vpop.f32.mrb[0].mxu0
        %v682 = vadd.f32 0.0, %v681
        %v683 = vpop.f32.mrb[0].mxu0
        %684 = vmatprep.mubr.f32.mxu0 0.0
        %685 = vmatmul.mubr.f32.gmra.mrb[0].mxu0 %v510
        %v686 = vpop.f32.mrb[0].mxu0
        %v687 = vadd.f32 0.0, %v686
        %v688 = vpop.f32.mrb[0].mxu0
        %689 = vmatprep.mubr.f32.mxu0 0.0
        %690 = vmatmul.mubr.f32.gmra.mrb[0].mxu0 %v512
        %v691 = vpop.f32.mrb[0].mxu0
        %v692 = vadd.f32 0.0, %v691
        %v693 = vpop.f32.mrb[0].mxu0
        %694 = vmatprep.mubr.f32.mxu0 0.0
        %695 = vmatmul.mubr.f32.gmra.mrb[0].mxu0 %v514
        %v696 = vpop.f32.mrb[0].mxu0
        %v697 = vadd.f32 0.0, %v696
        %v698 = vpop.f32.mrb[0].mxu0
        %699 = vmatprep.mubr.f32.mxu0 0.0
        %700 = vmatmul.mubr.f32.gmra.mrb[0].mxu0 %v516
        %v701 = vpop.f32.mrb[0].mxu0
        %v702 = vadd.f32 0.0, %v701
        %v703 = vpop.f32.mrb[0].mxu0
        %704 = vmatprep.mubr.f32.mxu0 0.0
        %705 = vmatmul.mubr.f32.gmra.mrb[0].mxu0 %v518
        %v706 = vpop.f32.mrb[0].mxu0
        %v707 = vadd.f32 0.0, %v706
        %v708 = vpop.f32.mrb[0].mxu0
        %709 = vmatprep.mubr.f32.mxu0 0.0
        %710 = vmatmul.mubr.f32.gmra.mrb[0].mxu0 %v520
        %v711 = vpop.f32.mrb[0].mxu0
        %v712 = vadd.f32 0.0, %v711
        %v713 = vpop.f32.mrb[0].mxu0
        %714 = vmatprep.mubr.f32.mxu0 0.0
        %715 = vmatmul.mubr.f32.gmra.mrb[0].mxu0 %v522
        %v716 = vpop.f32.mrb[0].mxu0
        %v717 = vadd.f32 0.0, %v716
        %v718 = vpop.f32.mrb[0].mxu0
        %719 = vmatprep.mubr.f32.mxu0 0.0
        %720 = vmatmul.mubr.f32.gmra.mrb[0].mxu0 %v524
        %v721 = vpop.f32.mrb[0].mxu0
        %v722 = vadd.f32 0.0, %v721
        %v723 = vpop.f32.mrb[0].mxu0
        %724 = vmatprep.mubr.f32.mxu0 0.0
        %725 = vmatmul.mubr.f32.gmra.mrb[0].mxu0 %v526
        %v726 = vpop.f32.mrb[0].mxu0
        %v727 = vadd.f32 0.0, %v726
        %v728 = vpop.f32.mrb[0].mxu0
        %729 = vmatprep.mubr.f32.mxu0 0.0
        %730 = vmatmul.mubr.f32.gmra.mrb[0].mxu0 %v528
        %v731 = vpop.f32.mrb[0].mxu0
        %v732 = vadd.f32 0.0, %v731
        %v733 = vpop.f32.mrb[0].mxu0
        %734 = vmatprep.mubr.f32.mxu0 0.0
        %735 = vmatmul.mubr.f32.gmra.mrb[0].mxu0 %v530
        %v736 = vpop.f32.mrb[0].mxu0
        %v737 = vadd.f32 0.0, %v736
        %v738 = vpop.f32.mrb[0].mxu0
        %739 = vmatprep.mubr.f32.mxu0 0.0
        %740 = vmatmul.mubr.f32.gmra.mrb[0].mxu0 %v532
        %v741 = vpop.f32.mrb[0].mxu0
        %v742 = vadd.f32 0.0, %v741
        %v743 = vpop.f32.mrb[0].mxu0
        %744 = vmatprep.mubr.f32.mxu0 0.0
        %745 = vmatmul.mubr.f32.gmra.mrb[0].mxu0 %v534
        %v746 = vpop.f32.mrb[0].mxu0
        %v747 = vadd.f32 0.0, %v746
        %v748 = vpop.f32.mrb[0].mxu0
        %749 = vmatprep.mubr.f32.mxu0 0.0
        %750 = vmatmul.mubr.f32.gmra.mrb[0].mxu0 %v536
        %v751 = vpop.f32.mrb[0].mxu0
        %v752 = vadd.f32 0.0, %v751
        %v753 = vpop.f32.mrb[0].mxu0
        %754 = vmatprep.mubr.f32.mxu0 0.0
        %755 = vmatmul.mubr.f32.gmra.mrb[0].mxu0 %v538
        %v756 = vpop.f32.mrb[0].mxu0
        %v757 = vadd.f32 0.0, %v756
        %v758 = vpop.f32.mrb[0].mxu0
        %759 = vmatprep.mubr.f32.mxu0 0.0
        %760 = vmatmul.mubr.f32.gmra.mrb[0].mxu0 %v540
        %v761 = vpop.f32.mrb[0].mxu0
        %v762 = vadd.f32 0.0, %v761
        %v763 = vpop.f32.mrb[0].mxu0
        %764 = vmatprep.mubr.f32.mxu0 0.0
        %765 = vmatmul.mubr.f32.gmra.mrb[0].mxu0 %v542
        %v766 = vpop.f32.mrb[0].mxu0
        %v767 = vadd.f32 0.0, %v766
        %v768 = vpop.f32.mrb[0].mxu0
        %769 = vmatprep.mubr.f32.mxu0 0.0
        %770 = vmatmul.mubr.f32.gmra.mrb[0].mxu0 %v544
        %v771 = vpop.f32.mrb[0].mxu0
        %v772 = vadd.f32 0.0, %v771
        %v773 = vpop.f32.mrb[0].mxu0
        %774 = vdwg.mxu0
        %v775 = vsel %vm481, %v331, 0
        %v777 = vsel %vm481, %v249, 0
        %v779 = vsel %vm481, %v332, 0
        %v781 = vsel %vm481, %v252, 0
        %v783 = vsel %vm481, %v333, 0
        %v785 = vsel %vm481, %v255, 0
        %v787 = vsel %vm481, %v334, 0
        %v789 = vsel %vm481, %v258, 0
        %v791 = vsel %vm481, %v335, 0
        %v793 = vsel %vm481, %v261, 0
        %v795 = vsel %vm481, %v336, 0
        %v797 = vsel %vm481, %v264, 0
        %v799 = vsel %vm481, %v337, 0
        %v801 = vsel %vm481, %v267, 0
        %v803 = vsel %vm481, %v338, 0
        %v805 = vsel %vm481, %v270, 0
        %v807 = vsel %vm481, %v339, 0
        %v809 = vsel %vm481, %v273, 0
        %v811 = vsel %vm481, %v340, 0
        %v813 = vsel %vm481, %v276, 0
        %v815 = vsel %vm481, %v341, 0
        %v817 = vsel %vm481, %v279, 0
        %v819 = vsel %vm481, %v342, 0
        %v821 = vsel %vm481, %v282, 0
        %v823 = vsel %vm481, %v343, 0
        %v825 = vsel %vm481, %v285, 0
        %v827 = vsel %vm481, %v344, 0
        %v829 = vsel %vm481, %v288, 0
        %v831 = vsel %vm481, %v345, 0
        %v833 = vsel %vm481, %v291, 0
        %v835 = vsel %vm481, %v346, 0
        %v837 = vsel %vm481, %v294, 0
        %v840 = vsel %vm546, %v365, 0
        %842 = vmatprep.subr.mxu0 0.0
        %843 = vmatpush1.msra.mxu0 %v840
        %844 = vmatprep.subr.mxu0 0.0
        %845 = vmatpush1.msra.mxu0 0.0
        %846 = vmatprep.subr.mxu0 0.0
        %847 = vmatpush1.msra.mxu0 0.0
        %848 = vmatprep.subr.mxu0 0.0
        %849 = vmatpush1.msra.mxu0 0.0
        %850 = vmatprep.subr.mxu0 0.0
        %851 = vmatpush1.msra.mxu0 0.0
        %852 = vmatprep.subr.mxu0 0.0
        %853 = vmatpush1.msra.mxu0 0.0
        %854 = vmatprep.subr.mxu0 0.0
        %855 = vmatpush1.msra.mxu0 0.0
        %856 = vmatprep.subr.mxu0 0.0
        %857 = vmatpush1.msra.mxu0 0.0
        %858 = vmatprep.subr.mxu0 0.0
        %859 = vmatpush1.msra.mxu0 0.0
        %860 = vmatprep.subr.mxu0 0.0
        %861 = vmatpush1.msra.mxu0 0.0
        %862 = vmatprep.subr.mxu0 0.0
        %863 = vmatpush1.msra.mxu0 0.0
        %864 = vmatprep.subr.mxu0 0.0
        %865 = vmatpush1.msra.mxu0 0.0
        %866 = vmatprep.subr.mxu0 0.0
        %867 = vmatpush1.msra.mxu0 0.0
        %868 = vmatprep.subr.mxu0 0.0
        %869 = vmatpush1.msra.mxu0 0.0
        %870 = vmatprep.subr.mxu0 0.0
        %871 = vmatpush1.msra.mxu0 0.0
        %872 = vmatprep.subr.mxu0 0.0
        %873 = vmatpush1.msra.mxu0 0.0
        %874 = vmatprep.subr.mxu0 0.0
        %875 = vmatpush1.msra.mxu0 0.0
        %876 = vmatprep.subr.mxu0 0.0
        %877 = vmatpush1.msra.mxu0 0.0
        %878 = vmatprep.subr.mxu0 0.0
        %879 = vmatpush1.msra.mxu0 0.0
        %880 = vmatprep.subr.mxu0 0.0
        %881 = vmatpush1.msra.mxu0 0.0
        %882 = vmatprep.subr.mxu0 0.0
        %883 = vmatpush1.msra.mxu0 0.0
        %884 = vmatprep.subr.mxu0 0.0
        %885 = vmatpush1.msra.mxu0 0.0
        %886 = vmatprep.subr.mxu0 0.0
        %887 = vmatpush1.msra.mxu0 0.0
        %888 = vmatprep.subr.mxu0 0.0
        %889 = vmatpush1.msra.mxu0 0.0
        %890 = vmatprep.subr.mxu0 0.0
        %891 = vmatpush1.msra.mxu0 0.0
        %892 = vmatprep.subr.mxu0 0.0
        %893 = vmatpush1.msra.mxu0 0.0
        %894 = vmatprep.subr.mxu0 0.0
        %895 = vmatpush1.msra.mxu0 0.0
        %896 = vmatprep.subr.mxu0 0.0
        %897 = vmatpush1.msra.mxu0 0.0
        %898 = vmatprep.subr.mxu0 0.0
        %899 = vmatpush1.msra.mxu0 0.0
        %900 = vmatprep.subr.mxu0 0.0
        %901 = vmatpush1.msra.mxu0 0.0
        %902 = vmatprep.subr.mxu0 0.0
        %903 = vmatpush1.msra.mxu0 0.0
        %904 = vmatprep.subr.mxu0 0.0
        %905 = vmatpush1.msra.mxu0 0.0
        %906 = vmatprep.mubr.f32.mxu0 0.0
        %907 = vmatmul.mubr.f32.gmra.mrb[0].mxu0 %v775
        %v908 = vpop.f32.mrb[0].mxu0
        %v909 = vadd.f32 %v617, %v908
        %v910 = vpop.f32.mrb[0].mxu0
        %911 = vmatprep.mubr.f32.mxu0 0.0
        %912 = vmatmul.mubr.f32.gmra.mrb[0].mxu0 %v777
        %v913 = vpop.f32.mrb[0].mxu0
        %v914 = vadd.f32 %v622, %v913
        %v915 = vpop.f32.mrb[0].mxu0
        %916 = vmatprep.mubr.f32.mxu0 0.0
        %917 = vmatmul.mubr.f32.gmra.mrb[0].mxu0 %v779
        %v918 = vpop.f32.mrb[0].mxu0
        %v919 = vadd.f32 %v627, %v918
        %v920 = vpop.f32.mrb[0].mxu0
        %921 = vmatprep.mubr.f32.mxu0 0.0
        %922 = vmatmul.mubr.f32.gmra.mrb[0].mxu0 %v781
        %v923 = vpop.f32.mrb[0].mxu0
        %v924 = vadd.f32 %v632, %v923
        %v925 = vpop.f32.mrb[0].mxu0
        %926 = vmatprep.mubr.f32.mxu0 0.0
        %927 = vmatmul.mubr.f32.gmra.mrb[0].mxu0 %v783
        %v928 = vpop.f32.mrb[0].mxu0
        %v929 = vadd.f32 %v637, %v928
        %v930 = vpop.f32.mrb[0].mxu0
        %931 = vmatprep.mubr.f32.mxu0 0.0
        %932 = vmatmul.mubr.f32.gmra.mrb[0].mxu0 %v785
        %v933 = vpop.f32.mrb[0].mxu0
        %v934 = vadd.f32 %v642, %v933
        %v935 = vpop.f32.mrb[0].mxu0
        %936 = vmatprep.mubr.f32.mxu0 0.0
        %937 = vmatmul.mubr.f32.gmra.mrb[0].mxu0 %v787
        %v938 = vpop.f32.mrb[0].mxu0
        %v939 = vadd.f32 %v647, %v938
        %v940 = vpop.f32.mrb[0].mxu0
        %941 = vmatprep.mubr.f32.mxu0 0.0
        %942 = vmatmul.mubr.f32.gmra.mrb[0].mxu0 %v789
        %v943 = vpop.f32.mrb[0].mxu0
        %v944 = vadd.f32 %v652, %v943
        %v945 = vpop.f32.mrb[0].mxu0
        %946 = vmatprep.mubr.f32.mxu0 0.0
        %947 = vmatmul.mubr.f32.gmra.mrb[0].mxu0 %v791
        %v948 = vpop.f32.mrb[0].mxu0
        %v949 = vadd.f32 %v657, %v948
        %v950 = vpop.f32.mrb[0].mxu0
        %951 = vmatprep.mubr.f32.mxu0 0.0
        %952 = vmatmul.mubr.f32.gmra.mrb[0].mxu0 %v793
        %v953 = vpop.f32.mrb[0].mxu0
        %v954 = vadd.f32 %v662, %v953
        %v955 = vpop.f32.mrb[0].mxu0
        %956 = vmatprep.mubr.f32.mxu0 0.0
        %957 = vmatmul.mubr.f32.gmra.mrb[0].mxu0 %v795
        %v958 = vpop.f32.mrb[0].mxu0
        %v959 = vadd.f32 %v667, %v958
        %v960 = vpop.f32.mrb[0].mxu0
        %961 = vmatprep.mubr.f32.mxu0 0.0
        %962 = vmatmul.mubr.f32.gmra.mrb[0].mxu0 %v797
        %v963 = vpop.f32.mrb[0].mxu0
        %v964 = vadd.f32 %v672, %v963
        %v965 = vpop.f32.mrb[0].mxu0
        %966 = vmatprep.mubr.f32.mxu0 0.0
        %967 = vmatmul.mubr.f32.gmra.mrb[0].mxu0 %v799
        %v968 = vpop.f32.mrb[0].mxu0
        %v969 = vadd.f32 %v677, %v968
        %v970 = vpop.f32.mrb[0].mxu0
        %971 = vmatprep.mubr.f32.mxu0 0.0
        %972 = vmatmul.mubr.f32.gmra.mrb[0].mxu0 %v801
        %v973 = vpop.f32.mrb[0].mxu0
        %v974 = vadd.f32 %v682, %v973
        %v975 = vpop.f32.mrb[0].mxu0
        %976 = vmatprep.mubr.f32.mxu0 0.0
        %977 = vmatmul.mubr.f32.gmra.mrb[0].mxu0 %v803
        %v978 = vpop.f32.mrb[0].mxu0
        %v979 = vadd.f32 %v687, %v978
        %v980 = vpop.f32.mrb[0].mxu0
        %981 = vmatprep.mubr.f32.mxu0 0.0
        %982 = vmatmul.mubr.f32.gmra.mrb[0].mxu0 %v805
        %v983 = vpop.f32.mrb[0].mxu0
        %v984 = vadd.f32 %v692, %v983
        %v985 = vpop.f32.mrb[0].mxu0
        %986 = vmatprep.mubr.f32.mxu0 0.0
        %987 = vmatmul.mubr.f32.gmra.mrb[0].mxu0 %v807
        %v988 = vpop.f32.mrb[0].mxu0
        %v989 = vadd.f32 %v697, %v988
        %v990 = vpop.f32.mrb[0].mxu0
        %991 = vmatprep.mubr.f32.mxu0 0.0
        %992 = vmatmul.mubr.f32.gmra.mrb[0].mxu0 %v809
        %v993 = vpop.f32.mrb[0].mxu0
        %v994 = vadd.f32 %v702, %v993
        %v995 = vpop.f32.mrb[0].mxu0
        %996 = vmatprep.mubr.f32.mxu0 0.0
        %997 = vmatmul.mubr.f32.gmra.mrb[0].mxu0 %v811
        %v998 = vpop.f32.mrb[0].mxu0
        %v999 = vadd.f32 %v707, %v998
        %v1000 = vpop.f32.mrb[0].mxu0
        %1001 = vmatprep.mubr.f32.mxu0 0.0
        %1002 = vmatmul.mubr.f32.gmra.mrb[0].mxu0 %v813
        %v1003 = vpop.f32.mrb[0].mxu0
        %v1004 = vadd.f32 %v712, %v1003
        %v1005 = vpop.f32.mrb[0].mxu0
        %1006 = vmatprep.mubr.f32.mxu0 0.0
        %1007 = vmatmul.mubr.f32.gmra.mrb[0].mxu0 %v815
        %v1008 = vpop.f32.mrb[0].mxu0
        %v1009 = vadd.f32 %v717, %v1008
        %v1010 = vpop.f32.mrb[0].mxu0
        %1011 = vmatprep.mubr.f32.mxu0 0.0
        %1012 = vmatmul.mubr.f32.gmra.mrb[0].mxu0 %v817
        %v1013 = vpop.f32.mrb[0].mxu0
        %v1014 = vadd.f32 %v722, %v1013
        %v1015 = vpop.f32.mrb[0].mxu0
        %1016 = vmatprep.mubr.f32.mxu0 0.0
        %1017 = vmatmul.mubr.f32.gmra.mrb[0].mxu0 %v819
        %v1018 = vpop.f32.mrb[0].mxu0
        %v1019 = vadd.f32 %v727, %v1018
        %v1020 = vpop.f32.mrb[0].mxu0
        %1021 = vmatprep.mubr.f32.mxu0 0.0
        %1022 = vmatmul.mubr.f32.gmra.mrb[0].mxu0 %v821
        %v1023 = vpop.f32.mrb[0].mxu0
        %v1024 = vadd.f32 %v732, %v1023
        %v1025 = vpop.f32.mrb[0].mxu0
        %1026 = vmatprep.mubr.f32.mxu0 0.0
        %1027 = vmatmul.mubr.f32.gmra.mrb[0].mxu0 %v823
        %v1028 = vpop.f32.mrb[0].mxu0
        %v1029 = vadd.f32 %v737, %v1028
        %v1030 = vpop.f32.mrb[0].mxu0
        %1031 = vmatprep.mubr.f32.mxu0 0.0
        %1032 = vmatmul.mubr.f32.gmra.mrb[0].mxu0 %v825
        %v1033 = vpop.f32.mrb[0].mxu0
        %v1034 = vadd.f32 %v742, %v1033
        %v1035 = vpop.f32.mrb[0].mxu0
        %1036 = vmatprep.mubr.f32.mxu0 0.0
        %1037 = vmatmul.mubr.f32.gmra.mrb[0].mxu0 %v827
        %v1038 = vpop.f32.mrb[0].mxu0
        %v1039 = vadd.f32 %v747, %v1038
        %v1040 = vpop.f32.mrb[0].mxu0
        %1041 = vmatprep.mubr.f32.mxu0 0.0
        %1042 = vmatmul.mubr.f32.gmra.mrb[0].mxu0 %v829
        %v1043 = vpop.f32.mrb[0].mxu0
        %v1044 = vadd.f32 %v752, %v1043
        %v1045 = vpop.f32.mrb[0].mxu0
        %1046 = vmatprep.mubr.f32.mxu0 0.0
        %1047 = vmatmul.mubr.f32.gmra.mrb[0].mxu0 %v831
        %v1048 = vpop.f32.mrb[0].mxu0
        %v1049 = vadd.f32 %v757, %v1048
        %v1050 = vpop.f32.mrb[0].mxu0
        %1051 = vmatprep.mubr.f32.mxu0 0.0
        %1052 = vmatmul.mubr.f32.gmra.mrb[0].mxu0 %v833
        %v1053 = vpop.f32.mrb[0].mxu0
        %v1054 = vadd.f32 %v762, %v1053
        %v1055 = vpop.f32.mrb[0].mxu0
        %1056 = vmatprep.mubr.f32.mxu0 0.0
        %1057 = vmatmul.mubr.f32.gmra.mrb[0].mxu0 %v835
        %v1058 = vpop.f32.mrb[0].mxu0
        %v1059 = vadd.f32 %v767, %v1058
        %v1060 = vpop.f32.mrb[0].mxu0
        %1061 = vmatprep.mubr.f32.mxu0 0.0
        %1062 = vmatmul.mubr.f32.gmra.mrb[0].mxu0 %v837
        %v1063 = vpop.f32.mrb[0].mxu0
        %v1064 = vadd.f32 %v772, %v1063
        %v1065 = vpop.f32.mrb[0].mxu0
        %1066 = vdwg.mxu0
        %vm1067 = vcmask 1045504
        %v1068 = vrot.slane %v331, 2
        %v1069 = vrot.slane %v249, 2
        %v1070 = vsel %vm1067, %v1068, %v1069
        %v1071 = vrot.slane %v348, 2
        %v1072 = vsel %vm1067, %v1069, %v1071
        %v1073 = vrot.slane %v332, 2
        %v1074 = vrot.slane %v252, 2
        %v1075 = vsel %vm1067, %v1073, %v1074
        %v1076 = vrot.slane %v349, 2
        %v1077 = vsel %vm1067, %v1074, %v1076
        %v1078 = vrot.slane %v333, 2
        %v1079 = vrot.slane %v255, 2
        %v1080 = vsel %vm1067, %v1078, %v1079
        %v1081 = vrot.slane %v350, 2
        %v1082 = vsel %vm1067, %v1079, %v1081
        %v1083 = vrot.slane %v334, 2
        %v1084 = vrot.slane %v258, 2
        %v1085 = vsel %vm1067, %v1083, %v1084
        %v1086 = vrot.slane %v351, 2
        %v1087 = vsel %vm1067, %v1084, %v1086
        %v1088 = vrot.slane %v335, 2
        %v1089 = vrot.slane %v261, 2
        %v1090 = vsel %vm1067, %v1088, %v1089
        %v1091 = vrot.slane %v352, 2
        %v1092 = vsel %vm1067, %v1089, %v1091
        %v1093 = vrot.slane %v336, 2
        %v1094 = vrot.slane %v264, 2
        %v1095 = vsel %vm1067, %v1093, %v1094
        %v1096 = vrot.slane %v353, 2
        %v1097 = vsel %vm1067, %v1094, %v1096
        %v1098 = vrot.slane %v337, 2
        %v1099 = vrot.slane %v267, 2
        %v1100 = vsel %vm1067, %v1098, %v1099
        %v1101 = vrot.slane %v354, 2
        %v1102 = vsel %vm1067, %v1099, %v1101
        %v1103 = vrot.slane %v338, 2
        %v1104 = vrot.slane %v270, 2
        %v1105 = vsel %vm1067, %v1103, %v1104
        %v1106 = vrot.slane %v355, 2
        %v1107 = vsel %vm1067, %v1104, %v1106
        %v1108 = vrot.slane %v339, 2
        %v1109 = vrot.slane %v273, 2
        %v1110 = vsel %vm1067, %v1108, %v1109
        %v1111 = vrot.slane %v356, 2
        %v1112 = vsel %vm1067, %v1109, %v1111
        %v1113 = vrot.slane %v340, 2
        %v1114 = vrot.slane %v276, 2
        %v1115 = vsel %vm1067, %v1113, %v1114
        %v1116 = vrot.slane %v357, 2
        %v1117 = vsel %vm1067, %v1114, %v1116
        %v1118 = vrot.slane %v341, 2
        %v1119 = vrot.slane %v279, 2
        %v1120 = vsel %vm1067, %v1118, %v1119
        %v1121 = vrot.slane %v358, 2
        %v1122 = vsel %vm1067, %v1119, %v1121
        %v1123 = vrot.slane %v342, 2
        %v1124 = vrot.slane %v282, 2
        %v1125 = vsel %vm1067, %v1123, %v1124
        %v1126 = vrot.slane %v359, 2
        %v1127 = vsel %vm1067, %v1124, %v1126
        %v1128 = vrot.slane %v343, 2
        %v1129 = vrot.slane %v285, 2
        %v1130 = vsel %vm1067, %v1128, %v1129
        %v1131 = vrot.slane %v360, 2
        %v1132 = vsel %vm1067, %v1129, %v1131
        %v1133 = vrot.slane %v344, 2
        %v1134 = vrot.slane %v288, 2
        %v1135 = vsel %vm1067, %v1133, %v1134
        %v1136 = vrot.slane %v361, 2
        %v1137 = vsel %vm1067, %v1134, %v1136
        %v1138 = vrot.slane %v345, 2
        %v1139 = vrot.slane %v291, 2
        %v1140 = vsel %vm1067, %v1138, %v1139
        %v1141 = vrot.slane %v362, 2
        %v1142 = vsel %vm1067, %v1139, %v1141
        %v1143 = vrot.slane %v346, 2
        %v1144 = vrot.slane %v294, 2
        %v1145 = vsel %vm1067, %v1143, %v1144
        %v1146 = vrot.slane %v363, 2
        %v1147 = vsel %vm1067, %v1144, %v1146
        %s1148 = scalar_lea.vmem %s1, 8
        %v1149 = vld [vmem:[%s1148] sm:$0xf]
        %v1150 = vsel %vm481, %v1070, 0
        %v1152 = vsel %vm481, %v1072, 0
        %v1154 = vsel %vm481, %v1075, 0
        %v1156 = vsel %vm481, %v1077, 0
        %v1158 = vsel %vm481, %v1080, 0
        %v1160 = vsel %vm481, %v1082, 0
        %v1162 = vsel %vm481, %v1085, 0
        %v1164 = vsel %vm481, %v1087, 0
        %v1166 = vsel %vm481, %v1090, 0
        %v1168 = vsel %vm481, %v1092, 0
        %v1170 = vsel %vm481, %v1095, 0
        %v1172 = vsel %vm481, %v1097, 0
        %v1174 = vsel %vm481, %v1100, 0
        %v1176 = vsel %vm481, %v1102, 0
        %v1178 = vsel %vm481, %v1105, 0
        %v1180 = vsel %vm481, %v1107, 0
        %v1182 = vsel %vm481, %v1110, 0
        %v1184 = vsel %vm481, %v1112, 0
        %v1186 = vsel %vm481, %v1115, 0
        %v1188 = vsel %vm481, %v1117, 0
        %v1190 = vsel %vm481, %v1120, 0
        %v1192 = vsel %vm481, %v1122, 0
        %v1194 = vsel %vm481, %v1125, 0
        %v1196 = vsel %vm481, %v1127, 0
        %v1198 = vsel %vm481, %v1130, 0
        %v1200 = vsel %vm481, %v1132, 0
        %v1202 = vsel %vm481, %v1135, 0
        %v1204 = vsel %vm481, %v1137, 0
        %v1206 = vsel %vm481, %v1140, 0
        %v1208 = vsel %vm481, %v1142, 0
        %v1210 = vsel %vm481, %v1145, 0
        %v1212 = vsel %vm481, %v1147, 0
        %v1215 = vsel %vm546, %v1149, 0
        %1217 = vmatprep.subr.mxu0 0.0
        %1218 = vmatpush1.msra.mxu0 %v1215
        %1219 = vmatprep.subr.mxu0 0.0
        %1220 = vmatpush1.msra.mxu0 0.0
        %1221 = vmatprep.subr.mxu0 0.0
        %1222 = vmatpush1.msra.mxu0 0.0
        %1223 = vmatprep.subr.mxu0 0.0
        %1224 = vmatpush1.msra.mxu0 0.0
        %1225 = vmatprep.subr.mxu0 0.0
        %1226 = vmatpush1.msra.mxu0 0.0
        %1227 = vmatprep.subr.mxu0 0.0
        %1228 = vmatpush1.msra.mxu0 0.0
        %1229 = vmatprep.subr.mxu0 0.0
        %1230 = vmatpush1.msra.mxu0 0.0
        %1231 = vmatprep.subr.mxu0 0.0
        %1232 = vmatpush1.msra.mxu0 0.0
        %1233 = vmatprep.subr.mxu0 0.0
        %1234 = vmatpush1.msra.mxu0 0.0
        %1235 = vmatprep.subr.mxu0 0.0
        %1236 = vmatpush1.msra.mxu0 0.0
        %1237 = vmatprep.subr.mxu0 0.0
        %1238 = vmatpush1.msra.mxu0 0.0
        %1239 = vmatprep.subr.mxu0 0.0
        %1240 = vmatpush1.msra.mxu0 0.0
        %1241 = vmatprep.subr.mxu0 0.0
        %1242 = vmatpush1.msra.mxu0 0.0
        %1243 = vmatprep.subr.mxu0 0.0
        %1244 = vmatpush1.msra.mxu0 0.0
        %1245 = vmatprep.subr.mxu0 0.0
        %1246 = vmatpush1.msra.mxu0 0.0
        %1247 = vmatprep.subr.mxu0 0.0
        %1248 = vmatpush1.msra.mxu0 0.0
        %1249 = vmatprep.subr.mxu0 0.0
        %1250 = vmatpush1.msra.mxu0 0.0
        %1251 = vmatprep.subr.mxu0 0.0
        %1252 = vmatpush1.msra.mxu0 0.0
        %1253 = vmatprep.subr.mxu0 0.0
        %1254 = vmatpush1.msra.mxu0 0.0
        %1255 = vmatprep.subr.mxu0 0.0
        %1256 = vmatpush1.msra.mxu0 0.0
        %1257 = vmatprep.subr.mxu0 0.0
        %1258 = vmatpush1.msra.mxu0 0.0
        %1259 = vmatprep.subr.mxu0 0.0
        %1260 = vmatpush1.msra.mxu0 0.0
        %1261 = vmatprep.subr.mxu0 0.0
        %1262 = vmatpush1.msra.mxu0 0.0
        %1263 = vmatprep.subr.mxu0 0.0
        %1264 = vmatpush1.msra.mxu0 0.0
        %1265 = vmatprep.subr.mxu0 0.0
        %1266 = vmatpush1.msra.mxu0 0.0
        %1267 = vmatprep.subr.mxu0 0.0
        %1268 = vmatpush1.msra.mxu0 0.0
        %1269 = vmatprep.subr.mxu0 0.0
        %1270 = vmatpush1.msra.mxu0 0.0
        %1271 = vmatprep.subr.mxu0 0.0
        %1272 = vmatpush1.msra.mxu0 0.0
        %1273 = vmatprep.subr.mxu0 0.0
        %1274 = vmatpush1.msra.mxu0 0.0
        %1275 = vmatprep.subr.mxu0 0.0
        %1276 = vmatpush1.msra.mxu0 0.0
        %1277 = vmatprep.subr.mxu0 0.0
        %1278 = vmatpush1.msra.mxu0 0.0
        %1279 = vmatprep.subr.mxu0 0.0
        %1280 = vmatpush1.msra.mxu0 0.0
        %1281 = vmatprep.mubr.f32.mxu0 0.0
        %1282 = vmatmul.mubr.f32.gmra.mrb[0].mxu0 %v1150
        %v1283 = vpop.f32.mrb[0].mxu0
        %v1284 = vadd.f32 0.0, %v1283
        %v1285 = vpop.f32.mrb[0].mxu0
        %1286 = vmatprep.mubr.f32.mxu0 0.0
        %1287 = vmatmul.mubr.f32.gmra.mrb[0].mxu0 %v1152
        %v1288 = vpop.f32.mrb[0].mxu0
        %v1289 = vadd.f32 0.0, %v1288
        %v1290 = vpop.f32.mrb[0].mxu0
        %1291 = vmatprep.mubr.f32.mxu0 0.0
        %1292 = vmatmul.mubr.f32.gmra.mrb[0].mxu0 %v1154
        %v1293 = vpop.f32.mrb[0].mxu0
        %v1294 = vadd.f32 0.0, %v1293
        %v1295 = vpop.f32.mrb[0].mxu0
        %1296 = vmatprep.mubr.f32.mxu0 0.0
        %1297 = vmatmul.mubr.f32.gmra.mrb[0].mxu0 %v1156
        %v1298 = vpop.f32.mrb[0].mxu0
        %v1299 = vadd.f32 0.0, %v1298
        %v1300 = vpop.f32.mrb[0].mxu0
        %1301 = vmatprep.mubr.f32.mxu0 0.0
        %1302 = vmatmul.mubr.f32.gmra.mrb[0].mxu0 %v1158
        %v1303 = vpop.f32.mrb[0].mxu0
        %v1304 = vadd.f32 0.0, %v1303
        %v1305 = vpop.f32.mrb[0].mxu0
        %1306 = vmatprep.mubr.f32.mxu0 0.0
        %1307 = vmatmul.mubr.f32.gmra.mrb[0].mxu0 %v1160
        %v1308 = vpop.f32.mrb[0].mxu0
        %v1309 = vadd.f32 0.0, %v1308
        %v1310 = vpop.f32.mrb[0].mxu0
        %1311 = vmatprep.mubr.f32.mxu0 0.0
        %1312 = vmatmul.mubr.f32.gmra.mrb[0].mxu0 %v1162
        %v1313 = vpop.f32.mrb[0].mxu0
        %v1314 = vadd.f32 0.0, %v1313
        %v1315 = vpop.f32.mrb[0].mxu0
        %1316 = vmatprep.mubr.f32.mxu0 0.0
        %1317 = vmatmul.mubr.f32.gmra.mrb[0].mxu0 %v1164
        %v1318 = vpop.f32.mrb[0].mxu0
        %v1319 = vadd.f32 0.0, %v1318
        %v1320 = vpop.f32.mrb[0].mxu0
        %1321 = vmatprep.mubr.f32.mxu0 0.0
        %1322 = vmatmul.mubr.f32.gmra.mrb[0].mxu0 %v1166
        %v1323 = vpop.f32.mrb[0].mxu0
        %v1324 = vadd.f32 0.0, %v1323
        %v1325 = vpop.f32.mrb[0].mxu0
        %1326 = vmatprep.mubr.f32.mxu0 0.0
        %1327 = vmatmul.mubr.f32.gmra.mrb[0].mxu0 %v1168
        %v1328 = vpop.f32.mrb[0].mxu0
        %v1329 = vadd.f32 0.0, %v1328
        %v1330 = vpop.f32.mrb[0].mxu0
        %1331 = vmatprep.mubr.f32.mxu0 0.0
        %1332 = vmatmul.mubr.f32.gmra.mrb[0].mxu0 %v1170
        %v1333 = vpop.f32.mrb[0].mxu0
        %v1334 = vadd.f32 0.0, %v1333
        %v1335 = vpop.f32.mrb[0].mxu0
        %1336 = vmatprep.mubr.f32.mxu0 0.0
        %1337 = vmatmul.mubr.f32.gmra.mrb[0].mxu0 %v1172
        %v1338 = vpop.f32.mrb[0].mxu0
        %v1339 = vadd.f32 0.0, %v1338
        %v1340 = vpop.f32.mrb[0].mxu0
        %1341 = vmatprep.mubr.f32.mxu0 0.0
        %1342 = vmatmul.mubr.f32.gmra.mrb[0].mxu0 %v1174
        %v1343 = vpop.f32.mrb[0].mxu0
        %v1344 = vadd.f32 0.0, %v1343
        %v1345 = vpop.f32.mrb[0].mxu0
        %1346 = vmatprep.mubr.f32.mxu0 0.0
        %1347 = vmatmul.mubr.f32.gmra.mrb[0].mxu0 %v1176
        %v1348 = vpop.f32.mrb[0].mxu0
        %v1349 = vadd.f32 0.0, %v1348
        %v1350 = vpop.f32.mrb[0].mxu0
        %1351 = vmatprep.mubr.f32.mxu0 0.0
        %1352 = vmatmul.mubr.f32.gmra.mrb[0].mxu0 %v1178
        %v1353 = vpop.f32.mrb[0].mxu0
        %v1354 = vadd.f32 0.0, %v1353
        %v1355 = vpop.f32.mrb[0].mxu0
        %1356 = vmatprep.mubr.f32.mxu0 0.0
        %1357 = vmatmul.mubr.f32.gmra.mrb[0].mxu0 %v1180
        %v1358 = vpop.f32.mrb[0].mxu0
        %v1359 = vadd.f32 0.0, %v1358
        %v1360 = vpop.f32.mrb[0].mxu0
        %1361 = vmatprep.mubr.f32.mxu0 0.0
        %1362 = vmatmul.mubr.f32.gmra.mrb[0].mxu0 %v1182
        %v1363 = vpop.f32.mrb[0].mxu0
        %v1364 = vadd.f32 0.0, %v1363
        %v1365 = vpop.f32.mrb[0].mxu0
        %1366 = vmatprep.mubr.f32.mxu0 0.0
        %1367 = vmatmul.mubr.f32.gmra.mrb[0].mxu0 %v1184
        %v1368 = vpop.f32.mrb[0].mxu0
        %v1369 = vadd.f32 0.0, %v1368
        %v1370 = vpop.f32.mrb[0].mxu0
        %1371 = vmatprep.mubr.f32.mxu0 0.0
        %1372 = vmatmul.mubr.f32.gmra.mrb[0].mxu0 %v1186
        %v1373 = vpop.f32.mrb[0].mxu0
        %v1374 = vadd.f32 0.0, %v1373
        %v1375 = vpop.f32.mrb[0].mxu0
        %1376 = vmatprep.mubr.f32.mxu0 0.0
        %1377 = vmatmul.mubr.f32.gmra.mrb[0].mxu0 %v1188
        %v1378 = vpop.f32.mrb[0].mxu0
        %v1379 = vadd.f32 0.0, %v1378
        %v1380 = vpop.f32.mrb[0].mxu0
        %1381 = vmatprep.mubr.f32.mxu0 0.0
        %1382 = vmatmul.mubr.f32.gmra.mrb[0].mxu0 %v1190
        %v1383 = vpop.f32.mrb[0].mxu0
        %v1384 = vadd.f32 0.0, %v1383
        %v1385 = vpop.f32.mrb[0].mxu0
        %1386 = vmatprep.mubr.f32.mxu0 0.0
        %1387 = vmatmul.mubr.f32.gmra.mrb[0].mxu0 %v1192
        %v1388 = vpop.f32.mrb[0].mxu0
        %v1389 = vadd.f32 0.0, %v1388
        %v1390 = vpop.f32.mrb[0].mxu0
        %1391 = vmatprep.mubr.f32.mxu0 0.0
        %1392 = vmatmul.mubr.f32.gmra.mrb[0].mxu0 %v1194
        %v1393 = vpop.f32.mrb[0].mxu0
        %v1394 = vadd.f32 0.0, %v1393
        %v1395 = vpop.f32.mrb[0].mxu0
        %1396 = vmatprep.mubr.f32.mxu0 0.0
        %1397 = vmatmul.mubr.f32.gmra.mrb[0].mxu0 %v1196
        %v1398 = vpop.f32.mrb[0].mxu0
        %v1399 = vadd.f32 0.0, %v1398
        %v1400 = vpop.f32.mrb[0].mxu0
        %1401 = vmatprep.mubr.f32.mxu0 0.0
        %1402 = vmatmul.mubr.f32.gmra.mrb[0].mxu0 %v1198
        %v1403 = vpop.f32.mrb[0].mxu0
        %v1404 = vadd.f32 0.0, %v1403
        %v1405 = vpop.f32.mrb[0].mxu0
        %1406 = vmatprep.mubr.f32.mxu0 0.0
        %1407 = vmatmul.mubr.f32.gmra.mrb[0].mxu0 %v1200
        %v1408 = vpop.f32.mrb[0].mxu0
        %v1409 = vadd.f32 0.0, %v1408
        %v1410 = vpop.f32.mrb[0].mxu0
        %1411 = vmatprep.mubr.f32.mxu0 0.0
        %1412 = vmatmul.mubr.f32.gmra.mrb[0].mxu0 %v1202
        %v1413 = vpop.f32.mrb[0].mxu0
        %v1414 = vadd.f32 0.0, %v1413
        %v1415 = vpop.f32.mrb[0].mxu0
        %1416 = vmatprep.mubr.f32.mxu0 0.0
        %1417 = vmatmul.mubr.f32.gmra.mrb[0].mxu0 %v1204
        %v1418 = vpop.f32.mrb[0].mxu0
        %v1419 = vadd.f32 0.0, %v1418
        %v1420 = vpop.f32.mrb[0].mxu0
        %1421 = vmatprep.mubr.f32.mxu0 0.0
        %1422 = vmatmul.mubr.f32.gmra.mrb[0].mxu0 %v1206
        %v1423 = vpop.f32.mrb[0].mxu0
        %v1424 = vadd.f32 0.0, %v1423
        %v1425 = vpop.f32.mrb[0].mxu0
        %1426 = vmatprep.mubr.f32.mxu0 0.0
        %1427 = vmatmul.mubr.f32.gmra.mrb[0].mxu0 %v1208
        %v1428 = vpop.f32.mrb[0].mxu0
        %v1429 = vadd.f32 0.0, %v1428
        %v1430 = vpop.f32.mrb[0].mxu0
        %1431 = vmatprep.mubr.f32.mxu0 0.0
        %1432 = vmatmul.mubr.f32.gmra.mrb[0].mxu0 %v1210
        %v1433 = vpop.f32.mrb[0].mxu0
        %v1434 = vadd.f32 0.0, %v1433
        %v1435 = vpop.f32.mrb[0].mxu0
        %1436 = vmatprep.mubr.f32.mxu0 0.0
        %1437 = vmatmul.mubr.f32.gmra.mrb[0].mxu0 %v1212
        %v1438 = vpop.f32.mrb[0].mxu0
        %v1439 = vadd.f32 0.0, %v1438
        %v1440 = vpop.f32.mrb[0].mxu0
        %1441 = vdwg.mxu0
        %v1442 = vadd.f32 %v909, %v1284
        %v1443 = vadd.f32 %v914, %v1289
        %v1444 = vadd.f32 %v919, %v1294
        %v1445 = vadd.f32 %v924, %v1299
        %v1446 = vadd.f32 %v929, %v1304
        %v1447 = vadd.f32 %v934, %v1309
        %v1448 = vadd.f32 %v939, %v1314
        %v1449 = vadd.f32 %v944, %v1319
        %v1450 = vadd.f32 %v949, %v1324
        %v1451 = vadd.f32 %v954, %v1329
        %v1452 = vadd.f32 %v959, %v1334
        %v1453 = vadd.f32 %v964, %v1339
        %v1454 = vadd.f32 %v969, %v1344
        %v1455 = vadd.f32 %v974, %v1349
        %v1456 = vadd.f32 %v979, %v1354
        %v1457 = vadd.f32 %v984, %v1359
        %v1458 = vadd.f32 %v989, %v1364
        %v1459 = vadd.f32 %v994, %v1369
        %v1460 = vadd.f32 %v999, %v1374
        %v1461 = vadd.f32 %v1004, %v1379
        %v1462 = vadd.f32 %v1009, %v1384
        %v1463 = vadd.f32 %v1014, %v1389
        %v1464 = vadd.f32 %v1019, %v1394
        %v1465 = vadd.f32 %v1024, %v1399
        %v1466 = vadd.f32 %v1029, %v1404
        %v1467 = vadd.f32 %v1034, %v1409
        %v1468 = vadd.f32 %v1039, %v1414
        %v1469 = vadd.f32 %v1044, %v1419
        %v1470 = vadd.f32 %v1049, %v1424
        %v1471 = vadd.f32 %v1054, %v1429
        %v1472 = vadd.f32 %v1059, %v1434
        %v1473 = vadd.f32 %v1064, %v1439
        %s1474 = scalar_lea.vmem %s1, 12
        %v1475 = vld [vmem:[%s1474] sm:$0xf]
        %v1477 = vsel %vm481, %v347, 0
        %v1479 = vsel %vm481, %v297, 0
        %v1482 = vsel %vm546, %v1475, 0
        %1484 = vmatprep.subr.mxu0 0.0
        %1485 = vmatpush1.msra.mxu0 %v1482
        %1486 = vmatprep.subr.mxu0 0.0
        %1487 = vmatpush1.msra.mxu0 0.0
        %1488 = vmatprep.subr.mxu0 0.0
        %1489 = vmatpush1.msra.mxu0 0.0
        %1490 = vmatprep.subr.mxu0 0.0
        %1491 = vmatpush1.msra.mxu0 0.0
        %1492 = vmatprep.subr.mxu0 0.0
        %1493 = vmatpush1.msra.mxu0 0.0
        %1494 = vmatprep.subr.mxu0 0.0
        %1495 = vmatpush1.msra.mxu0 0.0
        %1496 = vmatprep.subr.mxu0 0.0
        %1497 = vmatpush1.msra.mxu0 0.0
        %1498 = vmatprep.subr.mxu0 0.0
        %1499 = vmatpush1.msra.mxu0 0.0
        %1500 = vmatprep.subr.mxu0 0.0
        %1501 = vmatpush1.msra.mxu0 0.0
        %1502 = vmatprep.subr.mxu0 0.0
        %1503 = vmatpush1.msra.mxu0 0.0
        %1504 = vmatprep.subr.mxu0 0.0
        %1505 = vmatpush1.msra.mxu0 0.0
        %1506 = vmatprep.subr.mxu0 0.0
        %1507 = vmatpush1.msra.mxu0 0.0
        %1508 = vmatprep.subr.mxu0 0.0
        %1509 = vmatpush1.msra.mxu0 0.0
        %1510 = vmatprep.subr.mxu0 0.0
        %1511 = vmatpush1.msra.mxu0 0.0
        %1512 = vmatprep.subr.mxu0 0.0
        %1513 = vmatpush1.msra.mxu0 0.0
        %1514 = vmatprep.subr.mxu0 0.0
        %1515 = vmatpush1.msra.mxu0 0.0
        %1516 = vmatprep.subr.mxu0 0.0
        %1517 = vmatpush1.msra.mxu0 0.0
        %1518 = vmatprep.subr.mxu0 0.0
        %1519 = vmatpush1.msra.mxu0 0.0
        %1520 = vmatprep.subr.mxu0 0.0
        %1521 = vmatpush1.msra.mxu0 0.0
        %1522 = vmatprep.subr.mxu0 0.0
        %1523 = vmatpush1.msra.mxu0 0.0
        %1524 = vmatprep.subr.mxu0 0.0
        %1525 = vmatpush1.msra.mxu0 0.0
        %1526 = vmatprep.subr.mxu0 0.0
        %1527 = vmatpush1.msra.mxu0 0.0
        %1528 = vmatprep.subr.mxu0 0.0
        %1529 = vmatpush1.msra.mxu0 0.0
        %1530 = vmatprep.subr.mxu0 0.0
        %1531 = vmatpush1.msra.mxu0 0.0
        %1532 = vmatprep.subr.mxu0 0.0
        %1533 = vmatpush1.msra.mxu0 0.0
        %1534 = vmatprep.subr.mxu0 0.0
        %1535 = vmatpush1.msra.mxu0 0.0
        %1536 = vmatprep.subr.mxu0 0.0
        %1537 = vmatpush1.msra.mxu0 0.0
        %1538 = vmatprep.subr.mxu0 0.0
        %1539 = vmatpush1.msra.mxu0 0.0
        %1540 = vmatprep.subr.mxu0 0.0
        %1541 = vmatpush1.msra.mxu0 0.0
        %1542 = vmatprep.subr.mxu0 0.0
        %1543 = vmatpush1.msra.mxu0 0.0
        %1544 = vmatprep.subr.mxu0 0.0
        %1545 = vmatpush1.msra.mxu0 0.0
        %1546 = vmatprep.subr.mxu0 0.0
        %1547 = vmatpush1.msra.mxu0 0.0
        %1548 = vmatprep.mubr.f32.mxu0 0.0
        %1549 = vmatmul.mubr.f32.gmra.mrb[0].mxu0 %v779
        %v1550 = vpop.f32.mrb[0].mxu0
        %v1551 = vadd.f32 0.0, %v1550
        %v1552 = vpop.f32.mrb[0].mxu0
        %1553 = vmatprep.mubr.f32.mxu0 0.0
        %1554 = vmatmul.mubr.f32.gmra.mrb[0].mxu0 %v781
        %v1555 = vpop.f32.mrb[0].mxu0
        %v1556 = vadd.f32 0.0, %v1555
        %v1557 = vpop.f32.mrb[0].mxu0
        %1558 = vmatprep.mubr.f32.mxu0 0.0
        %1559 = vmatmul.mubr.f32.gmra.mrb[0].mxu0 %v783
        %v1560 = vpop.f32.mrb[0].mxu0
        %v1561 = vadd.f32 0.0, %v1560
        %v1562 = vpop.f32.mrb[0].mxu0
        %1563 = vmatprep.mubr.f32.mxu0 0.0
        %1564 = vmatmul.mubr.f32.gmra.mrb[0].mxu0 %v785
        %v1565 = vpop.f32.mrb[0].mxu0
        %v1566 = vadd.f32 0.0, %v1565
        %v1567 = vpop.f32.mrb[0].mxu0
        %1568 = vmatprep.mubr.f32.mxu0 0.0
        %1569 = vmatmul.mubr.f32.gmra.mrb[0].mxu0 %v787
        %v1570 = vpop.f32.mrb[0].mxu0
        %v1571 = vadd.f32 0.0, %v1570
        %v1572 = vpop.f32.mrb[0].mxu0
        %1573 = vmatprep.mubr.f32.mxu0 0.0
        %1574 = vmatmul.mubr.f32.gmra.mrb[0].mxu0 %v789
        %v1575 = vpop.f32.mrb[0].mxu0
        %v1576 = vadd.f32 0.0, %v1575
        %v1577 = vpop.f32.mrb[0].mxu0
        %1578 = vmatprep.mubr.f32.mxu0 0.0
        %1579 = vmatmul.mubr.f32.gmra.mrb[0].mxu0 %v791
        %v1580 = vpop.f32.mrb[0].mxu0
        %v1581 = vadd.f32 0.0, %v1580
        %v1582 = vpop.f32.mrb[0].mxu0
        %1583 = vmatprep.mubr.f32.mxu0 0.0
        %1584 = vmatmul.mubr.f32.gmra.mrb[0].mxu0 %v793
        %v1585 = vpop.f32.mrb[0].mxu0
        %v1586 = vadd.f32 0.0, %v1585
        %v1587 = vpop.f32.mrb[0].mxu0
        %1588 = vmatprep.mubr.f32.mxu0 0.0
        %1589 = vmatmul.mubr.f32.gmra.mrb[0].mxu0 %v795
        %v1590 = vpop.f32.mrb[0].mxu0
        %v1591 = vadd.f32 0.0, %v1590
        %v1592 = vpop.f32.mrb[0].mxu0
        %1593 = vmatprep.mubr.f32.mxu0 0.0
        %1594 = vmatmul.mubr.f32.gmra.mrb[0].mxu0 %v797
        %v1595 = vpop.f32.mrb[0].mxu0
        %v1596 = vadd.f32 0.0, %v1595
        %v1597 = vpop.f32.mrb[0].mxu0
        %1598 = vmatprep.mubr.f32.mxu0 0.0
        %1599 = vmatmul.mubr.f32.gmra.mrb[0].mxu0 %v799
        %v1600 = vpop.f32.mrb[0].mxu0
        %v1601 = vadd.f32 0.0, %v1600
        %v1602 = vpop.f32.mrb[0].mxu0
        %1603 = vmatprep.mubr.f32.mxu0 0.0
        %1604 = vmatmul.mubr.f32.gmra.mrb[0].mxu0 %v801
        %v1605 = vpop.f32.mrb[0].mxu0
        %v1606 = vadd.f32 0.0, %v1605
        %v1607 = vpop.f32.mrb[0].mxu0
        %1608 = vmatprep.mubr.f32.mxu0 0.0
        %1609 = vmatmul.mubr.f32.gmra.mrb[0].mxu0 %v803
        %v1610 = vpop.f32.mrb[0].mxu0
        %v1611 = vadd.f32 0.0, %v1610
        %v1612 = vpop.f32.mrb[0].mxu0
        %1613 = vmatprep.mubr.f32.mxu0 0.0
        %1614 = vmatmul.mubr.f32.gmra.mrb[0].mxu0 %v805
        %v1615 = vpop.f32.mrb[0].mxu0
        %v1616 = vadd.f32 0.0, %v1615
        %v1617 = vpop.f32.mrb[0].mxu0
        %1618 = vmatprep.mubr.f32.mxu0 0.0
        %1619 = vmatmul.mubr.f32.gmra.mrb[0].mxu0 %v807
        %v1620 = vpop.f32.mrb[0].mxu0
        %v1621 = vadd.f32 0.0, %v1620
        %v1622 = vpop.f32.mrb[0].mxu0
        %1623 = vmatprep.mubr.f32.mxu0 0.0
        %1624 = vmatmul.mubr.f32.gmra.mrb[0].mxu0 %v809
        %v1625 = vpop.f32.mrb[0].mxu0
        %v1626 = vadd.f32 0.0, %v1625
        %v1627 = vpop.f32.mrb[0].mxu0
        %1628 = vmatprep.mubr.f32.mxu0 0.0
        %1629 = vmatmul.mubr.f32.gmra.mrb[0].mxu0 %v811
        %v1630 = vpop.f32.mrb[0].mxu0
        %v1631 = vadd.f32 0.0, %v1630
        %v1632 = vpop.f32.mrb[0].mxu0
        %1633 = vmatprep.mubr.f32.mxu0 0.0
        %1634 = vmatmul.mubr.f32.gmra.mrb[0].mxu0 %v813
        %v1635 = vpop.f32.mrb[0].mxu0
        %v1636 = vadd.f32 0.0, %v1635
        %v1637 = vpop.f32.mrb[0].mxu0
        %1638 = vmatprep.mubr.f32.mxu0 0.0
        %1639 = vmatmul.mubr.f32.gmra.mrb[0].mxu0 %v815
        %v1640 = vpop.f32.mrb[0].mxu0
        %v1641 = vadd.f32 0.0, %v1640
        %v1642 = vpop.f32.mrb[0].mxu0
        %1643 = vmatprep.mubr.f32.mxu0 0.0
        %1644 = vmatmul.mubr.f32.gmra.mrb[0].mxu0 %v817
        %v1645 = vpop.f32.mrb[0].mxu0
        %v1646 = vadd.f32 0.0, %v1645
        %v1647 = vpop.f32.mrb[0].mxu0
        %1648 = vmatprep.mubr.f32.mxu0 0.0
        %1649 = vmatmul.mubr.f32.gmra.mrb[0].mxu0 %v819
        %v1650 = vpop.f32.mrb[0].mxu0
        %v1651 = vadd.f32 0.0, %v1650
        %v1652 = vpop.f32.mrb[0].mxu0
        %1653 = vmatprep.mubr.f32.mxu0 0.0
        %1654 = vmatmul.mubr.f32.gmra.mrb[0].mxu0 %v821
        %v1655 = vpop.f32.mrb[0].mxu0
        %v1656 = vadd.f32 0.0, %v1655
        %v1657 = vpop.f32.mrb[0].mxu0
        %1658 = vmatprep.mubr.f32.mxu0 0.0
        %1659 = vmatmul.mubr.f32.gmra.mrb[0].mxu0 %v823
        %v1660 = vpop.f32.mrb[0].mxu0
        %v1661 = vadd.f32 0.0, %v1660
        %v1662 = vpop.f32.mrb[0].mxu0
        %1663 = vmatprep.mubr.f32.mxu0 0.0
        %1664 = vmatmul.mubr.f32.gmra.mrb[0].mxu0 %v825
        %v1665 = vpop.f32.mrb[0].mxu0
        %v1666 = vadd.f32 0.0, %v1665
        %v1667 = vpop.f32.mrb[0].mxu0
        %1668 = vmatprep.mubr.f32.mxu0 0.0
        %1669 = vmatmul.mubr.f32.gmra.mrb[0].mxu0 %v827
        %v1670 = vpop.f32.mrb[0].mxu0
        %v1671 = vadd.f32 0.0, %v1670
        %v1672 = vpop.f32.mrb[0].mxu0
        %1673 = vmatprep.mubr.f32.mxu0 0.0
        %1674 = vmatmul.mubr.f32.gmra.mrb[0].mxu0 %v829
        %v1675 = vpop.f32.mrb[0].mxu0
        %v1676 = vadd.f32 0.0, %v1675
        %v1677 = vpop.f32.mrb[0].mxu0
        %1678 = vmatprep.mubr.f32.mxu0 0.0
        %1679 = vmatmul.mubr.f32.gmra.mrb[0].mxu0 %v831
        %v1680 = vpop.f32.mrb[0].mxu0
        %v1681 = vadd.f32 0.0, %v1680
        %v1682 = vpop.f32.mrb[0].mxu0
        %1683 = vmatprep.mubr.f32.mxu0 0.0
        %1684 = vmatmul.mubr.f32.gmra.mrb[0].mxu0 %v833
        %v1685 = vpop.f32.mrb[0].mxu0
        %v1686 = vadd.f32 0.0, %v1685
        %v1687 = vpop.f32.mrb[0].mxu0
        %1688 = vmatprep.mubr.f32.mxu0 0.0
        %1689 = vmatmul.mubr.f32.gmra.mrb[0].mxu0 %v835
        %v1690 = vpop.f32.mrb[0].mxu0
        %v1691 = vadd.f32 0.0, %v1690
        %v1692 = vpop.f32.mrb[0].mxu0
        %1693 = vmatprep.mubr.f32.mxu0 0.0
        %1694 = vmatmul.mubr.f32.gmra.mrb[0].mxu0 %v837
        %v1695 = vpop.f32.mrb[0].mxu0
        %v1696 = vadd.f32 0.0, %v1695
        %v1697 = vpop.f32.mrb[0].mxu0
        %1698 = vmatprep.mubr.f32.mxu0 0.0
        %1699 = vmatmul.mubr.f32.gmra.mrb[0].mxu0 %v1477
        %v1700 = vpop.f32.mrb[0].mxu0
        %v1701 = vadd.f32 0.0, %v1700
        %v1702 = vpop.f32.mrb[0].mxu0
        %1703 = vmatprep.mubr.f32.mxu0 0.0
        %1704 = vmatmul.mubr.f32.gmra.mrb[0].mxu0 %v1479
        %v1705 = vpop.f32.mrb[0].mxu0
        %v1706 = vadd.f32 0.0, %v1705
        %v1707 = vpop.f32.mrb[0].mxu0
        %1708 = vdwg.mxu0
        %v1709 = vadd.f32 %v1442, %v1551
        %v1710 = vadd.f32 %v1443, %v1556
        %v1711 = vadd.f32 %v1444, %v1561
        %v1712 = vadd.f32 %v1445, %v1566
        %v1713 = vadd.f32 %v1446, %v1571
        %v1714 = vadd.f32 %v1447, %v1576
        %v1715 = vadd.f32 %v1448, %v1581
        %v1716 = vadd.f32 %v1449, %v1586
        %v1717 = vadd.f32 %v1450, %v1591
        %v1718 = vadd.f32 %v1451, %v1596
        %v1719 = vadd.f32 %v1452, %v1601
        %v1720 = vadd.f32 %v1453, %v1606
        %v1721 = vadd.f32 %v1454, %v1611
        %v1722 = vadd.f32 %v1455, %v1616
        %v1723 = vadd.f32 %v1456, %v1621
        %v1724 = vadd.f32 %v1457, %v1626
        %v1725 = vadd.f32 %v1458, %v1631
        %v1726 = vadd.f32 %v1459, %v1636
        %v1727 = vadd.f32 %v1460, %v1641
        %v1728 = vadd.f32 %v1461, %v1646
        %v1729 = vadd.f32 %v1462, %v1651
        %v1730 = vadd.f32 %v1463, %v1656
        %v1731 = vadd.f32 %v1464, %v1661
        %v1732 = vadd.f32 %v1465, %v1666
        %v1733 = vadd.f32 %v1466, %v1671
        %v1734 = vadd.f32 %v1467, %v1676
        %v1735 = vadd.f32 %v1468, %v1681
        %v1736 = vadd.f32 %v1469, %v1686
        %v1737 = vadd.f32 %v1470, %v1691
        %v1738 = vadd.f32 %v1471, %v1696
        %v1739 = vadd.f32 %v1472, %v1701
        %v1740 = vadd.f32 %v1473, %v1706
        %v1742 = vrot.slane %v347, 1
        %v1743 = vrot.slane %v297, 1
        %v1744 = vsel %vm398, %v1742, %v1743
        %v1745 = vrot.slane %v364, 1
        %v1746 = vsel %vm398, %v1743, %v1745
        %s1747 = scalar_lea.vmem %s1, 16
        %v1748 = vld [vmem:[%s1747] sm:$0xf]
        %v1749 = vsel %vm481, %v1744, 0
        %v1751 = vsel %vm481, %v1746, 0
        %v1754 = vsel %vm546, %v1748, 0
        %1756 = vmatprep.subr.mxu0 0.0
        %1757 = vmatpush1.msra.mxu0 %v1754
        %1758 = vmatprep.subr.mxu0 0.0
        %1759 = vmatpush1.msra.mxu0 0.0
        %1760 = vmatprep.subr.mxu0 0.0
        %1761 = vmatpush1.msra.mxu0 0.0
        %1762 = vmatprep.subr.mxu0 0.0
        %1763 = vmatpush1.msra.mxu0 0.0
        %1764 = vmatprep.subr.mxu0 0.0
        %1765 = vmatpush1.msra.mxu0 0.0
        %1766 = vmatprep.subr.mxu0 0.0
        %1767 = vmatpush1.msra.mxu0 0.0
        %1768 = vmatprep.subr.mxu0 0.0
        %1769 = vmatpush1.msra.mxu0 0.0
        %1770 = vmatprep.subr.mxu0 0.0
        %1771 = vmatpush1.msra.mxu0 0.0
        %1772 = vmatprep.subr.mxu0 0.0
        %1773 = vmatpush1.msra.mxu0 0.0
        %1774 = vmatprep.subr.mxu0 0.0
        %1775 = vmatpush1.msra.mxu0 0.0
        %1776 = vmatprep.subr.mxu0 0.0
        %1777 = vmatpush1.msra.mxu0 0.0
        %1778 = vmatprep.subr.mxu0 0.0
        %1779 = vmatpush1.msra.mxu0 0.0
        %1780 = vmatprep.subr.mxu0 0.0
        %1781 = vmatpush1.msra.mxu0 0.0
        %1782 = vmatprep.subr.mxu0 0.0
        %1783 = vmatpush1.msra.mxu0 0.0
        %1784 = vmatprep.subr.mxu0 0.0
        %1785 = vmatpush1.msra.mxu0 0.0
        %1786 = vmatprep.subr.mxu0 0.0
        %1787 = vmatpush1.msra.mxu0 0.0
        %1788 = vmatprep.subr.mxu0 0.0
        %1789 = vmatpush1.msra.mxu0 0.0
        %1790 = vmatprep.subr.mxu0 0.0
        %1791 = vmatpush1.msra.mxu0 0.0
        %1792 = vmatprep.subr.mxu0 0.0
        %1793 = vmatpush1.msra.mxu0 0.0
        %1794 = vmatprep.subr.mxu0 0.0
        %1795 = vmatpush1.msra.mxu0 0.0
        %1796 = vmatprep.subr.mxu0 0.0
        %1797 = vmatpush1.msra.mxu0 0.0
        %1798 = vmatprep.subr.mxu0 0.0
        %1799 = vmatpush1.msra.mxu0 0.0
        %1800 = vmatprep.subr.mxu0 0.0
        %1801 = vmatpush1.msra.mxu0 0.0
        %1802 = vmatprep.subr.mxu0 0.0
        %1803 = vmatpush1.msra.mxu0 0.0
        %1804 = vmatprep.subr.mxu0 0.0
        %1805 = vmatpush1.msra.mxu0 0.0
        %1806 = vmatprep.subr.mxu0 0.0
        %1807 = vmatpush1.msra.mxu0 0.0
        %1808 = vmatprep.subr.mxu0 0.0
        %1809 = vmatpush1.msra.mxu0 0.0
        %1810 = vmatprep.subr.mxu0 0.0
        %1811 = vmatpush1.msra.mxu0 0.0
        %1812 = vmatprep.subr.mxu0 0.0
        %1813 = vmatpush1.msra.mxu0 0.0
        %1814 = vmatprep.subr.mxu0 0.0
        %1815 = vmatpush1.msra.mxu0 0.0
        %1816 = vmatprep.subr.mxu0 0.0
        %1817 = vmatpush1.msra.mxu0 0.0
        %1818 = vmatprep.subr.mxu0 0.0
        %1819 = vmatpush1.msra.mxu0 0.0
        %1820 = vmatprep.mubr.f32.mxu0 0.0
        %1821 = vmatmul.mubr.f32.gmra.mrb[0].mxu0 %v486
        %v1822 = vpop.f32.mrb[0].mxu0
        %v1823 = vadd.f32 0.0, %v1822
        %v1824 = vpop.f32.mrb[0].mxu0
        %1825 = vmatprep.mubr.f32.mxu0 0.0
        %1826 = vmatmul.mubr.f32.gmra.mrb[0].mxu0 %v488
        %v1827 = vpop.f32.mrb[0].mxu0
        %v1828 = vadd.f32 0.0, %v1827
        %v1829 = vpop.f32.mrb[0].mxu0
        %1830 = vmatprep.mubr.f32.mxu0 0.0
        %1831 = vmatmul.mubr.f32.gmra.mrb[0].mxu0 %v490
        %v1832 = vpop.f32.mrb[0].mxu0
        %v1833 = vadd.f32 0.0, %v1832
        %v1834 = vpop.f32.mrb[0].mxu0
        %1835 = vmatprep.mubr.f32.mxu0 0.0
        %1836 = vmatmul.mubr.f32.gmra.mrb[0].mxu0 %v492
        %v1837 = vpop.f32.mrb[0].mxu0
        %v1838 = vadd.f32 0.0, %v1837
        %v1839 = vpop.f32.mrb[0].mxu0
        %1840 = vmatprep.mubr.f32.mxu0 0.0
        %1841 = vmatmul.mubr.f32.gmra.mrb[0].mxu0 %v494
        %v1842 = vpop.f32.mrb[0].mxu0
        %v1843 = vadd.f32 0.0, %v1842
        %v1844 = vpop.f32.mrb[0].mxu0
        %1845 = vmatprep.mubr.f32.mxu0 0.0
        %1846 = vmatmul.mubr.f32.gmra.mrb[0].mxu0 %v496
        %v1847 = vpop.f32.mrb[0].mxu0
        %v1848 = vadd.f32 0.0, %v1847
        %v1849 = vpop.f32.mrb[0].mxu0
        %1850 = vmatprep.mubr.f32.mxu0 0.0
        %1851 = vmatmul.mubr.f32.gmra.mrb[0].mxu0 %v498
        %v1852 = vpop.f32.mrb[0].mxu0
        %v1853 = vadd.f32 0.0, %v1852
        %v1854 = vpop.f32.mrb[0].mxu0
        %1855 = vmatprep.mubr.f32.mxu0 0.0
        %1856 = vmatmul.mubr.f32.gmra.mrb[0].mxu0 %v500
        %v1857 = vpop.f32.mrb[0].mxu0
        %v1858 = vadd.f32 0.0, %v1857
        %v1859 = vpop.f32.mrb[0].mxu0
        %1860 = vmatprep.mubr.f32.mxu0 0.0
        %1861 = vmatmul.mubr.f32.gmra.mrb[0].mxu0 %v502
        %v1862 = vpop.f32.mrb[0].mxu0
        %v1863 = vadd.f32 0.0, %v1862
        %v1864 = vpop.f32.mrb[0].mxu0
        %1865 = vmatprep.mubr.f32.mxu0 0.0
        %1866 = vmatmul.mubr.f32.gmra.mrb[0].mxu0 %v504
        %v1867 = vpop.f32.mrb[0].mxu0
        %v1868 = vadd.f32 0.0, %v1867
        %v1869 = vpop.f32.mrb[0].mxu0
        %1870 = vmatprep.mubr.f32.mxu0 0.0
        %1871 = vmatmul.mubr.f32.gmra.mrb[0].mxu0 %v506
        %v1872 = vpop.f32.mrb[0].mxu0
        %v1873 = vadd.f32 0.0, %v1872
        %v1874 = vpop.f32.mrb[0].mxu0
        %1875 = vmatprep.mubr.f32.mxu0 0.0
        %1876 = vmatmul.mubr.f32.gmra.mrb[0].mxu0 %v508
        %v1877 = vpop.f32.mrb[0].mxu0
        %v1878 = vadd.f32 0.0, %v1877
        %v1879 = vpop.f32.mrb[0].mxu0
        %1880 = vmatprep.mubr.f32.mxu0 0.0
        %1881 = vmatmul.mubr.f32.gmra.mrb[0].mxu0 %v510
        %v1882 = vpop.f32.mrb[0].mxu0
        %v1883 = vadd.f32 0.0, %v1882
        %v1884 = vpop.f32.mrb[0].mxu0
        %1885 = vmatprep.mubr.f32.mxu0 0.0
        %1886 = vmatmul.mubr.f32.gmra.mrb[0].mxu0 %v512
        %v1887 = vpop.f32.mrb[0].mxu0
        %v1888 = vadd.f32 0.0, %v1887
        %v1889 = vpop.f32.mrb[0].mxu0
        %1890 = vmatprep.mubr.f32.mxu0 0.0
        %1891 = vmatmul.mubr.f32.gmra.mrb[0].mxu0 %v514
        %v1892 = vpop.f32.mrb[0].mxu0
        %v1893 = vadd.f32 0.0, %v1892
        %v1894 = vpop.f32.mrb[0].mxu0
        %1895 = vmatprep.mubr.f32.mxu0 0.0
        %1896 = vmatmul.mubr.f32.gmra.mrb[0].mxu0 %v516
        %v1897 = vpop.f32.mrb[0].mxu0
        %v1898 = vadd.f32 0.0, %v1897
        %v1899 = vpop.f32.mrb[0].mxu0
        %1900 = vmatprep.mubr.f32.mxu0 0.0
        %1901 = vmatmul.mubr.f32.gmra.mrb[0].mxu0 %v518
        %v1902 = vpop.f32.mrb[0].mxu0
        %v1903 = vadd.f32 0.0, %v1902
        %v1904 = vpop.f32.mrb[0].mxu0
        %1905 = vmatprep.mubr.f32.mxu0 0.0
        %1906 = vmatmul.mubr.f32.gmra.mrb[0].mxu0 %v520
        %v1907 = vpop.f32.mrb[0].mxu0
        %v1908 = vadd.f32 0.0, %v1907
        %v1909 = vpop.f32.mrb[0].mxu0
        %1910 = vmatprep.mubr.f32.mxu0 0.0
        %1911 = vmatmul.mubr.f32.gmra.mrb[0].mxu0 %v522
        %v1912 = vpop.f32.mrb[0].mxu0
        %v1913 = vadd.f32 0.0, %v1912
        %v1914 = vpop.f32.mrb[0].mxu0
        %1915 = vmatprep.mubr.f32.mxu0 0.0
        %1916 = vmatmul.mubr.f32.gmra.mrb[0].mxu0 %v524
        %v1917 = vpop.f32.mrb[0].mxu0
        %v1918 = vadd.f32 0.0, %v1917
        %v1919 = vpop.f32.mrb[0].mxu0
        %1920 = vmatprep.mubr.f32.mxu0 0.0
        %1921 = vmatmul.mubr.f32.gmra.mrb[0].mxu0 %v526
        %v1922 = vpop.f32.mrb[0].mxu0
        %v1923 = vadd.f32 0.0, %v1922
        %v1924 = vpop.f32.mrb[0].mxu0
        %1925 = vmatprep.mubr.f32.mxu0 0.0
        %1926 = vmatmul.mubr.f32.gmra.mrb[0].mxu0 %v528
        %v1927 = vpop.f32.mrb[0].mxu0
        %v1928 = vadd.f32 0.0, %v1927
        %v1929 = vpop.f32.mrb[0].mxu0
        %1930 = vmatprep.mubr.f32.mxu0 0.0
        %1931 = vmatmul.mubr.f32.gmra.mrb[0].mxu0 %v530
        %v1932 = vpop.f32.mrb[0].mxu0
        %v1933 = vadd.f32 0.0, %v1932
        %v1934 = vpop.f32.mrb[0].mxu0
        %1935 = vmatprep.mubr.f32.mxu0 0.0
        %1936 = vmatmul.mubr.f32.gmra.mrb[0].mxu0 %v532
        %v1937 = vpop.f32.mrb[0].mxu0
        %v1938 = vadd.f32 0.0, %v1937
        %v1939 = vpop.f32.mrb[0].mxu0
        %1940 = vmatprep.mubr.f32.mxu0 0.0
        %1941 = vmatmul.mubr.f32.gmra.mrb[0].mxu0 %v534
        %v1942 = vpop.f32.mrb[0].mxu0
        %v1943 = vadd.f32 0.0, %v1942
        %v1944 = vpop.f32.mrb[0].mxu0
        %1945 = vmatprep.mubr.f32.mxu0 0.0
        %1946 = vmatmul.mubr.f32.gmra.mrb[0].mxu0 %v536
        %v1947 = vpop.f32.mrb[0].mxu0
        %v1948 = vadd.f32 0.0, %v1947
        %v1949 = vpop.f32.mrb[0].mxu0
        %1950 = vmatprep.mubr.f32.mxu0 0.0
        %1951 = vmatmul.mubr.f32.gmra.mrb[0].mxu0 %v538
        %v1952 = vpop.f32.mrb[0].mxu0
        %v1953 = vadd.f32 0.0, %v1952
        %v1954 = vpop.f32.mrb[0].mxu0
        %1955 = vmatprep.mubr.f32.mxu0 0.0
        %1956 = vmatmul.mubr.f32.gmra.mrb[0].mxu0 %v540
        %v1957 = vpop.f32.mrb[0].mxu0
        %v1958 = vadd.f32 0.0, %v1957
        %v1959 = vpop.f32.mrb[0].mxu0
        %1960 = vmatprep.mubr.f32.mxu0 0.0
        %1961 = vmatmul.mubr.f32.gmra.mrb[0].mxu0 %v542
        %v1962 = vpop.f32.mrb[0].mxu0
        %v1963 = vadd.f32 0.0, %v1962
        %v1964 = vpop.f32.mrb[0].mxu0
        %1965 = vmatprep.mubr.f32.mxu0 0.0
        %1966 = vmatmul.mubr.f32.gmra.mrb[0].mxu0 %v544
        %v1967 = vpop.f32.mrb[0].mxu0
        %v1968 = vadd.f32 0.0, %v1967
        %v1969 = vpop.f32.mrb[0].mxu0
        %1970 = vmatprep.mubr.f32.mxu0 0.0
        %1971 = vmatmul.mubr.f32.gmra.mrb[0].mxu0 %v1749
        %v1972 = vpop.f32.mrb[0].mxu0
        %v1973 = vadd.f32 0.0, %v1972
        %v1974 = vpop.f32.mrb[0].mxu0
        %1975 = vmatprep.mubr.f32.mxu0 0.0
        %1976 = vmatmul.mubr.f32.gmra.mrb[0].mxu0 %v1751
        %v1977 = vpop.f32.mrb[0].mxu0
        %v1978 = vadd.f32 0.0, %v1977
        %v1979 = vpop.f32.mrb[0].mxu0
        %1980 = vdwg.mxu0
        %v1981 = vadd.f32 %v1709, %v1823
        %v1982 = vadd.f32 %v1710, %v1828
        %v1983 = vadd.f32 %v1711, %v1833
        %v1984 = vadd.f32 %v1712, %v1838
        %v1985 = vadd.f32 %v1713, %v1843
        %v1986 = vadd.f32 %v1714, %v1848
        %v1987 = vadd.f32 %v1715, %v1853
        %v1988 = vadd.f32 %v1716, %v1858
        %v1989 = vadd.f32 %v1717, %v1863
        %v1990 = vadd.f32 %v1718, %v1868
        %v1991 = vadd.f32 %v1719, %v1873
        %v1992 = vadd.f32 %v1720, %v1878
        %v1993 = vadd.f32 %v1721, %v1883
        %v1994 = vadd.f32 %v1722, %v1888
        %v1995 = vadd.f32 %v1723, %v1893
        %v1996 = vadd.f32 %v1724, %v1898
        %v1997 = vadd.f32 %v1725, %v1903
        %v1998 = vadd.f32 %v1726, %v1908
        %v1999 = vadd.f32 %v1727, %v1913
        %v2000 = vadd.f32 %v1728, %v1918
        %v2001 = vadd.f32 %v1729, %v1923
        %v2002 = vadd.f32 %v1730, %v1928
        %v2003 = vadd.f32 %v1731, %v1933
        %v2004 = vadd.f32 %v1732, %v1938
        %v2005 = vadd.f32 %v1733, %v1943
        %v2006 = vadd.f32 %v1734, %v1948
        %v2007 = vadd.f32 %v1735, %v1953
        %v2008 = vadd.f32 %v1736, %v1958
        %v2009 = vadd.f32 %v1737, %v1963
        %v2010 = vadd.f32 %v1738, %v1968
        %v2011 = vadd.f32 %v1739, %v1973
        %v2012 = vadd.f32 %v1740, %v1978
        %v2013 = vrot.slane %v347, 2
        %v2014 = vrot.slane %v297, 2
        %v2015 = vsel %vm1067, %v2013, %v2014
        %v2016 = vrot.slane %v364, 2
        %v2017 = vsel %vm1067, %v2014, %v2016
        %s2018 = scalar_lea.vmem %s1, 20
        %v2019 = vld [vmem:[%s2018] sm:$0xf]
        %v2020 = vsel %vm481, %v2015, 0
        %v2022 = vsel %vm481, %v2017, 0
        %v2025 = vsel %vm546, %v2019, 0
        %2027 = vmatprep.subr.mxu0 0.0
        %2028 = vmatpush1.msra.mxu0 %v2025
        %2029 = vmatprep.subr.mxu0 0.0
        %2030 = vmatpush1.msra.mxu0 0.0
        %2031 = vmatprep.subr.mxu0 0.0
        %2032 = vmatpush1.msra.mxu0 0.0
        %2033 = vmatprep.subr.mxu0 0.0
        %2034 = vmatpush1.msra.mxu0 0.0
        %2035 = vmatprep.subr.mxu0 0.0
        %2036 = vmatpush1.msra.mxu0 0.0
        %2037 = vmatprep.subr.mxu0 0.0
        %2038 = vmatpush1.msra.mxu0 0.0
        %2039 = vmatprep.subr.mxu0 0.0
        %2040 = vmatpush1.msra.mxu0 0.0
        %2041 = vmatprep.subr.mxu0 0.0
        %2042 = vmatpush1.msra.mxu0 0.0
        %2043 = vmatprep.subr.mxu0 0.0
        %2044 = vmatpush1.msra.mxu0 0.0
        %2045 = vmatprep.subr.mxu0 0.0
        %2046 = vmatpush1.msra.mxu0 0.0
        %2047 = vmatprep.subr.mxu0 0.0
        %2048 = vmatpush1.msra.mxu0 0.0
        %2049 = vmatprep.subr.mxu0 0.0
        %2050 = vmatpush1.msra.mxu0 0.0
        %2051 = vmatprep.subr.mxu0 0.0
        %2052 = vmatpush1.msra.mxu0 0.0
        %2053 = vmatprep.subr.mxu0 0.0
        %2054 = vmatpush1.msra.mxu0 0.0
        %2055 = vmatprep.subr.mxu0 0.0
        %2056 = vmatpush1.msra.mxu0 0.0
        %2057 = vmatprep.subr.mxu0 0.0
        %2058 = vmatpush1.msra.mxu0 0.0
        %2059 = vmatprep.subr.mxu0 0.0
        %2060 = vmatpush1.msra.mxu0 0.0
        %2061 = vmatprep.subr.mxu0 0.0
        %2062 = vmatpush1.msra.mxu0 0.0
        %2063 = vmatprep.subr.mxu0 0.0
        %2064 = vmatpush1.msra.mxu0 0.0
        %2065 = vmatprep.subr.mxu0 0.0
        %2066 = vmatpush1.msra.mxu0 0.0
        %2067 = vmatprep.subr.mxu0 0.0
        %2068 = vmatpush1.msra.mxu0 0.0
        %2069 = vmatprep.subr.mxu0 0.0
        %2070 = vmatpush1.msra.mxu0 0.0
        %2071 = vmatprep.subr.mxu0 0.0
        %2072 = vmatpush1.msra.mxu0 0.0
        %2073 = vmatprep.subr.mxu0 0.0
        %2074 = vmatpush1.msra.mxu0 0.0
        %2075 = vmatprep.subr.mxu0 0.0
        %2076 = vmatpush1.msra.mxu0 0.0
        %2077 = vmatprep.subr.mxu0 0.0
        %2078 = vmatpush1.msra.mxu0 0.0
        %2079 = vmatprep.subr.mxu0 0.0
        %2080 = vmatpush1.msra.mxu0 0.0
        %2081 = vmatprep.subr.mxu0 0.0
        %2082 = vmatpush1.msra.mxu0 0.0
        %2083 = vmatprep.subr.mxu0 0.0
        %2084 = vmatpush1.msra.mxu0 0.0
        %2085 = vmatprep.subr.mxu0 0.0
        %2086 = vmatpush1.msra.mxu0 0.0
        %2087 = vmatprep.subr.mxu0 0.0
        %2088 = vmatpush1.msra.mxu0 0.0
        %2089 = vmatprep.subr.mxu0 0.0
        %2090 = vmatpush1.msra.mxu0 0.0
        %2091 = vmatprep.mubr.f32.mxu0 0.0
        %2092 = vmatmul.mubr.f32.gmra.mrb[0].mxu0 %v1154
        %v2093 = vpop.f32.mrb[0].mxu0
        %v2094 = vadd.f32 0.0, %v2093
        %v2095 = vpop.f32.mrb[0].mxu0
        %2096 = vmatprep.mubr.f32.mxu0 0.0
        %2097 = vmatmul.mubr.f32.gmra.mrb[0].mxu0 %v1156
        %v2098 = vpop.f32.mrb[0].mxu0
        %v2099 = vadd.f32 0.0, %v2098
        %v2100 = vpop.f32.mrb[0].mxu0
        %2101 = vmatprep.mubr.f32.mxu0 0.0
        %2102 = vmatmul.mubr.f32.gmra.mrb[0].mxu0 %v1158
        %v2103 = vpop.f32.mrb[0].mxu0
        %v2104 = vadd.f32 0.0, %v2103
        %v2105 = vpop.f32.mrb[0].mxu0
        %2106 = vmatprep.mubr.f32.mxu0 0.0
        %2107 = vmatmul.mubr.f32.gmra.mrb[0].mxu0 %v1160
        %v2108 = vpop.f32.mrb[0].mxu0
        %v2109 = vadd.f32 0.0, %v2108
        %v2110 = vpop.f32.mrb[0].mxu0
        %2111 = vmatprep.mubr.f32.mxu0 0.0
        %2112 = vmatmul.mubr.f32.gmra.mrb[0].mxu0 %v1162
        %v2113 = vpop.f32.mrb[0].mxu0
        %v2114 = vadd.f32 0.0, %v2113
        %v2115 = vpop.f32.mrb[0].mxu0
        %2116 = vmatprep.mubr.f32.mxu0 0.0
        %2117 = vmatmul.mubr.f32.gmra.mrb[0].mxu0 %v1164
        %v2118 = vpop.f32.mrb[0].mxu0
        %v2119 = vadd.f32 0.0, %v2118
        %v2120 = vpop.f32.mrb[0].mxu0
        %2121 = vmatprep.mubr.f32.mxu0 0.0
        %2122 = vmatmul.mubr.f32.gmra.mrb[0].mxu0 %v1166
        %v2123 = vpop.f32.mrb[0].mxu0
        %v2124 = vadd.f32 0.0, %v2123
        %v2125 = vpop.f32.mrb[0].mxu0
        %2126 = vmatprep.mubr.f32.mxu0 0.0
        %2127 = vmatmul.mubr.f32.gmra.mrb[0].mxu0 %v1168
        %v2128 = vpop.f32.mrb[0].mxu0
        %v2129 = vadd.f32 0.0, %v2128
        %v2130 = vpop.f32.mrb[0].mxu0
        %2131 = vmatprep.mubr.f32.mxu0 0.0
        %2132 = vmatmul.mubr.f32.gmra.mrb[0].mxu0 %v1170
        %v2133 = vpop.f32.mrb[0].mxu0
        %v2134 = vadd.f32 0.0, %v2133
        %v2135 = vpop.f32.mrb[0].mxu0
        %2136 = vmatprep.mubr.f32.mxu0 0.0
        %2137 = vmatmul.mubr.f32.gmra.mrb[0].mxu0 %v1172
        %v2138 = vpop.f32.mrb[0].mxu0
        %v2139 = vadd.f32 0.0, %v2138
        %v2140 = vpop.f32.mrb[0].mxu0
        %2141 = vmatprep.mubr.f32.mxu0 0.0
        %2142 = vmatmul.mubr.f32.gmra.mrb[0].mxu0 %v1174
        %v2143 = vpop.f32.mrb[0].mxu0
        %v2144 = vadd.f32 0.0, %v2143
        %v2145 = vpop.f32.mrb[0].mxu0
        %2146 = vmatprep.mubr.f32.mxu0 0.0
        %2147 = vmatmul.mubr.f32.gmra.mrb[0].mxu0 %v1176
        %v2148 = vpop.f32.mrb[0].mxu0
        %v2149 = vadd.f32 0.0, %v2148
        %v2150 = vpop.f32.mrb[0].mxu0
        %2151 = vmatprep.mubr.f32.mxu0 0.0
        %2152 = vmatmul.mubr.f32.gmra.mrb[0].mxu0 %v1178
        %v2153 = vpop.f32.mrb[0].mxu0
        %v2154 = vadd.f32 0.0, %v2153
        %v2155 = vpop.f32.mrb[0].mxu0
        %2156 = vmatprep.mubr.f32.mxu0 0.0
        %2157 = vmatmul.mubr.f32.gmra.mrb[0].mxu0 %v1180
        %v2158 = vpop.f32.mrb[0].mxu0
        %v2159 = vadd.f32 0.0, %v2158
        %v2160 = vpop.f32.mrb[0].mxu0
        %2161 = vmatprep.mubr.f32.mxu0 0.0
        %2162 = vmatmul.mubr.f32.gmra.mrb[0].mxu0 %v1182
        %v2163 = vpop.f32.mrb[0].mxu0
        %v2164 = vadd.f32 0.0, %v2163
        %v2165 = vpop.f32.mrb[0].mxu0
        %2166 = vmatprep.mubr.f32.mxu0 0.0
        %2167 = vmatmul.mubr.f32.gmra.mrb[0].mxu0 %v1184
        %v2168 = vpop.f32.mrb[0].mxu0
        %v2169 = vadd.f32 0.0, %v2168
        %v2170 = vpop.f32.mrb[0].mxu0
        %2171 = vmatprep.mubr.f32.mxu0 0.0
        %2172 = vmatmul.mubr.f32.gmra.mrb[0].mxu0 %v1186
        %v2173 = vpop.f32.mrb[0].mxu0
        %v2174 = vadd.f32 0.0, %v2173
        %v2175 = vpop.f32.mrb[0].mxu0
        %2176 = vmatprep.mubr.f32.mxu0 0.0
        %2177 = vmatmul.mubr.f32.gmra.mrb[0].mxu0 %v1188
        %v2178 = vpop.f32.mrb[0].mxu0
        %v2179 = vadd.f32 0.0, %v2178
        %v2180 = vpop.f32.mrb[0].mxu0
        %2181 = vmatprep.mubr.f32.mxu0 0.0
        %2182 = vmatmul.mubr.f32.gmra.mrb[0].mxu0 %v1190
        %v2183 = vpop.f32.mrb[0].mxu0
        %v2184 = vadd.f32 0.0, %v2183
        %v2185 = vpop.f32.mrb[0].mxu0
        %2186 = vmatprep.mubr.f32.mxu0 0.0
        %2187 = vmatmul.mubr.f32.gmra.mrb[0].mxu0 %v1192
        %v2188 = vpop.f32.mrb[0].mxu0
        %v2189 = vadd.f32 0.0, %v2188
        %v2190 = vpop.f32.mrb[0].mxu0
        %2191 = vmatprep.mubr.f32.mxu0 0.0
        %2192 = vmatmul.mubr.f32.gmra.mrb[0].mxu0 %v1194
        %v2193 = vpop.f32.mrb[0].mxu0
        %v2194 = vadd.f32 0.0, %v2193
        %v2195 = vpop.f32.mrb[0].mxu0
        %2196 = vmatprep.mubr.f32.mxu0 0.0
        %2197 = vmatmul.mubr.f32.gmra.mrb[0].mxu0 %v1196
        %v2198 = vpop.f32.mrb[0].mxu0
        %v2199 = vadd.f32 0.0, %v2198
        %v2200 = vpop.f32.mrb[0].mxu0
        %2201 = vmatprep.mubr.f32.mxu0 0.0
        %2202 = vmatmul.mubr.f32.gmra.mrb[0].mxu0 %v1198
        %v2203 = vpop.f32.mrb[0].mxu0
        %v2204 = vadd.f32 0.0, %v2203
        %v2205 = vpop.f32.mrb[0].mxu0
        %2206 = vmatprep.mubr.f32.mxu0 0.0
        %2207 = vmatmul.mubr.f32.gmra.mrb[0].mxu0 %v1200
        %v2208 = vpop.f32.mrb[0].mxu0
        %v2209 = vadd.f32 0.0, %v2208
        %v2210 = vpop.f32.mrb[0].mxu0
        %2211 = vmatprep.mubr.f32.mxu0 0.0
        %2212 = vmatmul.mubr.f32.gmra.mrb[0].mxu0 %v1202
        %v2213 = vpop.f32.mrb[0].mxu0
        %v2214 = vadd.f32 0.0, %v2213
        %v2215 = vpop.f32.mrb[0].mxu0
        %2216 = vmatprep.mubr.f32.mxu0 0.0
        %2217 = vmatmul.mubr.f32.gmra.mrb[0].mxu0 %v1204
        %v2218 = vpop.f32.mrb[0].mxu0
        %v2219 = vadd.f32 0.0, %v2218
        %v2220 = vpop.f32.mrb[0].mxu0
        %2221 = vmatprep.mubr.f32.mxu0 0.0
        %2222 = vmatmul.mubr.f32.gmra.mrb[0].mxu0 %v1206
        %v2223 = vpop.f32.mrb[0].mxu0
        %v2224 = vadd.f32 0.0, %v2223
        %v2225 = vpop.f32.mrb[0].mxu0
        %2226 = vmatprep.mubr.f32.mxu0 0.0
        %2227 = vmatmul.mubr.f32.gmra.mrb[0].mxu0 %v1208
        %v2228 = vpop.f32.mrb[0].mxu0
        %v2229 = vadd.f32 0.0, %v2228
        %v2230 = vpop.f32.mrb[0].mxu0
        %2231 = vmatprep.mubr.f32.mxu0 0.0
        %2232 = vmatmul.mubr.f32.gmra.mrb[0].mxu0 %v1210
        %v2233 = vpop.f32.mrb[0].mxu0
        %v2234 = vadd.f32 0.0, %v2233
        %v2235 = vpop.f32.mrb[0].mxu0
        %2236 = vmatprep.mubr.f32.mxu0 0.0
        %2237 = vmatmul.mubr.f32.gmra.mrb[0].mxu0 %v1212
        %v2238 = vpop.f32.mrb[0].mxu0
        %v2239 = vadd.f32 0.0, %v2238
        %v2240 = vpop.f32.mrb[0].mxu0
        %2241 = vmatprep.mubr.f32.mxu0 0.0
        %2242 = vmatmul.mubr.f32.gmra.mrb[0].mxu0 %v2020
        %v2243 = vpop.f32.mrb[0].mxu0
        %v2244 = vadd.f32 0.0, %v2243
        %v2245 = vpop.f32.mrb[0].mxu0
        %2246 = vmatprep.mubr.f32.mxu0 0.0
        %2247 = vmatmul.mubr.f32.gmra.mrb[0].mxu0 %v2022
        %v2248 = vpop.f32.mrb[0].mxu0
        %v2249 = vadd.f32 0.0, %v2248
        %v2250 = vpop.f32.mrb[0].mxu0
        %2251 = vdwg.mxu0
        %v2252 = vadd.f32 %v1981, %v2094
        %v2253 = vadd.f32 %v1982, %v2099
        %v2254 = vadd.f32 %v1983, %v2104
        %v2255 = vadd.f32 %v1984, %v2109
        %v2256 = vadd.f32 %v1985, %v2114
        %v2257 = vadd.f32 %v1986, %v2119
        %v2258 = vadd.f32 %v1987, %v2124
        %v2259 = vadd.f32 %v1988, %v2129
        %v2260 = vadd.f32 %v1989, %v2134
        %v2261 = vadd.f32 %v1990, %v2139
        %v2262 = vadd.f32 %v1991, %v2144
        %v2263 = vadd.f32 %v1992, %v2149
        %v2264 = vadd.f32 %v1993, %v2154
        %v2265 = vadd.f32 %v1994, %v2159
        %v2266 = vadd.f32 %v1995, %v2164
        %v2267 = vadd.f32 %v1996, %v2169
        %v2268 = vadd.f32 %v1997, %v2174
        %v2269 = vadd.f32 %v1998, %v2179
        %v2270 = vadd.f32 %v1999, %v2184
        %v2271 = vadd.f32 %v2000, %v2189
        %v2272 = vadd.f32 %v2001, %v2194
        %v2273 = vadd.f32 %v2002, %v2199
        %v2274 = vadd.f32 %v2003, %v2204
        %v2275 = vadd.f32 %v2004, %v2209
        %v2276 = vadd.f32 %v2005, %v2214
        %v2277 = vadd.f32 %v2006, %v2219
        %v2278 = vadd.f32 %v2007, %v2224
        %v2279 = vadd.f32 %v2008, %v2229
        %v2280 = vadd.f32 %v2009, %v2234
        %v2281 = vadd.f32 %v2010, %v2239
        %v2282 = vadd.f32 %v2011, %v2244
        %v2283 = vadd.f32 %v2012, %v2249
        %s2284 = scalar_lea.vmem %s1, 24
        %v2285 = vld [vmem:[%s2284] sm:$0xf]
        %v2287 = vsel %vm546, %v2285, 0
        %2289 = vmatprep.subr.mxu0 0.0
        %2290 = vmatpush1.msra.mxu0 %v2287
        %2291 = vmatprep.subr.mxu0 0.0
        %2292 = vmatpush1.msra.mxu0 0.0
        %2293 = vmatprep.subr.mxu0 0.0
        %2294 = vmatpush1.msra.mxu0 0.0
        %2295 = vmatprep.subr.mxu0 0.0
        %2296 = vmatpush1.msra.mxu0 0.0
        %2297 = vmatprep.subr.mxu0 0.0
        %2298 = vmatpush1.msra.mxu0 0.0
        %2299 = vmatprep.subr.mxu0 0.0
        %2300 = vmatpush1.msra.mxu0 0.0
        %2301 = vmatprep.subr.mxu0 0.0
        %2302 = vmatpush1.msra.mxu0 0.0
        %2303 = vmatprep.subr.mxu0 0.0
        %2304 = vmatpush1.msra.mxu0 0.0
        %2305 = vmatprep.subr.mxu0 0.0
        %2306 = vmatpush1.msra.mxu0 0.0
        %2307 = vmatprep.subr.mxu0 0.0
        %2308 = vmatpush1.msra.mxu0 0.0
        %2309 = vmatprep.subr.mxu0 0.0
        %2310 = vmatpush1.msra.mxu0 0.0
        %2311 = vmatprep.subr.mxu0 0.0
        %2312 = vmatpush1.msra.mxu0 0.0
        %2313 = vmatprep.subr.mxu0 0.0
        %2314 = vmatpush1.msra.mxu0 0.0
        %2315 = vmatprep.subr.mxu0 0.0
        %2316 = vmatpush1.msra.mxu0 0.0
        %2317 = vmatprep.subr.mxu0 0.0
        %2318 = vmatpush1.msra.mxu0 0.0
        %2319 = vmatprep.subr.mxu0 0.0
        %2320 = vmatpush1.msra.mxu0 0.0
        %2321 = vmatprep.subr.mxu0 0.0
        %2322 = vmatpush1.msra.mxu0 0.0
        %2323 = vmatprep.subr.mxu0 0.0
        %2324 = vmatpush1.msra.mxu0 0.0
        %2325 = vmatprep.subr.mxu0 0.0
        %2326 = vmatpush1.msra.mxu0 0.0
        %2327 = vmatprep.subr.mxu0 0.0
        %2328 = vmatpush1.msra.mxu0 0.0
        %2329 = vmatprep.subr.mxu0 0.0
        %2330 = vmatpush1.msra.mxu0 0.0
        %2331 = vmatprep.subr.mxu0 0.0
        %2332 = vmatpush1.msra.mxu0 0.0
        %2333 = vmatprep.subr.mxu0 0.0
        %2334 = vmatpush1.msra.mxu0 0.0
        %2335 = vmatprep.subr.mxu0 0.0
        %2336 = vmatpush1.msra.mxu0 0.0
        %2337 = vmatprep.subr.mxu0 0.0
        %2338 = vmatpush1.msra.mxu0 0.0
        %2339 = vmatprep.subr.mxu0 0.0
        %2340 = vmatpush1.msra.mxu0 0.0
        %2341 = vmatprep.subr.mxu0 0.0
        %2342 = vmatpush1.msra.mxu0 0.0
        %2343 = vmatprep.subr.mxu0 0.0
        %2344 = vmatpush1.msra.mxu0 0.0
        %2345 = vmatprep.subr.mxu0 0.0
        %2346 = vmatpush1.msra.mxu0 0.0
        %2347 = vmatprep.subr.mxu0 0.0
        %2348 = vmatpush1.msra.mxu0 0.0
        %2349 = vmatprep.subr.mxu0 0.0
        %2350 = vmatpush1.msra.mxu0 0.0
        %2351 = vmatprep.subr.mxu0 0.0
        %2352 = vmatpush1.msra.mxu0 0.0
        %2353 = vmatprep.mubr.f32.mxu0 0.0
        %2354 = vmatmul.mubr.f32.gmra.mrb[0].mxu0 %v783
        %v2355 = vpop.f32.mrb[0].mxu0
        %v2356 = vadd.f32 0.0, %v2355
        %v2357 = vpop.f32.mrb[0].mxu0
        %2358 = vmatprep.mubr.f32.mxu0 0.0
        %2359 = vmatmul.mubr.f32.gmra.mrb[0].mxu0 %v785
        %v2360 = vpop.f32.mrb[0].mxu0
        %v2361 = vadd.f32 0.0, %v2360
        %v2362 = vpop.f32.mrb[0].mxu0
        %2363 = vmatprep.mubr.f32.mxu0 0.0
        %2364 = vmatmul.mubr.f32.gmra.mrb[0].mxu0 %v787
        %v2365 = vpop.f32.mrb[0].mxu0
        %v2366 = vadd.f32 0.0, %v2365
        %v2367 = vpop.f32.mrb[0].mxu0
        %2368 = vmatprep.mubr.f32.mxu0 0.0
        %2369 = vmatmul.mubr.f32.gmra.mrb[0].mxu0 %v789
        %v2370 = vpop.f32.mrb[0].mxu0
        %v2371 = vadd.f32 0.0, %v2370
        %v2372 = vpop.f32.mrb[0].mxu0
        %2373 = vmatprep.mubr.f32.mxu0 0.0
        %2374 = vmatmul.mubr.f32.gmra.mrb[0].mxu0 %v791
        %v2375 = vpop.f32.mrb[0].mxu0
        %v2376 = vadd.f32 0.0, %v2375
        %v2377 = vpop.f32.mrb[0].mxu0
        %2378 = vmatprep.mubr.f32.mxu0 0.0
        %2379 = vmatmul.mubr.f32.gmra.mrb[0].mxu0 %v793
        %v2380 = vpop.f32.mrb[0].mxu0
        %v2381 = vadd.f32 0.0, %v2380
        %v2382 = vpop.f32.mrb[0].mxu0
        %2383 = vmatprep.mubr.f32.mxu0 0.0
        %2384 = vmatmul.mubr.f32.gmra.mrb[0].mxu0 %v795
        %v2385 = vpop.f32.mrb[0].mxu0
        %v2386 = vadd.f32 0.0, %v2385
        %v2387 = vpop.f32.mrb[0].mxu0
        %2388 = vmatprep.mubr.f32.mxu0 0.0
        %2389 = vmatmul.mubr.f32.gmra.mrb[0].mxu0 %v797
        %v2390 = vpop.f32.mrb[0].mxu0
        %v2391 = vadd.f32 0.0, %v2390
        %v2392 = vpop.f32.mrb[0].mxu0
        %2393 = vmatprep.mubr.f32.mxu0 0.0
        %2394 = vmatmul.mubr.f32.gmra.mrb[0].mxu0 %v799
        %v2395 = vpop.f32.mrb[0].mxu0
        %v2396 = vadd.f32 0.0, %v2395
        %v2397 = vpop.f32.mrb[0].mxu0
        %2398 = vmatprep.mubr.f32.mxu0 0.0
        %2399 = vmatmul.mubr.f32.gmra.mrb[0].mxu0 %v801
        %v2400 = vpop.f32.mrb[0].mxu0
        %v2401 = vadd.f32 0.0, %v2400
        %v2402 = vpop.f32.mrb[0].mxu0
        %2403 = vmatprep.mubr.f32.mxu0 0.0
        %2404 = vmatmul.mubr.f32.gmra.mrb[0].mxu0 %v803
        %v2405 = vpop.f32.mrb[0].mxu0
        %v2406 = vadd.f32 0.0, %v2405
        %v2407 = vpop.f32.mrb[0].mxu0
        %2408 = vmatprep.mubr.f32.mxu0 0.0
        %2409 = vmatmul.mubr.f32.gmra.mrb[0].mxu0 %v805
        %v2410 = vpop.f32.mrb[0].mxu0
        %v2411 = vadd.f32 0.0, %v2410
        %v2412 = vpop.f32.mrb[0].mxu0
        %2413 = vmatprep.mubr.f32.mxu0 0.0
        %2414 = vmatmul.mubr.f32.gmra.mrb[0].mxu0 %v807
        %v2415 = vpop.f32.mrb[0].mxu0
        %v2416 = vadd.f32 0.0, %v2415
        %v2417 = vpop.f32.mrb[0].mxu0
        %2418 = vmatprep.mubr.f32.mxu0 0.0
        %2419 = vmatmul.mubr.f32.gmra.mrb[0].mxu0 %v809
        %v2420 = vpop.f32.mrb[0].mxu0
        %v2421 = vadd.f32 0.0, %v2420
        %v2422 = vpop.f32.mrb[0].mxu0
        %2423 = vmatprep.mubr.f32.mxu0 0.0
        %2424 = vmatmul.mubr.f32.gmra.mrb[0].mxu0 %v811
        %v2425 = vpop.f32.mrb[0].mxu0
        %v2426 = vadd.f32 0.0, %v2425
        %v2427 = vpop.f32.mrb[0].mxu0
        %2428 = vmatprep.mubr.f32.mxu0 0.0
        %2429 = vmatmul.mubr.f32.gmra.mrb[0].mxu0 %v813
        %v2430 = vpop.f32.mrb[0].mxu0
        %v2431 = vadd.f32 0.0, %v2430
        %v2432 = vpop.f32.mrb[0].mxu0
        %2433 = vmatprep.mubr.f32.mxu0 0.0
        %2434 = vmatmul.mubr.f32.gmra.mrb[0].mxu0 %v815
        %v2435 = vpop.f32.mrb[0].mxu0
        %v2436 = vadd.f32 0.0, %v2435
        %v2437 = vpop.f32.mrb[0].mxu0
        %2438 = vmatprep.mubr.f32.mxu0 0.0
        %2439 = vmatmul.mubr.f32.gmra.mrb[0].mxu0 %v817
        %v2440 = vpop.f32.mrb[0].mxu0
        %v2441 = vadd.f32 0.0, %v2440
        %v2442 = vpop.f32.mrb[0].mxu0
        %2443 = vmatprep.mubr.f32.mxu0 0.0
        %2444 = vmatmul.mubr.f32.gmra.mrb[0].mxu0 %v819
        %v2445 = vpop.f32.mrb[0].mxu0
        %v2446 = vadd.f32 0.0, %v2445
        %v2447 = vpop.f32.mrb[0].mxu0
        %2448 = vmatprep.mubr.f32.mxu0 0.0
        %2449 = vmatmul.mubr.f32.gmra.mrb[0].mxu0 %v821
        %v2450 = vpop.f32.mrb[0].mxu0
        %v2451 = vadd.f32 0.0, %v2450
        %v2452 = vpop.f32.mrb[0].mxu0
        %2453 = vmatprep.mubr.f32.mxu0 0.0
        %2454 = vmatmul.mubr.f32.gmra.mrb[0].mxu0 %v823
        %v2455 = vpop.f32.mrb[0].mxu0
        %v2456 = vadd.f32 0.0, %v2455
        %v2457 = vpop.f32.mrb[0].mxu0
        %2458 = vmatprep.mubr.f32.mxu0 0.0
        %2459 = vmatmul.mubr.f32.gmra.mrb[0].mxu0 %v825
        %v2460 = vpop.f32.mrb[0].mxu0
        %v2461 = vadd.f32 0.0, %v2460
        %v2462 = vpop.f32.mrb[0].mxu0
        %2463 = vmatprep.mubr.f32.mxu0 0.0
        %2464 = vmatmul.mubr.f32.gmra.mrb[0].mxu0 %v827
        %v2465 = vpop.f32.mrb[0].mxu0
        %v2466 = vadd.f32 0.0, %v2465
        %v2467 = vpop.f32.mrb[0].mxu0
        %2468 = vmatprep.mubr.f32.mxu0 0.0
        %2469 = vmatmul.mubr.f32.gmra.mrb[0].mxu0 %v829
        %v2470 = vpop.f32.mrb[0].mxu0
        %v2471 = vadd.f32 0.0, %v2470
        %v2472 = vpop.f32.mrb[0].mxu0
        %2473 = vmatprep.mubr.f32.mxu0 0.0
        %2474 = vmatmul.mubr.f32.gmra.mrb[0].mxu0 %v831
        %v2475 = vpop.f32.mrb[0].mxu0
        %v2476 = vadd.f32 0.0, %v2475
        %v2477 = vpop.f32.mrb[0].mxu0
        %2478 = vmatprep.mubr.f32.mxu0 0.0
        %2479 = vmatmul.mubr.f32.gmra.mrb[0].mxu0 %v833
        %v2480 = vpop.f32.mrb[0].mxu0
        %v2481 = vadd.f32 0.0, %v2480
        %v2482 = vpop.f32.mrb[0].mxu0
        %2483 = vmatprep.mubr.f32.mxu0 0.0
        %2484 = vmatmul.mubr.f32.gmra.mrb[0].mxu0 %v835
        %v2485 = vpop.f32.mrb[0].mxu0
        %v2486 = vadd.f32 0.0, %v2485
        %v2487 = vpop.f32.mrb[0].mxu0
        %2488 = vmatprep.mubr.f32.mxu0 0.0
        %2489 = vmatmul.mubr.f32.gmra.mrb[0].mxu0 %v837
        %v2490 = vpop.f32.mrb[0].mxu0
        %v2491 = vadd.f32 0.0, %v2490
        %v2492 = vpop.f32.mrb[0].mxu0
        %2493 = vmatprep.mubr.f32.mxu0 0.0
        %2494 = vmatmul.mubr.f32.gmra.mrb[0].mxu0 %v1477
        %v2495 = vpop.f32.mrb[0].mxu0
        %v2496 = vadd.f32 0.0, %v2495
        %v2497 = vpop.f32.mrb[0].mxu0
        %2498 = vmatprep.mubr.f32.mxu0 0.0
        %2499 = vmatmul.mubr.f32.gmra.mrb[0].mxu0 %v1479
        %v2500 = vpop.f32.mrb[0].mxu0
        %v2501 = vadd.f32 0.0, %v2500
        %v2502 = vpop.f32.mrb[0].mxu0
        %2503 = vmatprep.mubr.f32.mxu0 0.0
        %2504 = vmatmul.mubr.f32.gmra.mrb[0].mxu0 %v775
        %v2505 = vpop.f32.mrb[0].mxu0
        %v2506 = vadd.f32 0.0, %v2505
        %v2507 = vpop.f32.mrb[0].mxu0
        %2508 = vmatprep.mubr.f32.mxu0 0.0
        %2509 = vmatmul.mubr.f32.gmra.mrb[0].mxu0 %v777
        %v2510 = vpop.f32.mrb[0].mxu0
        %v2511 = vadd.f32 0.0, %v2510
        %v2512 = vpop.f32.mrb[0].mxu0
        %2513 = vdwg.mxu0
        %v2514 = vadd.f32 %v2252, %v2356
        %v2515 = vadd.f32 %v2253, %v2361
        %v2516 = vadd.f32 %v2254, %v2366
        %v2517 = vadd.f32 %v2255, %v2371
        %v2518 = vadd.f32 %v2256, %v2376
        %v2519 = vadd.f32 %v2257, %v2381
        %v2520 = vadd.f32 %v2258, %v2386
        %v2521 = vadd.f32 %v2259, %v2391
        %v2522 = vadd.f32 %v2260, %v2396
        %v2523 = vadd.f32 %v2261, %v2401
        %v2524 = vadd.f32 %v2262, %v2406
        %v2525 = vadd.f32 %v2263, %v2411
        %v2526 = vadd.f32 %v2264, %v2416
        %v2527 = vadd.f32 %v2265, %v2421
        %v2528 = vadd.f32 %v2266, %v2426
        %v2529 = vadd.f32 %v2267, %v2431
        %v2530 = vadd.f32 %v2268, %v2436
        %v2531 = vadd.f32 %v2269, %v2441
        %v2532 = vadd.f32 %v2270, %v2446
        %v2533 = vadd.f32 %v2271, %v2451
        %v2534 = vadd.f32 %v2272, %v2456
        %v2535 = vadd.f32 %v2273, %v2461
        %v2536 = vadd.f32 %v2274, %v2466
        %v2537 = vadd.f32 %v2275, %v2471
        %v2538 = vadd.f32 %v2276, %v2476
        %v2539 = vadd.f32 %v2277, %v2481
        %v2540 = vadd.f32 %v2278, %v2486
        %v2541 = vadd.f32 %v2279, %v2491
        %v2542 = vadd.f32 %v2280, %v2496
        %v2543 = vadd.f32 %v2281, %v2501
        %v2544 = vadd.f32 %v2282, %v2506
        %v2545 = vadd.f32 %v2283, %v2511
        %s2546 = scalar_lea.vmem %s1, 28
        %v2547 = vld [vmem:[%s2546] sm:$0xf]
        %v2549 = vsel %vm546, %v2547, 0
        %2551 = vmatprep.subr.mxu0 0.0
        %2552 = vmatpush1.msra.mxu0 %v2549
        %2553 = vmatprep.subr.mxu0 0.0
        %2554 = vmatpush1.msra.mxu0 0.0
        %2555 = vmatprep.subr.mxu0 0.0
        %2556 = vmatpush1.msra.mxu0 0.0
        %2557 = vmatprep.subr.mxu0 0.0
        %2558 = vmatpush1.msra.mxu0 0.0
        %2559 = vmatprep.subr.mxu0 0.0
        %2560 = vmatpush1.msra.mxu0 0.0
        %2561 = vmatprep.subr.mxu0 0.0
        %2562 = vmatpush1.msra.mxu0 0.0
        %2563 = vmatprep.subr.mxu0 0.0
        %2564 = vmatpush1.msra.mxu0 0.0
        %2565 = vmatprep.subr.mxu0 0.0
        %2566 = vmatpush1.msra.mxu0 0.0
        %2567 = vmatprep.subr.mxu0 0.0
        %2568 = vmatpush1.msra.mxu0 0.0
        %2569 = vmatprep.subr.mxu0 0.0
        %2570 = vmatpush1.msra.mxu0 0.0
        %2571 = vmatprep.subr.mxu0 0.0
        %2572 = vmatpush1.msra.mxu0 0.0
        %2573 = vmatprep.subr.mxu0 0.0
        %2574 = vmatpush1.msra.mxu0 0.0
        %2575 = vmatprep.subr.mxu0 0.0
        %2576 = vmatpush1.msra.mxu0 0.0
        %2577 = vmatprep.subr.mxu0 0.0
        %2578 = vmatpush1.msra.mxu0 0.0
        %2579 = vmatprep.subr.mxu0 0.0
        %2580 = vmatpush1.msra.mxu0 0.0
        %2581 = vmatprep.subr.mxu0 0.0
        %2582 = vmatpush1.msra.mxu0 0.0
        %2583 = vmatprep.subr.mxu0 0.0
        %2584 = vmatpush1.msra.mxu0 0.0
        %2585 = vmatprep.subr.mxu0 0.0
        %2586 = vmatpush1.msra.mxu0 0.0
        %2587 = vmatprep.subr.mxu0 0.0
        %2588 = vmatpush1.msra.mxu0 0.0
        %2589 = vmatprep.subr.mxu0 0.0
        %2590 = vmatpush1.msra.mxu0 0.0
        %2591 = vmatprep.subr.mxu0 0.0
        %2592 = vmatpush1.msra.mxu0 0.0
        %2593 = vmatprep.subr.mxu0 0.0
        %2594 = vmatpush1.msra.mxu0 0.0
        %2595 = vmatprep.subr.mxu0 0.0
        %2596 = vmatpush1.msra.mxu0 0.0
        %2597 = vmatprep.subr.mxu0 0.0
        %2598 = vmatpush1.msra.mxu0 0.0
        %2599 = vmatprep.subr.mxu0 0.0
        %2600 = vmatpush1.msra.mxu0 0.0
        %2601 = vmatprep.subr.mxu0 0.0
        %2602 = vmatpush1.msra.mxu0 0.0
        %2603 = vmatprep.subr.mxu0 0.0
        %2604 = vmatpush1.msra.mxu0 0.0
        %2605 = vmatprep.subr.mxu0 0.0
        %2606 = vmatpush1.msra.mxu0 0.0
        %2607 = vmatprep.subr.mxu0 0.0
        %2608 = vmatpush1.msra.mxu0 0.0
        %2609 = vmatprep.subr.mxu0 0.0
        %2610 = vmatpush1.msra.mxu0 0.0
        %2611 = vmatprep.subr.mxu0 0.0
        %2612 = vmatpush1.msra.mxu0 0.0
        %2613 = vmatprep.subr.mxu0 0.0
        %2614 = vmatpush1.msra.mxu0 0.0
        %2615 = vmatprep.mubr.f32.mxu0 0.0
        %2616 = vmatmul.mubr.f32.gmra.mrb[0].mxu0 %v490
        %v2617 = vpop.f32.mrb[0].mxu0
        %v2618 = vadd.f32 0.0, %v2617
        %v2619 = vpop.f32.mrb[0].mxu0
        %2620 = vmatprep.mubr.f32.mxu0 0.0
        %2621 = vmatmul.mubr.f32.gmra.mrb[0].mxu0 %v492
        %v2622 = vpop.f32.mrb[0].mxu0
        %v2623 = vadd.f32 0.0, %v2622
        %v2624 = vpop.f32.mrb[0].mxu0
        %2625 = vmatprep.mubr.f32.mxu0 0.0
        %2626 = vmatmul.mubr.f32.gmra.mrb[0].mxu0 %v494
        %v2627 = vpop.f32.mrb[0].mxu0
        %v2628 = vadd.f32 0.0, %v2627
        %v2629 = vpop.f32.mrb[0].mxu0
        %2630 = vmatprep.mubr.f32.mxu0 0.0
        %2631 = vmatmul.mubr.f32.gmra.mrb[0].mxu0 %v496
        %v2632 = vpop.f32.mrb[0].mxu0
        %v2633 = vadd.f32 0.0, %v2632
        %v2634 = vpop.f32.mrb[0].mxu0
        %2635 = vmatprep.mubr.f32.mxu0 0.0
        %2636 = vmatmul.mubr.f32.gmra.mrb[0].mxu0 %v498
        %v2637 = vpop.f32.mrb[0].mxu0
        %v2638 = vadd.f32 0.0, %v2637
        %v2639 = vpop.f32.mrb[0].mxu0
        %2640 = vmatprep.mubr.f32.mxu0 0.0
        %2641 = vmatmul.mubr.f32.gmra.mrb[0].mxu0 %v500
        %v2642 = vpop.f32.mrb[0].mxu0
        %v2643 = vadd.f32 0.0, %v2642
        %v2644 = vpop.f32.mrb[0].mxu0
        %2645 = vmatprep.mubr.f32.mxu0 0.0
        %2646 = vmatmul.mubr.f32.gmra.mrb[0].mxu0 %v502
        %v2647 = vpop.f32.mrb[0].mxu0
        %v2648 = vadd.f32 0.0, %v2647
        %v2649 = vpop.f32.mrb[0].mxu0
        %2650 = vmatprep.mubr.f32.mxu0 0.0
        %2651 = vmatmul.mubr.f32.gmra.mrb[0].mxu0 %v504
        %v2652 = vpop.f32.mrb[0].mxu0
        %v2653 = vadd.f32 0.0, %v2652
        %v2654 = vpop.f32.mrb[0].mxu0
        %2655 = vmatprep.mubr.f32.mxu0 0.0
        %2656 = vmatmul.mubr.f32.gmra.mrb[0].mxu0 %v506
        %v2657 = vpop.f32.mrb[0].mxu0
        %v2658 = vadd.f32 0.0, %v2657
        %v2659 = vpop.f32.mrb[0].mxu0
        %2660 = vmatprep.mubr.f32.mxu0 0.0
        %2661 = vmatmul.mubr.f32.gmra.mrb[0].mxu0 %v508
        %v2662 = vpop.f32.mrb[0].mxu0
        %v2663 = vadd.f32 0.0, %v2662
        %v2664 = vpop.f32.mrb[0].mxu0
        %2665 = vmatprep.mubr.f32.mxu0 0.0
        %2666 = vmatmul.mubr.f32.gmra.mrb[0].mxu0 %v510
        %v2667 = vpop.f32.mrb[0].mxu0
        %v2668 = vadd.f32 0.0, %v2667
        %v2669 = vpop.f32.mrb[0].mxu0
        %2670 = vmatprep.mubr.f32.mxu0 0.0
        %2671 = vmatmul.mubr.f32.gmra.mrb[0].mxu0 %v512
        %v2672 = vpop.f32.mrb[0].mxu0
        %v2673 = vadd.f32 0.0, %v2672
        %v2674 = vpop.f32.mrb[0].mxu0
        %2675 = vmatprep.mubr.f32.mxu0 0.0
        %2676 = vmatmul.mubr.f32.gmra.mrb[0].mxu0 %v514
        %v2677 = vpop.f32.mrb[0].mxu0
        %v2678 = vadd.f32 0.0, %v2677
        %v2679 = vpop.f32.mrb[0].mxu0
        %2680 = vmatprep.mubr.f32.mxu0 0.0
        %2681 = vmatmul.mubr.f32.gmra.mrb[0].mxu0 %v516
        %v2682 = vpop.f32.mrb[0].mxu0
        %v2683 = vadd.f32 0.0, %v2682
        %v2684 = vpop.f32.mrb[0].mxu0
        %2685 = vmatprep.mubr.f32.mxu0 0.0
        %2686 = vmatmul.mubr.f32.gmra.mrb[0].mxu0 %v518
        %v2687 = vpop.f32.mrb[0].mxu0
        %v2688 = vadd.f32 0.0, %v2687
        %v2689 = vpop.f32.mrb[0].mxu0
        %2690 = vmatprep.mubr.f32.mxu0 0.0
        %2691 = vmatmul.mubr.f32.gmra.mrb[0].mxu0 %v520
        %v2692 = vpop.f32.mrb[0].mxu0
        %v2693 = vadd.f32 0.0, %v2692
        %v2694 = vpop.f32.mrb[0].mxu0
        %2695 = vmatprep.mubr.f32.mxu0 0.0
        %2696 = vmatmul.mubr.f32.gmra.mrb[0].mxu0 %v522
        %v2697 = vpop.f32.mrb[0].mxu0
        %v2698 = vadd.f32 0.0, %v2697
        %v2699 = vpop.f32.mrb[0].mxu0
        %2700 = vmatprep.mubr.f32.mxu0 0.0
        %2701 = vmatmul.mubr.f32.gmra.mrb[0].mxu0 %v524
        %v2702 = vpop.f32.mrb[0].mxu0
        %v2703 = vadd.f32 0.0, %v2702
        %v2704 = vpop.f32.mrb[0].mxu0
        %2705 = vmatprep.mubr.f32.mxu0 0.0
        %2706 = vmatmul.mubr.f32.gmra.mrb[0].mxu0 %v526
        %v2707 = vpop.f32.mrb[0].mxu0
        %v2708 = vadd.f32 0.0, %v2707
        %v2709 = vpop.f32.mrb[0].mxu0
        %2710 = vmatprep.mubr.f32.mxu0 0.0
        %2711 = vmatmul.mubr.f32.gmra.mrb[0].mxu0 %v528
        %v2712 = vpop.f32.mrb[0].mxu0
        %v2713 = vadd.f32 0.0, %v2712
        %v2714 = vpop.f32.mrb[0].mxu0
        %2715 = vmatprep.mubr.f32.mxu0 0.0
        %2716 = vmatmul.mubr.f32.gmra.mrb[0].mxu0 %v530
        %v2717 = vpop.f32.mrb[0].mxu0
        %v2718 = vadd.f32 0.0, %v2717
        %v2719 = vpop.f32.mrb[0].mxu0
        %2720 = vmatprep.mubr.f32.mxu0 0.0
        %2721 = vmatmul.mubr.f32.gmra.mrb[0].mxu0 %v532
        %v2722 = vpop.f32.mrb[0].mxu0
        %v2723 = vadd.f32 0.0, %v2722
        %v2724 = vpop.f32.mrb[0].mxu0
        %2725 = vmatprep.mubr.f32.mxu0 0.0
        %2726 = vmatmul.mubr.f32.gmra.mrb[0].mxu0 %v534
        %v2727 = vpop.f32.mrb[0].mxu0
        %v2728 = vadd.f32 0.0, %v2727
        %v2729 = vpop.f32.mrb[0].mxu0
        %2730 = vmatprep.mubr.f32.mxu0 0.0
        %2731 = vmatmul.mubr.f32.gmra.mrb[0].mxu0 %v536
        %v2732 = vpop.f32.mrb[0].mxu0
        %v2733 = vadd.f32 0.0, %v2732
        %v2734 = vpop.f32.mrb[0].mxu0
        %2735 = vmatprep.mubr.f32.mxu0 0.0
        %2736 = vmatmul.mubr.f32.gmra.mrb[0].mxu0 %v538
        %v2737 = vpop.f32.mrb[0].mxu0
        %v2738 = vadd.f32 0.0, %v2737
        %v2739 = vpop.f32.mrb[0].mxu0
        %2740 = vmatprep.mubr.f32.mxu0 0.0
        %2741 = vmatmul.mubr.f32.gmra.mrb[0].mxu0 %v540
        %v2742 = vpop.f32.mrb[0].mxu0
        %v2743 = vadd.f32 0.0, %v2742
        %v2744 = vpop.f32.mrb[0].mxu0
        %2745 = vmatprep.mubr.f32.mxu0 0.0
        %2746 = vmatmul.mubr.f32.gmra.mrb[0].mxu0 %v542
        %v2747 = vpop.f32.mrb[0].mxu0
        %v2748 = vadd.f32 0.0, %v2747
        %v2749 = vpop.f32.mrb[0].mxu0
        %2750 = vmatprep.mubr.f32.mxu0 0.0
        %2751 = vmatmul.mubr.f32.gmra.mrb[0].mxu0 %v544
        %v2752 = vpop.f32.mrb[0].mxu0
        %v2753 = vadd.f32 0.0, %v2752
        %v2754 = vpop.f32.mrb[0].mxu0
        %2755 = vmatprep.mubr.f32.mxu0 0.0
        %2756 = vmatmul.mubr.f32.gmra.mrb[0].mxu0 %v1749
        %v2757 = vpop.f32.mrb[0].mxu0
        %v2758 = vadd.f32 0.0, %v2757
        %v2759 = vpop.f32.mrb[0].mxu0
        %2760 = vmatprep.mubr.f32.mxu0 0.0
        %2761 = vmatmul.mubr.f32.gmra.mrb[0].mxu0 %v1751
        %v2762 = vpop.f32.mrb[0].mxu0
        %v2763 = vadd.f32 0.0, %v2762
        %v2764 = vpop.f32.mrb[0].mxu0
        %2765 = vmatprep.mubr.f32.mxu0 0.0
        %2766 = vmatmul.mubr.f32.gmra.mrb[0].mxu0 %v482
        %v2767 = vpop.f32.mrb[0].mxu0
        %v2768 = vadd.f32 0.0, %v2767
        %v2769 = vpop.f32.mrb[0].mxu0
        %2770 = vmatprep.mubr.f32.mxu0 0.0
        %2771 = vmatmul.mubr.f32.gmra.mrb[0].mxu0 %v484
        %v2772 = vpop.f32.mrb[0].mxu0
        %v2773 = vadd.f32 0.0, %v2772
        %v2774 = vpop.f32.mrb[0].mxu0
        %2775 = vdwg.mxu0
        %v2776 = vadd.f32 %v2514, %v2618
        %v2777 = vadd.f32 %v2515, %v2623
        %v2778 = vadd.f32 %v2516, %v2628
        %v2779 = vadd.f32 %v2517, %v2633
        %v2780 = vadd.f32 %v2518, %v2638
        %v2781 = vadd.f32 %v2519, %v2643
        %v2782 = vadd.f32 %v2520, %v2648
        %v2783 = vadd.f32 %v2521, %v2653
        %v2784 = vadd.f32 %v2522, %v2658
        %v2785 = vadd.f32 %v2523, %v2663
        %v2786 = vadd.f32 %v2524, %v2668
        %v2787 = vadd.f32 %v2525, %v2673
        %v2788 = vadd.f32 %v2526, %v2678
        %v2789 = vadd.f32 %v2527, %v2683
        %v2790 = vadd.f32 %v2528, %v2688
        %v2791 = vadd.f32 %v2529, %v2693
        %v2792 = vadd.f32 %v2530, %v2698
        %v2793 = vadd.f32 %v2531, %v2703
        %v2794 = vadd.f32 %v2532, %v2708
        %v2795 = vadd.f32 %v2533, %v2713
        %v2796 = vadd.f32 %v2534, %v2718
        %v2797 = vadd.f32 %v2535, %v2723
        %v2798 = vadd.f32 %v2536, %v2728
        %v2799 = vadd.f32 %v2537, %v2733
        %v2800 = vadd.f32 %v2538, %v2738
        %v2801 = vadd.f32 %v2539, %v2743
        %v2802 = vadd.f32 %v2540, %v2748
        %v2803 = vadd.f32 %v2541, %v2753
        %v2804 = vadd.f32 %v2542, %v2758
        %v2805 = vadd.f32 %v2543, %v2763
        %v2806 = vadd.f32 %v2544, %v2768
        %v2807 = vadd.f32 %v2545, %v2773
        %s2808 = scalar_lea.vmem %s1, 32
        %v2809 = vld [vmem:[%s2808] sm:$0xf]
        %v2811 = vsel %vm546, %v2809, 0
        %2813 = vmatprep.subr.mxu0 0.0
        %2814 = vmatpush1.msra.mxu0 %v2811
        %2815 = vmatprep.subr.mxu0 0.0
        %2816 = vmatpush1.msra.mxu0 0.0
        %2817 = vmatprep.subr.mxu0 0.0
        %2818 = vmatpush1.msra.mxu0 0.0
        %2819 = vmatprep.subr.mxu0 0.0
        %2820 = vmatpush1.msra.mxu0 0.0
        %2821 = vmatprep.subr.mxu0 0.0
        %2822 = vmatpush1.msra.mxu0 0.0
        %2823 = vmatprep.subr.mxu0 0.0
        %2824 = vmatpush1.msra.mxu0 0.0
        %2825 = vmatprep.subr.mxu0 0.0
        %2826 = vmatpush1.msra.mxu0 0.0
        %2827 = vmatprep.subr.mxu0 0.0
        %2828 = vmatpush1.msra.mxu0 0.0
        %2829 = vmatprep.subr.mxu0 0.0
        %2830 = vmatpush1.msra.mxu0 0.0
        %2831 = vmatprep.subr.mxu0 0.0
        %2832 = vmatpush1.msra.mxu0 0.0
        %2833 = vmatprep.subr.mxu0 0.0
        %2834 = vmatpush1.msra.mxu0 0.0
        %2835 = vmatprep.subr.mxu0 0.0
        %2836 = vmatpush1.msra.mxu0 0.0
        %2837 = vmatprep.subr.mxu0 0.0
        %2838 = vmatpush1.msra.mxu0 0.0
        %2839 = vmatprep.subr.mxu0 0.0
        %2840 = vmatpush1.msra.mxu0 0.0
        %2841 = vmatprep.subr.mxu0 0.0
        %2842 = vmatpush1.msra.mxu0 0.0
        %2843 = vmatprep.subr.mxu0 0.0
        %2844 = vmatpush1.msra.mxu0 0.0
        %2845 = vmatprep.subr.mxu0 0.0
        %2846 = vmatpush1.msra.mxu0 0.0
        %2847 = vmatprep.subr.mxu0 0.0
        %2848 = vmatpush1.msra.mxu0 0.0
        %2849 = vmatprep.subr.mxu0 0.0
        %2850 = vmatpush1.msra.mxu0 0.0
        %2851 = vmatprep.subr.mxu0 0.0
        %2852 = vmatpush1.msra.mxu0 0.0
        %2853 = vmatprep.subr.mxu0 0.0
        %2854 = vmatpush1.msra.mxu0 0.0
        %2855 = vmatprep.subr.mxu0 0.0
        %2856 = vmatpush1.msra.mxu0 0.0
        %2857 = vmatprep.subr.mxu0 0.0
        %2858 = vmatpush1.msra.mxu0 0.0
        %2859 = vmatprep.subr.mxu0 0.0
        %2860 = vmatpush1.msra.mxu0 0.0
        %2861 = vmatprep.subr.mxu0 0.0
        %2862 = vmatpush1.msra.mxu0 0.0
        %2863 = vmatprep.subr.mxu0 0.0
        %2864 = vmatpush1.msra.mxu0 0.0
        %2865 = vmatprep.subr.mxu0 0.0
        %2866 = vmatpush1.msra.mxu0 0.0
        %2867 = vmatprep.subr.mxu0 0.0
        %2868 = vmatpush1.msra.mxu0 0.0
        %2869 = vmatprep.subr.mxu0 0.0
        %2870 = vmatpush1.msra.mxu0 0.0
        %2871 = vmatprep.subr.mxu0 0.0
        %2872 = vmatpush1.msra.mxu0 0.0
        %2873 = vmatprep.subr.mxu0 0.0
        %2874 = vmatpush1.msra.mxu0 0.0
        %2875 = vmatprep.subr.mxu0 0.0
        %2876 = vmatpush1.msra.mxu0 0.0
        %2877 = vmatprep.mubr.f32.mxu0 0.0
        %2878 = vmatmul.mubr.f32.gmra.mrb[0].mxu0 %v1158
        %v2879 = vpop.f32.mrb[0].mxu0
        %v2880 = vadd.f32 0.0, %v2879
        %v2881 = vpop.f32.mrb[0].mxu0
        %2882 = vmatprep.mubr.f32.mxu0 0.0
        %2883 = vmatmul.mubr.f32.gmra.mrb[0].mxu0 %v1160
        %v2884 = vpop.f32.mrb[0].mxu0
        %v2885 = vadd.f32 0.0, %v2884
        %v2886 = vpop.f32.mrb[0].mxu0
        %2887 = vmatprep.mubr.f32.mxu0 0.0
        %2888 = vmatmul.mubr.f32.gmra.mrb[0].mxu0 %v1162
        %v2889 = vpop.f32.mrb[0].mxu0
        %v2890 = vadd.f32 0.0, %v2889
        %v2891 = vpop.f32.mrb[0].mxu0
        %2892 = vmatprep.mubr.f32.mxu0 0.0
        %2893 = vmatmul.mubr.f32.gmra.mrb[0].mxu0 %v1164
        %v2894 = vpop.f32.mrb[0].mxu0
        %v2895 = vadd.f32 0.0, %v2894
        %v2896 = vpop.f32.mrb[0].mxu0
        %2897 = vmatprep.mubr.f32.mxu0 0.0
        %2898 = vmatmul.mubr.f32.gmra.mrb[0].mxu0 %v1166
        %v2899 = vpop.f32.mrb[0].mxu0
        %v2900 = vadd.f32 0.0, %v2899
        %v2901 = vpop.f32.mrb[0].mxu0
        %2902 = vmatprep.mubr.f32.mxu0 0.0
        %2903 = vmatmul.mubr.f32.gmra.mrb[0].mxu0 %v1168
        %v2904 = vpop.f32.mrb[0].mxu0
        %v2905 = vadd.f32 0.0, %v2904
        %v2906 = vpop.f32.mrb[0].mxu0
        %2907 = vmatprep.mubr.f32.mxu0 0.0
        %2908 = vmatmul.mubr.f32.gmra.mrb[0].mxu0 %v1170
        %v2909 = vpop.f32.mrb[0].mxu0
        %v2910 = vadd.f32 0.0, %v2909
        %v2911 = vpop.f32.mrb[0].mxu0
        %2912 = vmatprep.mubr.f32.mxu0 0.0
        %2913 = vmatmul.mubr.f32.gmra.mrb[0].mxu0 %v1172
        %v2914 = vpop.f32.mrb[0].mxu0
        %v2915 = vadd.f32 0.0, %v2914
        %v2916 = vpop.f32.mrb[0].mxu0
        %2917 = vmatprep.mubr.f32.mxu0 0.0
        %2918 = vmatmul.mubr.f32.gmra.mrb[0].mxu0 %v1174
        %v2919 = vpop.f32.mrb[0].mxu0
        %v2920 = vadd.f32 0.0, %v2919
        %v2921 = vpop.f32.mrb[0].mxu0
        %2922 = vmatprep.mubr.f32.mxu0 0.0
        %2923 = vmatmul.mubr.f32.gmra.mrb[0].mxu0 %v1176
        %v2924 = vpop.f32.mrb[0].mxu0
        %v2925 = vadd.f32 0.0, %v2924
        %v2926 = vpop.f32.mrb[0].mxu0
        %2927 = vmatprep.mubr.f32.mxu0 0.0
        %2928 = vmatmul.mubr.f32.gmra.mrb[0].mxu0 %v1178
        %v2929 = vpop.f32.mrb[0].mxu0
        %v2930 = vadd.f32 0.0, %v2929
        %v2931 = vpop.f32.mrb[0].mxu0
        %2932 = vmatprep.mubr.f32.mxu0 0.0
        %2933 = vmatmul.mubr.f32.gmra.mrb[0].mxu0 %v1180
        %v2934 = vpop.f32.mrb[0].mxu0
        %v2935 = vadd.f32 0.0, %v2934
        %v2936 = vpop.f32.mrb[0].mxu0
        %2937 = vmatprep.mubr.f32.mxu0 0.0
        %2938 = vmatmul.mubr.f32.gmra.mrb[0].mxu0 %v1182
        %v2939 = vpop.f32.mrb[0].mxu0
        %v2940 = vadd.f32 0.0, %v2939
        %v2941 = vpop.f32.mrb[0].mxu0
        %2942 = vmatprep.mubr.f32.mxu0 0.0
        %2943 = vmatmul.mubr.f32.gmra.mrb[0].mxu0 %v1184
        %v2944 = vpop.f32.mrb[0].mxu0
        %v2945 = vadd.f32 0.0, %v2944
        %v2946 = vpop.f32.mrb[0].mxu0
        %2947 = vmatprep.mubr.f32.mxu0 0.0
        %2948 = vmatmul.mubr.f32.gmra.mrb[0].mxu0 %v1186
        %v2949 = vpop.f32.mrb[0].mxu0
        %v2950 = vadd.f32 0.0, %v2949
        %v2951 = vpop.f32.mrb[0].mxu0
        %2952 = vmatprep.mubr.f32.mxu0 0.0
        %2953 = vmatmul.mubr.f32.gmra.mrb[0].mxu0 %v1188
        %v2954 = vpop.f32.mrb[0].mxu0
        %v2955 = vadd.f32 0.0, %v2954
        %v2956 = vpop.f32.mrb[0].mxu0
        %2957 = vmatprep.mubr.f32.mxu0 0.0
        %2958 = vmatmul.mubr.f32.gmra.mrb[0].mxu0 %v1190
        %v2959 = vpop.f32.mrb[0].mxu0
        %v2960 = vadd.f32 0.0, %v2959
        %v2961 = vpop.f32.mrb[0].mxu0
        %2962 = vmatprep.mubr.f32.mxu0 0.0
        %2963 = vmatmul.mubr.f32.gmra.mrb[0].mxu0 %v1192
        %v2964 = vpop.f32.mrb[0].mxu0
        %v2965 = vadd.f32 0.0, %v2964
        %v2966 = vpop.f32.mrb[0].mxu0
        %2967 = vmatprep.mubr.f32.mxu0 0.0
        %2968 = vmatmul.mubr.f32.gmra.mrb[0].mxu0 %v1194
        %v2969 = vpop.f32.mrb[0].mxu0
        %v2970 = vadd.f32 0.0, %v2969
        %v2971 = vpop.f32.mrb[0].mxu0
        %2972 = vmatprep.mubr.f32.mxu0 0.0
        %2973 = vmatmul.mubr.f32.gmra.mrb[0].mxu0 %v1196
        %v2974 = vpop.f32.mrb[0].mxu0
        %v2975 = vadd.f32 0.0, %v2974
        %v2976 = vpop.f32.mrb[0].mxu0
        %2977 = vmatprep.mubr.f32.mxu0 0.0
        %2978 = vmatmul.mubr.f32.gmra.mrb[0].mxu0 %v1198
        %v2979 = vpop.f32.mrb[0].mxu0
        %v2980 = vadd.f32 0.0, %v2979
        %v2981 = vpop.f32.mrb[0].mxu0
        %2982 = vmatprep.mubr.f32.mxu0 0.0
        %2983 = vmatmul.mubr.f32.gmra.mrb[0].mxu0 %v1200
        %v2984 = vpop.f32.mrb[0].mxu0
        %v2985 = vadd.f32 0.0, %v2984
        %v2986 = vpop.f32.mrb[0].mxu0
        %2987 = vmatprep.mubr.f32.mxu0 0.0
        %2988 = vmatmul.mubr.f32.gmra.mrb[0].mxu0 %v1202
        %v2989 = vpop.f32.mrb[0].mxu0
        %v2990 = vadd.f32 0.0, %v2989
        %v2991 = vpop.f32.mrb[0].mxu0
        %2992 = vmatprep.mubr.f32.mxu0 0.0
        %2993 = vmatmul.mubr.f32.gmra.mrb[0].mxu0 %v1204
        %v2994 = vpop.f32.mrb[0].mxu0
        %v2995 = vadd.f32 0.0, %v2994
        %v2996 = vpop.f32.mrb[0].mxu0
        %2997 = vmatprep.mubr.f32.mxu0 0.0
        %2998 = vmatmul.mubr.f32.gmra.mrb[0].mxu0 %v1206
        %v2999 = vpop.f32.mrb[0].mxu0
        %v3000 = vadd.f32 0.0, %v2999
        %v3001 = vpop.f32.mrb[0].mxu0
        %3002 = vmatprep.mubr.f32.mxu0 0.0
        %3003 = vmatmul.mubr.f32.gmra.mrb[0].mxu0 %v1208
        %v3004 = vpop.f32.mrb[0].mxu0
        %v3005 = vadd.f32 0.0, %v3004
        %v3006 = vpop.f32.mrb[0].mxu0
        %3007 = vmatprep.mubr.f32.mxu0 0.0
        %3008 = vmatmul.mubr.f32.gmra.mrb[0].mxu0 %v1210
        %v3009 = vpop.f32.mrb[0].mxu0
        %v3010 = vadd.f32 0.0, %v3009
        %v3011 = vpop.f32.mrb[0].mxu0
        %3012 = vmatprep.mubr.f32.mxu0 0.0
        %3013 = vmatmul.mubr.f32.gmra.mrb[0].mxu0 %v1212
        %v3014 = vpop.f32.mrb[0].mxu0
        %v3015 = vadd.f32 0.0, %v3014
        %v3016 = vpop.f32.mrb[0].mxu0
        %3017 = vmatprep.mubr.f32.mxu0 0.0
        %3018 = vmatmul.mubr.f32.gmra.mrb[0].mxu0 %v2020
        %v3019 = vpop.f32.mrb[0].mxu0
        %v3020 = vadd.f32 0.0, %v3019
        %v3021 = vpop.f32.mrb[0].mxu0
        %3022 = vmatprep.mubr.f32.mxu0 0.0
        %3023 = vmatmul.mubr.f32.gmra.mrb[0].mxu0 %v2022
        %v3024 = vpop.f32.mrb[0].mxu0
        %v3025 = vadd.f32 0.0, %v3024
        %v3026 = vpop.f32.mrb[0].mxu0
        %3027 = vmatprep.mubr.f32.mxu0 0.0
        %3028 = vmatmul.mubr.f32.gmra.mrb[0].mxu0 %v1150
        %v3029 = vpop.f32.mrb[0].mxu0
        %v3030 = vadd.f32 0.0, %v3029
        %v3031 = vpop.f32.mrb[0].mxu0
        %3032 = vmatprep.mubr.f32.mxu0 0.0
        %3033 = vmatmul.mubr.f32.gmra.mrb[0].mxu0 %v1152
        %v3034 = vpop.f32.mrb[0].mxu0
        %v3035 = vadd.f32 0.0, %v3034
        %v3036 = vpop.f32.mrb[0].mxu0
        %3037 = vdwg.mxu0
        %v3038 = vadd.f32 %v2776, %v2880
        %v3039 = vadd.f32 %v2777, %v2885
        %v3040 = vadd.f32 %v2778, %v2890
        %v3041 = vadd.f32 %v2779, %v2895
        %v3042 = vadd.f32 %v2780, %v2900
        %v3043 = vadd.f32 %v2781, %v2905
        %v3044 = vadd.f32 %v2782, %v2910
        %v3045 = vadd.f32 %v2783, %v2915
        %v3046 = vadd.f32 %v2784, %v2920
        %v3047 = vadd.f32 %v2785, %v2925
        %v3048 = vadd.f32 %v2786, %v2930
        %v3049 = vadd.f32 %v2787, %v2935
        %v3050 = vadd.f32 %v2788, %v2940
        %v3051 = vadd.f32 %v2789, %v2945
        %v3052 = vadd.f32 %v2790, %v2950
        %v3053 = vadd.f32 %v2791, %v2955
        %v3054 = vadd.f32 %v2792, %v2960
        %v3055 = vadd.f32 %v2793, %v2965
        %v3056 = vadd.f32 %v2794, %v2970
        %v3057 = vadd.f32 %v2795, %v2975
        %v3058 = vadd.f32 %v2796, %v2980
        %v3059 = vadd.f32 %v2797, %v2985
        %v3060 = vadd.f32 %v2798, %v2990
        %v3061 = vadd.f32 %v2799, %v2995
        %v3062 = vadd.f32 %v2800, %v3000
        %v3063 = vadd.f32 %v2801, %v3005
        %v3064 = vadd.f32 %v2802, %v3010
        %v3065 = vadd.f32 %v2803, %v3015
        %v3066 = vadd.f32 %v2804, %v3020
        %v3067 = vadd.f32 %v2805, %v3025
        %v3068 = vadd.f32 %v2806, %v3030
        %v3069 = vadd.f32 %v2807, %v3035
        %v3070 = vsel %vm481, %v3038, 0.0
        %v3071 = vsel %vm481, %v3039, 0.0
        %v3072 = vadd.f32 %v3070, %v3071
        %v3073 = vsel %vm481, %v3040, 0.0
        %v3074 = vadd.f32 %v3072, %v3073
        %v3075 = vsel %vm481, %v3041, 0.0
        %v3076 = vadd.f32 %v3074, %v3075
        %v3077 = vsel %vm481, %v3042, 0.0
        %v3078 = vadd.f32 %v3076, %v3077
        %v3079 = vsel %vm481, %v3043, 0.0
        %v3080 = vadd.f32 %v3078, %v3079
        %v3081 = vsel %vm481, %v3044, 0.0
        %v3082 = vadd.f32 %v3080, %v3081
        %v3083 = vsel %vm481, %v3045, 0.0
        %v3084 = vadd.f32 %v3082, %v3083
        %v3085 = vsel %vm481, %v3046, 0.0
        %v3086 = vadd.f32 %v3084, %v3085
        %v3087 = vsel %vm481, %v3047, 0.0
        %v3088 = vadd.f32 %v3086, %v3087
        %v3089 = vsel %vm481, %v3048, 0.0
        %v3090 = vadd.f32 %v3088, %v3089
        %v3091 = vsel %vm481, %v3049, 0.0
        %v3092 = vadd.f32 %v3090, %v3091
        %v3093 = vsel %vm481, %v3050, 0.0
        %v3094 = vadd.f32 %v3092, %v3093
        %v3095 = vsel %vm481, %v3051, 0.0
        %v3096 = vadd.f32 %v3094, %v3095
        %v3097 = vsel %vm481, %v3052, 0.0
        %v3098 = vadd.f32 %v3096, %v3097
        %v3099 = vsel %vm481, %v3053, 0.0
        %v3100 = vadd.f32 %v3098, %v3099
        %v3101 = vsel %vm481, %v3054, 0.0
        %v3102 = vadd.f32 %v3100, %v3101
        %v3103 = vsel %vm481, %v3055, 0.0
        %v3104 = vadd.f32 %v3102, %v3103
        %v3105 = vsel %vm481, %v3056, 0.0
        %v3106 = vadd.f32 %v3104, %v3105
        %v3107 = vsel %vm481, %v3057, 0.0
        %v3108 = vadd.f32 %v3106, %v3107
        %v3109 = vsel %vm481, %v3058, 0.0
        %v3110 = vadd.f32 %v3108, %v3109
        %v3111 = vsel %vm481, %v3059, 0.0
        %v3112 = vadd.f32 %v3110, %v3111
        %v3113 = vsel %vm481, %v3060, 0.0
        %v3114 = vadd.f32 %v3112, %v3113
        %v3115 = vsel %vm481, %v3061, 0.0
        %v3116 = vadd.f32 %v3114, %v3115
        %v3117 = vsel %vm481, %v3062, 0.0
        %v3118 = vadd.f32 %v3116, %v3117
        %v3119 = vsel %vm481, %v3063, 0.0
        %v3120 = vadd.f32 %v3118, %v3119
        %v3121 = vsel %vm481, %v3064, 0.0
        %v3122 = vadd.f32 %v3120, %v3121
        %v3123 = vsel %vm481, %v3065, 0.0
        %v3124 = vadd.f32 %v3122, %v3123
        %v3125 = vsel %vm481, %v3066, 0.0
        %v3126 = vadd.f32 %v3124, %v3125
        %v3127 = vsel %vm481, %v3067, 0.0
        %v3128 = vadd.f32 %v3126, %v3127
        %v3129 = vsel %vm481, %v3068, 0.0
        %v3130 = vadd.f32 %v3128, %v3129
        %v3131 = vsel %vm481, %v3069, 0.0
        %v3132 = vadd.f32 %v3130, %v3131
        %v3133 = vrot.slane %v3132, 4
        %v3134 = vadd.f32 %v3132, %v3133
        %v3135 = vrot.slane %v3134, 2
        %v3136 = vadd.f32 %v3134, %v3135
        %v3137 = vrot.slane %v3136, 1
        %v3138 = vadd.f32 %v3136, %v3137
        %v3139 = vmul.f32 %v3138, 0.00390625
        %v3140 = vsub.f32 %v3038, %v3139
        %v3141 = vsub.f32 %v3039, %v3139
        %v3142 = vsub.f32 %v3040, %v3139
        %v3143 = vsub.f32 %v3041, %v3139
        %v3144 = vsub.f32 %v3042, %v3139
        %v3145 = vsub.f32 %v3043, %v3139
        %v3146 = vsub.f32 %v3044, %v3139
        %v3147 = vsub.f32 %v3045, %v3139
        %v3148 = vsub.f32 %v3046, %v3139
        %v3149 = vsub.f32 %v3047, %v3139
        %v3150 = vsub.f32 %v3048, %v3139
        %v3151 = vsub.f32 %v3049, %v3139
        %v3152 = vsub.f32 %v3050, %v3139
        %v3153 = vsub.f32 %v3051, %v3139
        %v3154 = vsub.f32 %v3052, %v3139
        %v3155 = vsub.f32 %v3053, %v3139
        %v3156 = vsub.f32 %v3054, %v3139
        %v3157 = vsub.f32 %v3055, %v3139
        %v3158 = vsub.f32 %v3056, %v3139
        %v3159 = vsub.f32 %v3057, %v3139
        %v3160 = vsub.f32 %v3058, %v3139
        %v3161 = vsub.f32 %v3059, %v3139
        %v3162 = vsub.f32 %v3060, %v3139
        %v3163 = vsub.f32 %v3061, %v3139
        %v3164 = vsub.f32 %v3062, %v3139
        %v3165 = vsub.f32 %v3063, %v3139
        %v3166 = vsub.f32 %v3064, %v3139
        %v3167 = vsub.f32 %v3065, %v3139
        %v3168 = vsub.f32 %v3066, %v3139
        %v3169 = vsub.f32 %v3067, %v3139
        %v3170 = vsub.f32 %v3068, %v3139
        %v3171 = vsub.f32 %v3069, %v3139
        %v3172 = vmul.f32 %v3140, %v3140
        %v3173 = vmul.f32 %v3141, %v3141
        %v3174 = vmul.f32 %v3142, %v3142
        %v3175 = vmul.f32 %v3143, %v3143
        %v3176 = vmul.f32 %v3144, %v3144
        %v3177 = vmul.f32 %v3145, %v3145
        %v3178 = vmul.f32 %v3146, %v3146
        %v3179 = vmul.f32 %v3147, %v3147
        %v3180 = vmul.f32 %v3148, %v3148
        %v3181 = vmul.f32 %v3149, %v3149
        %v3182 = vmul.f32 %v3150, %v3150
        %v3183 = vmul.f32 %v3151, %v3151
        %v3184 = vmul.f32 %v3152, %v3152
        %v3185 = vmul.f32 %v3153, %v3153
        %v3186 = vmul.f32 %v3154, %v3154
        %v3187 = vmul.f32 %v3155, %v3155
        %v3188 = vmul.f32 %v3156, %v3156
        %v3189 = vmul.f32 %v3157, %v3157
        %v3190 = vmul.f32 %v3158, %v3158
        %v3191 = vmul.f32 %v3159, %v3159
        %v3192 = vmul.f32 %v3160, %v3160
        %v3193 = vmul.f32 %v3161, %v3161
        %v3194 = vmul.f32 %v3162, %v3162
        %v3195 = vmul.f32 %v3163, %v3163
        %v3196 = vmul.f32 %v3164, %v3164
        %v3197 = vmul.f32 %v3165, %v3165
        %v3198 = vmul.f32 %v3166, %v3166
        %v3199 = vmul.f32 %v3167, %v3167
        %v3200 = vmul.f32 %v3168, %v3168
        %v3201 = vmul.f32 %v3169, %v3169
        %v3202 = vmul.f32 %v3170, %v3170
        %v3203 = vmul.f32 %v3171, %v3171
        %v3204 = vsel %vm481, %v3172, 0.0
        %v3205 = vsel %vm481, %v3173, 0.0
        %v3206 = vadd.f32 %v3204, %v3205
        %v3207 = vsel %vm481, %v3174, 0.0
        %v3208 = vadd.f32 %v3206, %v3207
        %v3209 = vsel %vm481, %v3175, 0.0
        %v3210 = vadd.f32 %v3208, %v3209
        %v3211 = vsel %vm481, %v3176, 0.0
        %v3212 = vadd.f32 %v3210, %v3211
        %v3213 = vsel %vm481, %v3177, 0.0
        %v3214 = vadd.f32 %v3212, %v3213
        %v3215 = vsel %vm481, %v3178, 0.0
        %v3216 = vadd.f32 %v3214, %v3215
        %v3217 = vsel %vm481, %v3179, 0.0
        %v3218 = vadd.f32 %v3216, %v3217
        %v3219 = vsel %vm481, %v3180, 0.0
        %v3220 = vadd.f32 %v3218, %v3219
        %v3221 = vsel %vm481, %v3181, 0.0
        %v3222 = vadd.f32 %v3220, %v3221
        %v3223 = vsel %vm481, %v3182, 0.0
        %v3224 = vadd.f32 %v3222, %v3223
        %v3225 = vsel %vm481, %v3183, 0.0
        %v3226 = vadd.f32 %v3224, %v3225
        %v3227 = vsel %vm481, %v3184, 0.0
        %v3228 = vadd.f32 %v3226, %v3227
        %v3229 = vsel %vm481, %v3185, 0.0
        %v3230 = vadd.f32 %v3228, %v3229
        %v3231 = vsel %vm481, %v3186, 0.0
        %v3232 = vadd.f32 %v3230, %v3231
        %v3233 = vsel %vm481, %v3187, 0.0
        %v3234 = vadd.f32 %v3232, %v3233
        %v3235 = vsel %vm481, %v3188, 0.0
        %v3236 = vadd.f32 %v3234, %v3235
        %v3237 = vsel %vm481, %v3189, 0.0
        %v3238 = vadd.f32 %v3236, %v3237
        %v3239 = vsel %vm481, %v3190, 0.0
        %v3240 = vadd.f32 %v3238, %v3239
        %v3241 = vsel %vm481, %v3191, 0.0
        %v3242 = vadd.f32 %v3240, %v3241
        %v3243 = vsel %vm481, %v3192, 0.0
        %v3244 = vadd.f32 %v3242, %v3243
        %v3245 = vsel %vm481, %v3193, 0.0
        %v3246 = vadd.f32 %v3244, %v3245
        %v3247 = vsel %vm481, %v3194, 0.0
        %v3248 = vadd.f32 %v3246, %v3247
        %v3249 = vsel %vm481, %v3195, 0.0
        %v3250 = vadd.f32 %v3248, %v3249
        %v3251 = vsel %vm481, %v3196, 0.0
        %v3252 = vadd.f32 %v3250, %v3251
        %v3253 = vsel %vm481, %v3197, 0.0
        %v3254 = vadd.f32 %v3252, %v3253
        %v3255 = vsel %vm481, %v3198, 0.0
        %v3256 = vadd.f32 %v3254, %v3255
        %v3257 = vsel %vm481, %v3199, 0.0
        %v3258 = vadd.f32 %v3256, %v3257
        %v3259 = vsel %vm481, %v3200, 0.0
        %v3260 = vadd.f32 %v3258, %v3259
        %v3261 = vsel %vm481, %v3201, 0.0
        %v3262 = vadd.f32 %v3260, %v3261
        %v3263 = vsel %vm481, %v3202, 0.0
        %v3264 = vadd.f32 %v3262, %v3263
        %v3265 = vsel %vm481, %v3203, 0.0
        %v3266 = vadd.f32 %v3264, %v3265
        %v3267 = vrot.slane %v3266, 4
        %v3268 = vadd.f32 %v3266, %v3267
        %v3269 = vrot.slane %v3268, 2
        %v3270 = vadd.f32 %v3268, %v3269
        %v3271 = vrot.slane %v3270, 1
        %v3272 = vadd.f32 %v3270, %v3271
        %v3273 = vsel %vm247, %v3139, %v3272
        %vm3274 = vcmask 25600
        %3275 = vst.msk [vmem:[%s171] sm:$0x3] %vm3274, %v3273
        %3276 = vst.msk [vmem:[%s181] sm:$0xff] %vm481, %v3038
        %3277 = vst.msk [vmem:[%s181 + $0x8] sm:$0xff] %vm481, %v3039
        %3278 = vst.msk [vmem:[%s181 + $0x10] sm:$0xff] %vm481, %v3040
        %3279 = vst.msk [vmem:[%s181 + $0x18] sm:$0xff] %vm481, %v3041
        %3280 = vst.msk [vmem:[%s181 + $0x20] sm:$0xff] %vm481, %v3042
        %3281 = vst.msk [vmem:[%s181 + $0x28] sm:$0xff] %vm481, %v3043
        %3282 = vst.msk [vmem:[%s181 + $0x30] sm:$0xff] %vm481, %v3044
        %3283 = vst.msk [vmem:[%s181 + $0x38] sm:$0xff] %vm481, %v3045
        %3284 = vst.msk [vmem:[%s181 + $0x40] sm:$0xff] %vm481, %v3046
        %3285 = vst.msk [vmem:[%s181 + $0x48] sm:$0xff] %vm481, %v3047
        %3286 = vst.msk [vmem:[%s181 + $0x50] sm:$0xff] %vm481, %v3048
        %3287 = vst.msk [vmem:[%s181 + $0x58] sm:$0xff] %vm481, %v3049
        %3288 = vst.msk [vmem:[%s181 + $0x60] sm:$0xff] %vm481, %v3050
        %3289 = vst.msk [vmem:[%s181 + $0x68] sm:$0xff] %vm481, %v3051
        %3290 = vst.msk [vmem:[%s181 + $0x70] sm:$0xff] %vm481, %v3052
        %3291 = vst.msk [vmem:[%s181 + $0x78] sm:$0xff] %vm481, %v3053
        %3292 = vst.msk [vmem:[%s181 + $0x80] sm:$0xff] %vm481, %v3054
        %3293 = vst.msk [vmem:[%s181 + $0x88] sm:$0xff] %vm481, %v3055
        %3294 = vst.msk [vmem:[%s181 + $0x90] sm:$0xff] %vm481, %v3056
        %3295 = vst.msk [vmem:[%s181 + $0x98] sm:$0xff] %vm481, %v3057
        %3296 = vst.msk [vmem:[%s181 + $0xa0] sm:$0xff] %vm481, %v3058
        %3297 = vst.msk [vmem:[%s181 + $0xa8] sm:$0xff] %vm481, %v3059
        %3298 = vst.msk [vmem:[%s181 + $0xb0] sm:$0xff] %vm481, %v3060
        %3299 = vst.msk [vmem:[%s181 + $0xb8] sm:$0xff] %vm481, %v3061
        %3300 = vst.msk [vmem:[%s181 + $0xc0] sm:$0xff] %vm481, %v3062
        %3301 = vst.msk [vmem:[%s181 + $0xc8] sm:$0xff] %vm481, %v3063
        %3302 = vst.msk [vmem:[%s181 + $0xd0] sm:$0xff] %vm481, %v3064
        %3303 = vst.msk [vmem:[%s181 + $0xd8] sm:$0xff] %vm481, %v3065
        %3304 = vst.msk [vmem:[%s181 + $0xe0] sm:$0xff] %vm481, %v3066
        %3305 = vst.msk [vmem:[%s181 + $0xe8] sm:$0xff] %vm481, %v3067
        %3306 = vst.msk [vmem:[%s181 + $0xf0] sm:$0xff] %vm481, %v3068
        %3307 = vst.msk [vmem:[%s181 + $0xf8] sm:$0xff] %vm481, %v3069
        %p3308 = scmp.lt.s32.totalorder %s18, 1
        %s3309 = scalar_select %p3308, %s18, 1
        %s3310 = smul.addr %s3309, 32
        %s3311 = smul.addr %s3310, 8
        %s3312 = scalar_lea.vmem %s2, %s3311
        %s3313 = sand.u32 %s99, 1
        %s3314 = scalar_lea.sflag [#allocation3], %s3313
        %s3315 = sand.u32 %s99, 1
        %s3316 = smul.addr %s3315, 2
        %s3317 = scalar_lea.vmem [#allocation2], %s3316
        // Predicated region
        $region29: #{tpu_custom_call.1} parent=27 // pred_check
          %p3318 = pneg %p83
        $region30: #{tpu_custom_call.1} parent=27 // pred_check_branch
          %3320 = sbr.rel (%p3318) target = $region32
        $region31: #{tpu_custom_call.1} parent=27 // pred_region
          _
        $region32: #{tpu_custom_call.1} parent=27 // pred_fallthru
          _
        // Predicated region
        $region33: #{tpu_custom_call.1} parent=27 // pred_check
          %p3321 = pneg %p109
        $region34: #{tpu_custom_call.1} parent=27 // pred_check_branch
          %3323 = sbr.rel (%p3321) target = $region36
        $region35: #{tpu_custom_call.1} parent=27 // pred_region
          %s3325 = ssub.s32 32, 32
          %3326 = vsyncadd %s3314, %s3325
          %s3327 = smul.addr %s18, 32
          %s3328 = scalar_lea.hbm %s3, %s3327
          %s3330 = sshll.u32 %s3317, 4
          %s3331 = int_to_ptr.vmem [resolvable:$true] %s3330
          %3333 = dma.vmem_to_hbm [thread:$0]  %s3331, 32, %s3328, %s3314
        $region36: #{tpu_custom_call.1} parent=27 // pred_fallthru
          _
      $region28: #{tpu_custom_call.1} parent=5 // pred_fallthru
        _
      %p3334 = scmp.le.s32.totalorder 2, %s13
      // Predicated region
      $region37: #{tpu_custom_call.1} parent=5 // pred_check
        %p3335 = pneg %p3334
      $region38: #{tpu_custom_call.1} parent=5 // pred_check_branch
        %3337 = sbr.rel (%p3335) target = $region40
      $region39: #{tpu_custom_call.1} parent=5 // pred_region
        %s3338 = ssub.s32 %s13, 2
        // Predicated region
        $region41: #{tpu_custom_call.1} parent=39 // pred_check
          %p3339 = pneg %p89
        $region42: #{tpu_custom_call.1} parent=39 // pred_check_branch
          %3341 = sbr.rel (%p3339) target = $region44
        $region43: #{tpu_custom_call.1} parent=39 // pred_region
          %p3342 = scmp.lt.s32.totalorder %s19, 1
          %s3343 = scalar_select %p3342, %s19, 1
          %s3344 = smul.addr %s3343, 32
          %s3345 = smul.addr %s3344, 8
          %s3346 = scalar_lea.vmem %s2, %s3345
        $region44: #{tpu_custom_call.1} parent=39 // pred_fallthru
          _
        // Predicated region
        $region45: #{tpu_custom_call.1} parent=39 // pred_check
          %p3347 = pneg %p115
        $region46: #{tpu_custom_call.1} parent=39 // pred_check_branch
          %3349 = sbr.rel (%p3347) target = $region48
        $region47: #{tpu_custom_call.1} parent=39 // pred_region
          %s3350 = sand.u32 %s100, 1
          %s3351 = scalar_lea.sflag [#allocation3], %s3350
          %s3352 = sand.u32 %s100, 1
          %s3353 = smul.addr %s3352, 2
          %s3354 = scalar_lea.vmem [#allocation2], %s3353
          %3355 = dma.done %s3351, 32
        $region48: #{tpu_custom_call.1} parent=39 // pred_fallthru
          _
      $region40: #{tpu_custom_call.1} parent=5 // pred_fallthru
        _
    $region6: #{tpu_custom_call.1} parent=1 // loop_footer
      %s17 = sadd.s32 1, %s13
    $region7: #{tpu_custom_call.1} parent=1 // loop_footer_branch
      %12 = sbr.rel target = $region3
    $region8: #{tpu_custom_call.1} parent=1 // loop_exit
      _
    %3356 = vsyncpa [#allocation3], 1
    %s3357 = scalar_lea.sflag [#allocation3], 1
    %3358 = vsyncpa %s3357, 1

</llo_original>
